<compile_context>
chip_gen: v7x
topology: tpu7x:2x2x1
jax: 0.10.0
libtpu: 0.0.40
codegen_flags: <defaults>
</compile_context>

<pallas_src>
import functools

import jax
import jax.numpy as jnp
from jax.experimental import pallas as pl
from jax.experimental.pallas import tpu as pltpu


# -----------------------------------------------------------------------------
# Fused RSU_4F kernel (one grid step == one image, everything VMEM resident)
# -----------------------------------------------------------------------------
def _rsu4f_kernel(x_ref, *refs, h, w, dilations):
    """refs = 8 x (w_ref, bias_ref) followed by the output ref."""
    o_ref = refs[-1]
    prm = refs[:-1]
    hw = h * w

    x_in = x_ref[0]                                       # (Cin_p, H*W) f32

    # Per-position (row, col) indices used to build the zero-padding masks.
    pidx = jax.lax.broadcasted_iota(jnp.int32, (1, hw), 1)
    if (w & (w - 1)) == 0:                                # power-of-two fast path
        row = pidx >> (w.bit_length() - 1)
        col = pidx & (w - 1)
    else:                                                 # generic fallback
        row = pidx // w
        col = pidx - (pidx // w) * w

    def tap_masks(dil):
        masks = []
        for kh in range(3):
            for kw in range(3):
                dh, dw = (kh - 1) * dil, (kw - 1) * dil
                ok = ((row + dh >= 0) & (row + dh < h) &
                      (col + dw >= 0) & (col + dw < w))
                masks.append(ok.astype(jnp.float32))      # (1, H*W)
        return masks

    # Hoisted once per unique dilation (1, 2, 4, 8) and reused by every block.
    masks = {d: tap_masks(d) for d in sorted(set(dilations))}

    def conv_bn_relu(x, idx):
        """Dilated 3x3 conv + folded BN (scale pre-folded into W) + ReLU."""
        dil = dilations[idx]
        w_ref, b_ref = prm[2 * idx], prm[2 * idx + 1]
        taps = []
        t = 0
        for kh in range(3):
            for kw in range(3):
                dh, dw = (kh - 1) * dil, (kw - 1) * dil
                if dh == 0 and dw == 0:
                    taps.append(x)                        # centre tap: no shift, no mask
                else:
                    shift = (-(dh * w + dw)) % hw         # static lane rotation
                    xs = pltpu.roll(x, shift=shift, axis=1)
                    taps.append(xs * masks[dil][t])       # zero-pad via mask
                t += 1
        patches = jnp.concatenate(taps, axis=0)           # (9*Cin_p, H*W)
        y = jnp.dot(w_ref[...], patches,
                    preferred_element_type=jnp.float32)   # (Cout_p, H*W)
        y = y + b_ref[...]                                # folded BatchNorm bias (eval)
        return jnp.maximum(y, 0.0)                        # ReLU; Dropout == identity

    # ---- RSU_4F topology -----------------------------------------------------
    x1 = conv_bn_relu(x_in, 0)                            # c1  rate 1
    x2 = conv_bn_relu(x1, 1)                              # c2  rate 1
    x3 = conv_bn_relu(x2, 2)                              # c3  rate 2
    x4 = conv_bn_relu(x3, 3)                              # c4  rate 4
    x5 = conv_bn_relu(x4, 4)                              # c5  rate 8 (bridge)
    y = conv_bn_relu(jnp.concatenate([x5, x4], axis=0), 5)   # c6  rate 4
    y = conv_bn_relu(jnp.concatenate([y, x3], axis=0), 6)    # c7  rate 2
    y = conv_bn_relu(jnp.concatenate([y, x2], axis=0), 7)    # c8  rate 1
    o_ref[0] = (y + x1).astype(o_ref.dtype)               # residual add


# -----------------------------------------------------------------------------
# Wrapper
# -----------------------------------------------------------------------------
def rsu_4f_forward(x_nchw, blocks, *, dilations, out_c):
    """x_nchw: (N, C, H, W) float32, like the PyTorch module. Returns NCHW."""
    n, c_in, h, w = x_nchw.shape
    hw = h * w
    cin_p = blocks[0]["w"].shape[1] // 9
    cout_p = blocks[-1]["w"].shape[0]

    # Flatten spatial onto lanes (NCHW -> (N, C, H*W)) and zero-pad channels to
    # the sublane-aligned count expected by the kernel.  Tiny one-time XLA ops.
    xf = x_nchw.reshape(n, c_in, hw)
    if cin_p > c_in:
        xf = jnp.pad(xf, ((0, 0), (0, cin_p - c_in), (0, 0)))

    args = [xf]
    in_specs = [pl.BlockSpec((1, cin_p, hw), lambda i: (i, 0, 0))]
    flops = 0
    bytes_accessed = xf.size * 4 + n * cout_p * hw * 4
    for blk in blocks:
        for name in ("w", "bias"):
            a = blk[name]
            args.append(a)
            in_specs.append(pl.BlockSpec(a.shape, lambda i: (0, 0)))
            bytes_accessed += a.size * 4
        co, k9 = blk["w"].shape
        flops += 2 * n * hw * co * k9

    kern = functools.partial(_rsu4f_kernel, h=h, w=w, dilations=tuple(dilations))
    y = pl.pallas_call(
        kern,
        out_shape=jax.ShapeDtypeStruct((n, cout_p, hw), jnp.float32),
        grid=(n,),
        in_specs=in_specs,
        out_specs=pl.BlockSpec((1, cout_p, hw), lambda i: (i, 0, 0)),
        compiler_params=pltpu.CompilerParams(
            dimension_semantics=("parallel",)),
        cost_estimate=pl.CostEstimate(flops=flops, transcendentals=0,
                                      bytes_accessed=bytes_accessed),
    )(*args)
    # Drop the zero-padded output channels, back to NCHW.
    return y[:, :out_c, :].reshape(n, out_c, h, w)


# -----------------------------------------------------------------------------
# Parameter construction (deterministic, synthetic, eval-mode BN folded)
# -----------------------------------------------------------------------------
def _round_up(c, m=8):
    return (c + m - 1) // m * m


def init_conv_block(key, cin_p, cout, cout_p, eps=1e-5):
    k = jax.random.split(key, 6)
    # Weight laid out (Cout_p, kh, kw, Cin_p) -> (Cout_p, 9*Cin_p), matching the
    # tap-major / channel-minor im2col row order used in the kernel.  A PyTorch
    # (Cout, Cin, 3, 3) weight maps here via transpose(0, 2, 3, 1).
    # Padded-input columns multiply channels that are identically zero, and the
    # BN scale (zero on padded output rows) is folded into W, so padded output
    # channels stay exactly zero through ReLU, concats and the residual add.
    w = 0.15 * jax.random.normal(k[0], (cout_p, 3, 3, cin_p), jnp.float32)
    conv_b = 0.05 * jax.random.normal(k[1], (cout,), jnp.float32)
    gamma = 1.0 + 0.1 * jax.random.normal(k[2], (cout,), jnp.float32)
    beta = 0.05 * jax.random.normal(k[3], (cout,), jnp.float32)
    mean = 0.05 * jax.random.normal(k[4], (cout,), jnp.float32)
    var = 1.0 + 0.1 * jax.random.uniform(k[5], (cout,), jnp.float32)
    scale = gamma / jnp.sqrt(var + eps)
    bias = beta + (conv_b - mean) * scale
    scale_p = jnp.zeros((cout_p, 1), jnp.float32).at[:cout, 0].set(scale)
    bias_p = jnp.zeros((cout_p, 1), jnp.float32).at[:cout, 0].set(bias)
    w_folded = w * scale_p.reshape(cout_p, 1, 1, 1)        # fold BN scale into W
    return {"w": w_folded.reshape(cout_p, 9 * cin_p), "bias": bias_p}


def init_rsu_4f(key, in_c, out_c, int_c):
    p = _round_up
    # (padded_cin, real_cout, padded_cout, dilation rate) for c1..c8
    spec = [
        (p(in_c),      out_c, p(out_c), 1),   # c1  initial conv
        (p(out_c),     int_c, p(int_c), 1),   # c2  encoder
        (p(int_c),     int_c, p(int_c), 2),   # c3
        (p(int_c),     int_c, p(int_c), 4),   # c4
        (p(int_c),     int_c, p(int_c), 8),   # c5  bridge
        (2 * p(int_c), int_c, p(int_c), 4),   # c6  decoder (cat x5, x4)
        (2 * p(int_c), int_c, p(int_c), 2),   # c7  decoder (cat  y, x3)
        (2 * p(int_c), out_c, p(out_c), 1),   # c8  decoder (cat  y, x2)
    ]
    keys = jax.random.split(key, len(spec))
    blocks = [init_conv_block(k, ci, co, cop)
              for k, (ci, co, cop, _) in zip(keys, spec)]
    dils = tuple(s[-1] for s in spec)
    return blocks, dils


# -----------------------------------------------------------------------------
# Main
# -----------------------------------------------------------------------------
if __name__ == "__main__":
    in_c, out_c, int_c = 4, 4, 8
    N, H, W = 2, 16, 16

    root = jax.random.PRNGKey(0)
    k_param, k_x = jax.random.split(root)
    params, dils = init_rsu_4f(k_param, in_c, out_c, int_c)

    # NCHW input, same as the PyTorch module: (2, 4, 16, 16).
    x = jax.random.normal(k_x, (N, in_c, H, W), jnp.float32)

    fwd = jax.jit(functools.partial(rsu_4f_forward, dilations=dils, out_c=out_c))
    out = fwd(x, params)
    out = jax.block_until_ready(out)

    assert out.shape == (N, out_c, H, W), out.shape
    assert bool(jnp.all(jnp.isfinite(out)))
    print("KERNEL_OK")
</pallas_src>

<mosaic_0001>
module attributes {stable_mosaic.version = 11 : i64} {
  func.func @_rsu4f_kernel(%arg0: i32, %arg1: memref<1x8x256xf32, #tpu.memory_space<vmem>>, %arg2: memref<8x72xf32, #tpu.memory_space<vmem>>, %arg3: memref<8x1xf32, #tpu.memory_space<vmem>>, %arg4: memref<8x72xf32, #tpu.memory_space<vmem>>, %arg5: memref<8x1xf32, #tpu.memory_space<vmem>>, %arg6: memref<8x72xf32, #tpu.memory_space<vmem>>, %arg7: memref<8x1xf32, #tpu.memory_space<vmem>>, %arg8: memref<8x72xf32, #tpu.memory_space<vmem>>, %arg9: memref<8x1xf32, #tpu.memory_space<vmem>>, %arg10: memref<8x72xf32, #tpu.memory_space<vmem>>, %arg11: memref<8x1xf32, #tpu.memory_space<vmem>>, %arg12: memref<8x144xf32, #tpu.memory_space<vmem>>, %arg13: memref<8x1xf32, #tpu.memory_space<vmem>>, %arg14: memref<8x144xf32, #tpu.memory_space<vmem>>, %arg15: memref<8x1xf32, #tpu.memory_space<vmem>>, %arg16: memref<8x144xf32, #tpu.memory_space<vmem>>, %arg17: memref<8x1xf32, #tpu.memory_space<vmem>>, %arg18: memref<1x8x256xf32, #tpu.memory_space<vmem>>) attributes {dimension_semantics = [#tpu.dimension_semantics<parallel>], iteration_bounds = array<i64: 2>, scalar_prefetch = 0 : i64, scratch_operands = 0 : i64, tpu.core_type = #tpu.core_type<tc>, window_params = [{transform_indices = @transform_0, window_bounds = array<i64: 1, 8, 256>}, {pipeline_mode = #tpu.pipeline_mode<synchronous>, transform_indices = @transform_1, window_bounds = array<i64: 8, 72>}, {pipeline_mode = #tpu.pipeline_mode<synchronous>, transform_indices = @transform_2, window_bounds = array<i64: 8, 1>}, {pipeline_mode = #tpu.pipeline_mode<synchronous>, transform_indices = @transform_3, window_bounds = array<i64: 8, 72>}, {pipeline_mode = #tpu.pipeline_mode<synchronous>, transform_indices = @transform_4, window_bounds = array<i64: 8, 1>}, {pipeline_mode = #tpu.pipeline_mode<synchronous>, transform_indices = @transform_5, window_bounds = array<i64: 8, 72>}, {pipeline_mode = #tpu.pipeline_mode<synchronous>, transform_indices = @transform_6, window_bounds = array<i64: 8, 1>}, {pipeline_mode = #tpu.pipeline_mode<synchronous>, transform_indices = @transform_7, window_bounds = array<i64: 8, 72>}, {pipeline_mode = #tpu.pipeline_mode<synchronous>, transform_indices = @transform_8, window_bounds = array<i64: 8, 1>}, {pipeline_mode = #tpu.pipeline_mode<synchronous>, transform_indices = @transform_9, window_bounds = array<i64: 8, 72>}, {pipeline_mode = #tpu.pipeline_mode<synchronous>, transform_indices = @transform_10, window_bounds = array<i64: 8, 1>}, {pipeline_mode = #tpu.pipeline_mode<synchronous>, transform_indices = @transform_11, window_bounds = array<i64: 8, 144>}, {pipeline_mode = #tpu.pipeline_mode<synchronous>, transform_indices = @transform_12, window_bounds = array<i64: 8, 1>}, {pipeline_mode = #tpu.pipeline_mode<synchronous>, transform_indices = @transform_13, window_bounds = array<i64: 8, 144>}, {pipeline_mode = #tpu.pipeline_mode<synchronous>, transform_indices = @transform_14, window_bounds = array<i64: 8, 1>}, {pipeline_mode = #tpu.pipeline_mode<synchronous>, transform_indices = @transform_15, window_bounds = array<i64: 8, 144>}, {pipeline_mode = #tpu.pipeline_mode<synchronous>, transform_indices = @transform_16, window_bounds = array<i64: 8, 1>}, {transform_indices = @transform_17, window_bounds = array<i64: 1, 8, 256>}]} {
    %c0 = arith.constant 0 : index
    %c0_0 = arith.constant 0 : index
    %c0_1 = arith.constant 0 : index
    %0 = vector.load %arg1[%c0, %c0_0, %c0_1] : memref<1x8x256xf32, #tpu.memory_space<vmem>>, vector<1x8x256xf32>
    %1 = vector.shape_cast %0 : vector<1x8x256xf32> to vector<8x256xf32>
    %2 = tpu.iota {dimensions = array<i32: 1>} : vector<1x256xi32>
    %c4_i32 = arith.constant 4 : i32
    %3 = vector.broadcast %c4_i32 : i32 to vector<1x256xi32>
    %4 = arith.shrsi %2, %3 : vector<1x256xi32>
    %c15_i32 = arith.constant 15 : i32
    %5 = vector.broadcast %c15_i32 : i32 to vector<1x256xi32>
    %6 = arith.andi %2, %5 : vector<1x256xi32>
    %c-1_i32 = arith.constant -1 : i32
    %7 = vector.broadcast %c-1_i32 : i32 to vector<1x256xi32>
    %8 = arith.addi %4, %7 : vector<1x256xi32>
    %c0_i32 = arith.constant 0 : i32
    %9 = vector.broadcast %c0_i32 : i32 to vector<1x256xi32>
    %10 = arith.cmpi sge, %8, %9 : vector<1x256xi32>
    %c-1_i32_2 = arith.constant -1 : i32
    %11 = vector.broadcast %c-1_i32_2 : i32 to vector<1x256xi32>
    %12 = arith.addi %4, %11 : vector<1x256xi32>
    %c16_i32 = arith.constant 16 : i32
    %13 = vector.broadcast %c16_i32 : i32 to vector<1x256xi32>
    %14 = arith.cmpi slt, %12, %13 : vector<1x256xi32>
    %15 = arith.andi %10, %14 : vector<1x256xi1>
    %c-1_i32_3 = arith.constant -1 : i32
    %16 = vector.broadcast %c-1_i32_3 : i32 to vector<1x256xi32>
    %17 = arith.addi %6, %16 : vector<1x256xi32>
    %c0_i32_4 = arith.constant 0 : i32
    %18 = vector.broadcast %c0_i32_4 : i32 to vector<1x256xi32>
    %19 = arith.cmpi sge, %17, %18 : vector<1x256xi32>
    %20 = arith.andi %15, %19 : vector<1x256xi1>
    %c-1_i32_5 = arith.constant -1 : i32
    %21 = vector.broadcast %c-1_i32_5 : i32 to vector<1x256xi32>
    %22 = arith.addi %6, %21 : vector<1x256xi32>
    %c16_i32_6 = arith.constant 16 : i32
    %23 = vector.broadcast %c16_i32_6 : i32 to vector<1x256xi32>
    %24 = arith.cmpi slt, %22, %23 : vector<1x256xi32>
    %25 = arith.andi %20, %24 : vector<1x256xi1>
    %26 = arith.extui %25 : vector<1x256xi1> to vector<1x256xi32>
    %27 = arith.sitofp %26 : vector<1x256xi32> to vector<1x256xf32>
    %c-1_i32_7 = arith.constant -1 : i32
    %28 = vector.broadcast %c-1_i32_7 : i32 to vector<1x256xi32>
    %29 = arith.addi %4, %28 : vector<1x256xi32>
    %c0_i32_8 = arith.constant 0 : i32
    %30 = vector.broadcast %c0_i32_8 : i32 to vector<1x256xi32>
    %31 = arith.cmpi sge, %29, %30 : vector<1x256xi32>
    %c-1_i32_9 = arith.constant -1 : i32
    %32 = vector.broadcast %c-1_i32_9 : i32 to vector<1x256xi32>
    %33 = arith.addi %4, %32 : vector<1x256xi32>
    %c16_i32_10 = arith.constant 16 : i32
    %34 = vector.broadcast %c16_i32_10 : i32 to vector<1x256xi32>
    %35 = arith.cmpi slt, %33, %34 : vector<1x256xi32>
    %36 = arith.andi %31, %35 : vector<1x256xi1>
    %c0_i32_11 = arith.constant 0 : i32
    %37 = vector.broadcast %c0_i32_11 : i32 to vector<1x256xi32>
    %38 = arith.addi %6, %37 : vector<1x256xi32>
    %c0_i32_12 = arith.constant 0 : i32
    %39 = vector.broadcast %c0_i32_12 : i32 to vector<1x256xi32>
    %40 = arith.cmpi sge, %38, %39 : vector<1x256xi32>
    %41 = arith.andi %36, %40 : vector<1x256xi1>
    %c0_i32_13 = arith.constant 0 : i32
    %42 = vector.broadcast %c0_i32_13 : i32 to vector<1x256xi32>
    %43 = arith.addi %6, %42 : vector<1x256xi32>
    %c16_i32_14 = arith.constant 16 : i32
    %44 = vector.broadcast %c16_i32_14 : i32 to vector<1x256xi32>
    %45 = arith.cmpi slt, %43, %44 : vector<1x256xi32>
    %46 = arith.andi %41, %45 : vector<1x256xi1>
    %47 = arith.extui %46 : vector<1x256xi1> to vector<1x256xi32>
    %48 = arith.sitofp %47 : vector<1x256xi32> to vector<1x256xf32>
    %c-1_i32_15 = arith.constant -1 : i32
    %49 = vector.broadcast %c-1_i32_15 : i32 to vector<1x256xi32>
    %50 = arith.addi %4, %49 : vector<1x256xi32>
    %c0_i32_16 = arith.constant 0 : i32
    %51 = vector.broadcast %c0_i32_16 : i32 to vector<1x256xi32>
    %52 = arith.cmpi sge, %50, %51 : vector<1x256xi32>
    %c-1_i32_17 = arith.constant -1 : i32
    %53 = vector.broadcast %c-1_i32_17 : i32 to vector<1x256xi32>
    %54 = arith.addi %4, %53 : vector<1x256xi32>
    %c16_i32_18 = arith.constant 16 : i32
    %55 = vector.broadcast %c16_i32_18 : i32 to vector<1x256xi32>
    %56 = arith.cmpi slt, %54, %55 : vector<1x256xi32>
    %57 = arith.andi %52, %56 : vector<1x256xi1>
    %c1_i32 = arith.constant 1 : i32
    %58 = vector.broadcast %c1_i32 : i32 to vector<1x256xi32>
    %59 = arith.addi %6, %58 : vector<1x256xi32>
    %c0_i32_19 = arith.constant 0 : i32
    %60 = vector.broadcast %c0_i32_19 : i32 to vector<1x256xi32>
    %61 = arith.cmpi sge, %59, %60 : vector<1x256xi32>
    %62 = arith.andi %57, %61 : vector<1x256xi1>
    %c1_i32_20 = arith.constant 1 : i32
    %63 = vector.broadcast %c1_i32_20 : i32 to vector<1x256xi32>
    %64 = arith.addi %6, %63 : vector<1x256xi32>
    %c16_i32_21 = arith.constant 16 : i32
    %65 = vector.broadcast %c16_i32_21 : i32 to vector<1x256xi32>
    %66 = arith.cmpi slt, %64, %65 : vector<1x256xi32>
    %67 = arith.andi %62, %66 : vector<1x256xi1>
    %68 = arith.extui %67 : vector<1x256xi1> to vector<1x256xi32>
    %69 = arith.sitofp %68 : vector<1x256xi32> to vector<1x256xf32>
    %c0_i32_22 = arith.constant 0 : i32
    %70 = vector.broadcast %c0_i32_22 : i32 to vector<1x256xi32>
    %71 = arith.addi %4, %70 : vector<1x256xi32>
    %c0_i32_23 = arith.constant 0 : i32
    %72 = vector.broadcast %c0_i32_23 : i32 to vector<1x256xi32>
    %73 = arith.cmpi sge, %71, %72 : vector<1x256xi32>
    %c0_i32_24 = arith.constant 0 : i32
    %74 = vector.broadcast %c0_i32_24 : i32 to vector<1x256xi32>
    %75 = arith.addi %4, %74 : vector<1x256xi32>
    %c16_i32_25 = arith.constant 16 : i32
    %76 = vector.broadcast %c16_i32_25 : i32 to vector<1x256xi32>
    %77 = arith.cmpi slt, %75, %76 : vector<1x256xi32>
    %78 = arith.andi %73, %77 : vector<1x256xi1>
    %c-1_i32_26 = arith.constant -1 : i32
    %79 = vector.broadcast %c-1_i32_26 : i32 to vector<1x256xi32>
    %80 = arith.addi %6, %79 : vector<1x256xi32>
    %c0_i32_27 = arith.constant 0 : i32
    %81 = vector.broadcast %c0_i32_27 : i32 to vector<1x256xi32>
    %82 = arith.cmpi sge, %80, %81 : vector<1x256xi32>
    %83 = arith.andi %78, %82 : vector<1x256xi1>
    %c-1_i32_28 = arith.constant -1 : i32
    %84 = vector.broadcast %c-1_i32_28 : i32 to vector<1x256xi32>
    %85 = arith.addi %6, %84 : vector<1x256xi32>
    %c16_i32_29 = arith.constant 16 : i32
    %86 = vector.broadcast %c16_i32_29 : i32 to vector<1x256xi32>
    %87 = arith.cmpi slt, %85, %86 : vector<1x256xi32>
    %88 = arith.andi %83, %87 : vector<1x256xi1>
    %89 = arith.extui %88 : vector<1x256xi1> to vector<1x256xi32>
    %90 = arith.sitofp %89 : vector<1x256xi32> to vector<1x256xf32>
    %c0_i32_30 = arith.constant 0 : i32
    %91 = vector.broadcast %c0_i32_30 : i32 to vector<1x256xi32>
    %92 = arith.addi %4, %91 : vector<1x256xi32>
    %c0_i32_31 = arith.constant 0 : i32
    %93 = vector.broadcast %c0_i32_31 : i32 to vector<1x256xi32>
    %94 = arith.cmpi sge, %92, %93 : vector<1x256xi32>
    %c0_i32_32 = arith.constant 0 : i32
    %95 = vector.broadcast %c0_i32_32 : i32 to vector<1x256xi32>
    %96 = arith.addi %4, %95 : vector<1x256xi32>
    %c16_i32_33 = arith.constant 16 : i32
    %97 = vector.broadcast %c16_i32_33 : i32 to vector<1x256xi32>
    %98 = arith.cmpi slt, %96, %97 : vector<1x256xi32>
    %99 = arith.andi %94, %98 : vector<1x256xi1>
    %c1_i32_34 = arith.constant 1 : i32
    %100 = vector.broadcast %c1_i32_34 : i32 to vector<1x256xi32>
    %101 = arith.addi %6, %100 : vector<1x256xi32>
    %c0_i32_35 = arith.constant 0 : i32
    %102 = vector.broadcast %c0_i32_35 : i32 to vector<1x256xi32>
    %103 = arith.cmpi sge, %101, %102 : vector<1x256xi32>
    %104 = arith.andi %99, %103 : vector<1x256xi1>
    %c1_i32_36 = arith.constant 1 : i32
    %105 = vector.broadcast %c1_i32_36 : i32 to vector<1x256xi32>
    %106 = arith.addi %6, %105 : vector<1x256xi32>
    %c16_i32_37 = arith.constant 16 : i32
    %107 = vector.broadcast %c16_i32_37 : i32 to vector<1x256xi32>
    %108 = arith.cmpi slt, %106, %107 : vector<1x256xi32>
    %109 = arith.andi %104, %108 : vector<1x256xi1>
    %110 = arith.extui %109 : vector<1x256xi1> to vector<1x256xi32>
    %111 = arith.sitofp %110 : vector<1x256xi32> to vector<1x256xf32>
    %c1_i32_38 = arith.constant 1 : i32
    %112 = vector.broadcast %c1_i32_38 : i32 to vector<1x256xi32>
    %113 = arith.addi %4, %112 : vector<1x256xi32>
    %c0_i32_39 = arith.constant 0 : i32
    %114 = vector.broadcast %c0_i32_39 : i32 to vector<1x256xi32>
    %115 = arith.cmpi sge, %113, %114 : vector<1x256xi32>
    %c1_i32_40 = arith.constant 1 : i32
    %116 = vector.broadcast %c1_i32_40 : i32 to vector<1x256xi32>
    %117 = arith.addi %4, %116 : vector<1x256xi32>
    %c16_i32_41 = arith.constant 16 : i32
    %118 = vector.broadcast %c16_i32_41 : i32 to vector<1x256xi32>
    %119 = arith.cmpi slt, %117, %118 : vector<1x256xi32>
    %120 = arith.andi %115, %119 : vector<1x256xi1>
    %c-1_i32_42 = arith.constant -1 : i32
    %121 = vector.broadcast %c-1_i32_42 : i32 to vector<1x256xi32>
    %122 = arith.addi %6, %121 : vector<1x256xi32>
    %c0_i32_43 = arith.constant 0 : i32
    %123 = vector.broadcast %c0_i32_43 : i32 to vector<1x256xi32>
    %124 = arith.cmpi sge, %122, %123 : vector<1x256xi32>
    %125 = arith.andi %120, %124 : vector<1x256xi1>
    %c-1_i32_44 = arith.constant -1 : i32
    %126 = vector.broadcast %c-1_i32_44 : i32 to vector<1x256xi32>
    %127 = arith.addi %6, %126 : vector<1x256xi32>
    %c16_i32_45 = arith.constant 16 : i32
    %128 = vector.broadcast %c16_i32_45 : i32 to vector<1x256xi32>
    %129 = arith.cmpi slt, %127, %128 : vector<1x256xi32>
    %130 = arith.andi %125, %129 : vector<1x256xi1>
    %131 = arith.extui %130 : vector<1x256xi1> to vector<1x256xi32>
    %132 = arith.sitofp %131 : vector<1x256xi32> to vector<1x256xf32>
    %c1_i32_46 = arith.constant 1 : i32
    %133 = vector.broadcast %c1_i32_46 : i32 to vector<1x256xi32>
    %134 = arith.addi %4, %133 : vector<1x256xi32>
    %c0_i32_47 = arith.constant 0 : i32
    %135 = vector.broadcast %c0_i32_47 : i32 to vector<1x256xi32>
    %136 = arith.cmpi sge, %134, %135 : vector<1x256xi32>
    %c1_i32_48 = arith.constant 1 : i32
    %137 = vector.broadcast %c1_i32_48 : i32 to vector<1x256xi32>
    %138 = arith.addi %4, %137 : vector<1x256xi32>
    %c16_i32_49 = arith.constant 16 : i32
    %139 = vector.broadcast %c16_i32_49 : i32 to vector<1x256xi32>
    %140 = arith.cmpi slt, %138, %139 : vector<1x256xi32>
    %141 = arith.andi %136, %140 : vector<1x256xi1>
    %c0_i32_50 = arith.constant 0 : i32
    %142 = vector.broadcast %c0_i32_50 : i32 to vector<1x256xi32>
    %143 = arith.addi %6, %142 : vector<1x256xi32>
    %c0_i32_51 = arith.constant 0 : i32
    %144 = vector.broadcast %c0_i32_51 : i32 to vector<1x256xi32>
    %145 = arith.cmpi sge, %143, %144 : vector<1x256xi32>
    %146 = arith.andi %141, %145 : vector<1x256xi1>
    %c0_i32_52 = arith.constant 0 : i32
    %147 = vector.broadcast %c0_i32_52 : i32 to vector<1x256xi32>
    %148 = arith.addi %6, %147 : vector<1x256xi32>
    %c16_i32_53 = arith.constant 16 : i32
    %149 = vector.broadcast %c16_i32_53 : i32 to vector<1x256xi32>
    %150 = arith.cmpi slt, %148, %149 : vector<1x256xi32>
    %151 = arith.andi %146, %150 : vector<1x256xi1>
    %152 = arith.extui %151 : vector<1x256xi1> to vector<1x256xi32>
    %153 = arith.sitofp %152 : vector<1x256xi32> to vector<1x256xf32>
    %c1_i32_54 = arith.constant 1 : i32
    %154 = vector.broadcast %c1_i32_54 : i32 to vector<1x256xi32>
    %155 = arith.addi %4, %154 : vector<1x256xi32>
    %c0_i32_55 = arith.constant 0 : i32
    %156 = vector.broadcast %c0_i32_55 : i32 to vector<1x256xi32>
    %157 = arith.cmpi sge, %155, %156 : vector<1x256xi32>
    %c1_i32_56 = arith.constant 1 : i32
    %158 = vector.broadcast %c1_i32_56 : i32 to vector<1x256xi32>
    %159 = arith.addi %4, %158 : vector<1x256xi32>
    %c16_i32_57 = arith.constant 16 : i32
    %160 = vector.broadcast %c16_i32_57 : i32 to vector<1x256xi32>
    %161 = arith.cmpi slt, %159, %160 : vector<1x256xi32>
    %162 = arith.andi %157, %161 : vector<1x256xi1>
    %c1_i32_58 = arith.constant 1 : i32
    %163 = vector.broadcast %c1_i32_58 : i32 to vector<1x256xi32>
    %164 = arith.addi %6, %163 : vector<1x256xi32>
    %c0_i32_59 = arith.constant 0 : i32
    %165 = vector.broadcast %c0_i32_59 : i32 to vector<1x256xi32>
    %166 = arith.cmpi sge, %164, %165 : vector<1x256xi32>
    %167 = arith.andi %162, %166 : vector<1x256xi1>
    %c1_i32_60 = arith.constant 1 : i32
    %168 = vector.broadcast %c1_i32_60 : i32 to vector<1x256xi32>
    %169 = arith.addi %6, %168 : vector<1x256xi32>
    %c16_i32_61 = arith.constant 16 : i32
    %170 = vector.broadcast %c16_i32_61 : i32 to vector<1x256xi32>
    %171 = arith.cmpi slt, %169, %170 : vector<1x256xi32>
    %172 = arith.andi %167, %171 : vector<1x256xi1>
    %173 = arith.extui %172 : vector<1x256xi1> to vector<1x256xi32>
    %174 = arith.sitofp %173 : vector<1x256xi32> to vector<1x256xf32>
    %c-2_i32 = arith.constant -2 : i32
    %175 = vector.broadcast %c-2_i32 : i32 to vector<1x256xi32>
    %176 = arith.addi %4, %175 : vector<1x256xi32>
    %c0_i32_62 = arith.constant 0 : i32
    %177 = vector.broadcast %c0_i32_62 : i32 to vector<1x256xi32>
    %178 = arith.cmpi sge, %176, %177 : vector<1x256xi32>
    %c-2_i32_63 = arith.constant -2 : i32
    %179 = vector.broadcast %c-2_i32_63 : i32 to vector<1x256xi32>
    %180 = arith.addi %4, %179 : vector<1x256xi32>
    %c16_i32_64 = arith.constant 16 : i32
    %181 = vector.broadcast %c16_i32_64 : i32 to vector<1x256xi32>
    %182 = arith.cmpi slt, %180, %181 : vector<1x256xi32>
    %183 = arith.andi %178, %182 : vector<1x256xi1>
    %c-2_i32_65 = arith.constant -2 : i32
    %184 = vector.broadcast %c-2_i32_65 : i32 to vector<1x256xi32>
    %185 = arith.addi %6, %184 : vector<1x256xi32>
    %c0_i32_66 = arith.constant 0 : i32
    %186 = vector.broadcast %c0_i32_66 : i32 to vector<1x256xi32>
    %187 = arith.cmpi sge, %185, %186 : vector<1x256xi32>
    %188 = arith.andi %183, %187 : vector<1x256xi1>
    %c-2_i32_67 = arith.constant -2 : i32
    %189 = vector.broadcast %c-2_i32_67 : i32 to vector<1x256xi32>
    %190 = arith.addi %6, %189 : vector<1x256xi32>
    %c16_i32_68 = arith.constant 16 : i32
    %191 = vector.broadcast %c16_i32_68 : i32 to vector<1x256xi32>
    %192 = arith.cmpi slt, %190, %191 : vector<1x256xi32>
    %193 = arith.andi %188, %192 : vector<1x256xi1>
    %194 = arith.extui %193 : vector<1x256xi1> to vector<1x256xi32>
    %195 = arith.sitofp %194 : vector<1x256xi32> to vector<1x256xf32>
    %c-2_i32_69 = arith.constant -2 : i32
    %196 = vector.broadcast %c-2_i32_69 : i32 to vector<1x256xi32>
    %197 = arith.addi %4, %196 : vector<1x256xi32>
    %c0_i32_70 = arith.constant 0 : i32
    %198 = vector.broadcast %c0_i32_70 : i32 to vector<1x256xi32>
    %199 = arith.cmpi sge, %197, %198 : vector<1x256xi32>
    %c-2_i32_71 = arith.constant -2 : i32
    %200 = vector.broadcast %c-2_i32_71 : i32 to vector<1x256xi32>
    %201 = arith.addi %4, %200 : vector<1x256xi32>
    %c16_i32_72 = arith.constant 16 : i32
    %202 = vector.broadcast %c16_i32_72 : i32 to vector<1x256xi32>
    %203 = arith.cmpi slt, %201, %202 : vector<1x256xi32>
    %204 = arith.andi %199, %203 : vector<1x256xi1>
    %c0_i32_73 = arith.constant 0 : i32
    %205 = vector.broadcast %c0_i32_73 : i32 to vector<1x256xi32>
    %206 = arith.addi %6, %205 : vector<1x256xi32>
    %c0_i32_74 = arith.constant 0 : i32
    %207 = vector.broadcast %c0_i32_74 : i32 to vector<1x256xi32>
    %208 = arith.cmpi sge, %206, %207 : vector<1x256xi32>
    %209 = arith.andi %204, %208 : vector<1x256xi1>
    %c0_i32_75 = arith.constant 0 : i32
    %210 = vector.broadcast %c0_i32_75 : i32 to vector<1x256xi32>
    %211 = arith.addi %6, %210 : vector<1x256xi32>
    %c16_i32_76 = arith.constant 16 : i32
    %212 = vector.broadcast %c16_i32_76 : i32 to vector<1x256xi32>
    %213 = arith.cmpi slt, %211, %212 : vector<1x256xi32>
    %214 = arith.andi %209, %213 : vector<1x256xi1>
    %215 = arith.extui %214 : vector<1x256xi1> to vector<1x256xi32>
    %216 = arith.sitofp %215 : vector<1x256xi32> to vector<1x256xf32>
    %c-2_i32_77 = arith.constant -2 : i32
    %217 = vector.broadcast %c-2_i32_77 : i32 to vector<1x256xi32>
    %218 = arith.addi %4, %217 : vector<1x256xi32>
    %c0_i32_78 = arith.constant 0 : i32
    %219 = vector.broadcast %c0_i32_78 : i32 to vector<1x256xi32>
    %220 = arith.cmpi sge, %218, %219 : vector<1x256xi32>
    %c-2_i32_79 = arith.constant -2 : i32
    %221 = vector.broadcast %c-2_i32_79 : i32 to vector<1x256xi32>
    %222 = arith.addi %4, %221 : vector<1x256xi32>
    %c16_i32_80 = arith.constant 16 : i32
    %223 = vector.broadcast %c16_i32_80 : i32 to vector<1x256xi32>
    %224 = arith.cmpi slt, %222, %223 : vector<1x256xi32>
    %225 = arith.andi %220, %224 : vector<1x256xi1>
    %c2_i32 = arith.constant 2 : i32
    %226 = vector.broadcast %c2_i32 : i32 to vector<1x256xi32>
    %227 = arith.addi %6, %226 : vector<1x256xi32>
    %c0_i32_81 = arith.constant 0 : i32
    %228 = vector.broadcast %c0_i32_81 : i32 to vector<1x256xi32>
    %229 = arith.cmpi sge, %227, %228 : vector<1x256xi32>
    %230 = arith.andi %225, %229 : vector<1x256xi1>
    %c2_i32_82 = arith.constant 2 : i32
    %231 = vector.broadcast %c2_i32_82 : i32 to vector<1x256xi32>
    %232 = arith.addi %6, %231 : vector<1x256xi32>
    %c16_i32_83 = arith.constant 16 : i32
    %233 = vector.broadcast %c16_i32_83 : i32 to vector<1x256xi32>
    %234 = arith.cmpi slt, %232, %233 : vector<1x256xi32>
    %235 = arith.andi %230, %234 : vector<1x256xi1>
    %236 = arith.extui %235 : vector<1x256xi1> to vector<1x256xi32>
    %237 = arith.sitofp %236 : vector<1x256xi32> to vector<1x256xf32>
    %c0_i32_84 = arith.constant 0 : i32
    %238 = vector.broadcast %c0_i32_84 : i32 to vector<1x256xi32>
    %239 = arith.addi %4, %238 : vector<1x256xi32>
    %c0_i32_85 = arith.constant 0 : i32
    %240 = vector.broadcast %c0_i32_85 : i32 to vector<1x256xi32>
    %241 = arith.cmpi sge, %239, %240 : vector<1x256xi32>
    %c0_i32_86 = arith.constant 0 : i32
    %242 = vector.broadcast %c0_i32_86 : i32 to vector<1x256xi32>
    %243 = arith.addi %4, %242 : vector<1x256xi32>
    %c16_i32_87 = arith.constant 16 : i32
    %244 = vector.broadcast %c16_i32_87 : i32 to vector<1x256xi32>
    %245 = arith.cmpi slt, %243, %244 : vector<1x256xi32>
    %246 = arith.andi %241, %245 : vector<1x256xi1>
    %c-2_i32_88 = arith.constant -2 : i32
    %247 = vector.broadcast %c-2_i32_88 : i32 to vector<1x256xi32>
    %248 = arith.addi %6, %247 : vector<1x256xi32>
    %c0_i32_89 = arith.constant 0 : i32
    %249 = vector.broadcast %c0_i32_89 : i32 to vector<1x256xi32>
    %250 = arith.cmpi sge, %248, %249 : vector<1x256xi32>
    %251 = arith.andi %246, %250 : vector<1x256xi1>
    %c-2_i32_90 = arith.constant -2 : i32
    %252 = vector.broadcast %c-2_i32_90 : i32 to vector<1x256xi32>
    %253 = arith.addi %6, %252 : vector<1x256xi32>
    %c16_i32_91 = arith.constant 16 : i32
    %254 = vector.broadcast %c16_i32_91 : i32 to vector<1x256xi32>
    %255 = arith.cmpi slt, %253, %254 : vector<1x256xi32>
    %256 = arith.andi %251, %255 : vector<1x256xi1>
    %257 = arith.extui %256 : vector<1x256xi1> to vector<1x256xi32>
    %258 = arith.sitofp %257 : vector<1x256xi32> to vector<1x256xf32>
    %c0_i32_92 = arith.constant 0 : i32
    %259 = vector.broadcast %c0_i32_92 : i32 to vector<1x256xi32>
    %260 = arith.addi %4, %259 : vector<1x256xi32>
    %c0_i32_93 = arith.constant 0 : i32
    %261 = vector.broadcast %c0_i32_93 : i32 to vector<1x256xi32>
    %262 = arith.cmpi sge, %260, %261 : vector<1x256xi32>
    %c0_i32_94 = arith.constant 0 : i32
    %263 = vector.broadcast %c0_i32_94 : i32 to vector<1x256xi32>
    %264 = arith.addi %4, %263 : vector<1x256xi32>
    %c16_i32_95 = arith.constant 16 : i32
    %265 = vector.broadcast %c16_i32_95 : i32 to vector<1x256xi32>
    %266 = arith.cmpi slt, %264, %265 : vector<1x256xi32>
    %267 = arith.andi %262, %266 : vector<1x256xi1>
    %c2_i32_96 = arith.constant 2 : i32
    %268 = vector.broadcast %c2_i32_96 : i32 to vector<1x256xi32>
    %269 = arith.addi %6, %268 : vector<1x256xi32>
    %c0_i32_97 = arith.constant 0 : i32
    %270 = vector.broadcast %c0_i32_97 : i32 to vector<1x256xi32>
    %271 = arith.cmpi sge, %269, %270 : vector<1x256xi32>
    %272 = arith.andi %267, %271 : vector<1x256xi1>
    %c2_i32_98 = arith.constant 2 : i32
    %273 = vector.broadcast %c2_i32_98 : i32 to vector<1x256xi32>
    %274 = arith.addi %6, %273 : vector<1x256xi32>
    %c16_i32_99 = arith.constant 16 : i32
    %275 = vector.broadcast %c16_i32_99 : i32 to vector<1x256xi32>
    %276 = arith.cmpi slt, %274, %275 : vector<1x256xi32>
    %277 = arith.andi %272, %276 : vector<1x256xi1>
    %278 = arith.extui %277 : vector<1x256xi1> to vector<1x256xi32>
    %279 = arith.sitofp %278 : vector<1x256xi32> to vector<1x256xf32>
    %c2_i32_100 = arith.constant 2 : i32
    %280 = vector.broadcast %c2_i32_100 : i32 to vector<1x256xi32>
    %281 = arith.addi %4, %280 : vector<1x256xi32>
    %c0_i32_101 = arith.constant 0 : i32
    %282 = vector.broadcast %c0_i32_101 : i32 to vector<1x256xi32>
    %283 = arith.cmpi sge, %281, %282 : vector<1x256xi32>
    %c2_i32_102 = arith.constant 2 : i32
    %284 = vector.broadcast %c2_i32_102 : i32 to vector<1x256xi32>
    %285 = arith.addi %4, %284 : vector<1x256xi32>
    %c16_i32_103 = arith.constant 16 : i32
    %286 = vector.broadcast %c16_i32_103 : i32 to vector<1x256xi32>
    %287 = arith.cmpi slt, %285, %286 : vector<1x256xi32>
    %288 = arith.andi %283, %287 : vector<1x256xi1>
    %c-2_i32_104 = arith.constant -2 : i32
    %289 = vector.broadcast %c-2_i32_104 : i32 to vector<1x256xi32>
    %290 = arith.addi %6, %289 : vector<1x256xi32>
    %c0_i32_105 = arith.constant 0 : i32
    %291 = vector.broadcast %c0_i32_105 : i32 to vector<1x256xi32>
    %292 = arith.cmpi sge, %290, %291 : vector<1x256xi32>
    %293 = arith.andi %288, %292 : vector<1x256xi1>
    %c-2_i32_106 = arith.constant -2 : i32
    %294 = vector.broadcast %c-2_i32_106 : i32 to vector<1x256xi32>
    %295 = arith.addi %6, %294 : vector<1x256xi32>
    %c16_i32_107 = arith.constant 16 : i32
    %296 = vector.broadcast %c16_i32_107 : i32 to vector<1x256xi32>
    %297 = arith.cmpi slt, %295, %296 : vector<1x256xi32>
    %298 = arith.andi %293, %297 : vector<1x256xi1>
    %299 = arith.extui %298 : vector<1x256xi1> to vector<1x256xi32>
    %300 = arith.sitofp %299 : vector<1x256xi32> to vector<1x256xf32>
    %c2_i32_108 = arith.constant 2 : i32
    %301 = vector.broadcast %c2_i32_108 : i32 to vector<1x256xi32>
    %302 = arith.addi %4, %301 : vector<1x256xi32>
    %c0_i32_109 = arith.constant 0 : i32
    %303 = vector.broadcast %c0_i32_109 : i32 to vector<1x256xi32>
    %304 = arith.cmpi sge, %302, %303 : vector<1x256xi32>
    %c2_i32_110 = arith.constant 2 : i32
    %305 = vector.broadcast %c2_i32_110 : i32 to vector<1x256xi32>
    %306 = arith.addi %4, %305 : vector<1x256xi32>
    %c16_i32_111 = arith.constant 16 : i32
    %307 = vector.broadcast %c16_i32_111 : i32 to vector<1x256xi32>
    %308 = arith.cmpi slt, %306, %307 : vector<1x256xi32>
    %309 = arith.andi %304, %308 : vector<1x256xi1>
    %c0_i32_112 = arith.constant 0 : i32
    %310 = vector.broadcast %c0_i32_112 : i32 to vector<1x256xi32>
    %311 = arith.addi %6, %310 : vector<1x256xi32>
    %c0_i32_113 = arith.constant 0 : i32
    %312 = vector.broadcast %c0_i32_113 : i32 to vector<1x256xi32>
    %313 = arith.cmpi sge, %311, %312 : vector<1x256xi32>
    %314 = arith.andi %309, %313 : vector<1x256xi1>
    %c0_i32_114 = arith.constant 0 : i32
    %315 = vector.broadcast %c0_i32_114 : i32 to vector<1x256xi32>
    %316 = arith.addi %6, %315 : vector<1x256xi32>
    %c16_i32_115 = arith.constant 16 : i32
    %317 = vector.broadcast %c16_i32_115 : i32 to vector<1x256xi32>
    %318 = arith.cmpi slt, %316, %317 : vector<1x256xi32>
    %319 = arith.andi %314, %318 : vector<1x256xi1>
    %320 = arith.extui %319 : vector<1x256xi1> to vector<1x256xi32>
    %321 = arith.sitofp %320 : vector<1x256xi32> to vector<1x256xf32>
    %c2_i32_116 = arith.constant 2 : i32
    %322 = vector.broadcast %c2_i32_116 : i32 to vector<1x256xi32>
    %323 = arith.addi %4, %322 : vector<1x256xi32>
    %c0_i32_117 = arith.constant 0 : i32
    %324 = vector.broadcast %c0_i32_117 : i32 to vector<1x256xi32>
    %325 = arith.cmpi sge, %323, %324 : vector<1x256xi32>
    %c2_i32_118 = arith.constant 2 : i32
    %326 = vector.broadcast %c2_i32_118 : i32 to vector<1x256xi32>
    %327 = arith.addi %4, %326 : vector<1x256xi32>
    %c16_i32_119 = arith.constant 16 : i32
    %328 = vector.broadcast %c16_i32_119 : i32 to vector<1x256xi32>
    %329 = arith.cmpi slt, %327, %328 : vector<1x256xi32>
    %330 = arith.andi %325, %329 : vector<1x256xi1>
    %c2_i32_120 = arith.constant 2 : i32
    %331 = vector.broadcast %c2_i32_120 : i32 to vector<1x256xi32>
    %332 = arith.addi %6, %331 : vector<1x256xi32>
    %c0_i32_121 = arith.constant 0 : i32
    %333 = vector.broadcast %c0_i32_121 : i32 to vector<1x256xi32>
    %334 = arith.cmpi sge, %332, %333 : vector<1x256xi32>
    %335 = arith.andi %330, %334 : vector<1x256xi1>
    %c2_i32_122 = arith.constant 2 : i32
    %336 = vector.broadcast %c2_i32_122 : i32 to vector<1x256xi32>
    %337 = arith.addi %6, %336 : vector<1x256xi32>
    %c16_i32_123 = arith.constant 16 : i32
    %338 = vector.broadcast %c16_i32_123 : i32 to vector<1x256xi32>
    %339 = arith.cmpi slt, %337, %338 : vector<1x256xi32>
    %340 = arith.andi %335, %339 : vector<1x256xi1>
    %341 = arith.extui %340 : vector<1x256xi1> to vector<1x256xi32>
    %342 = arith.sitofp %341 : vector<1x256xi32> to vector<1x256xf32>
    %c-4_i32 = arith.constant -4 : i32
    %343 = vector.broadcast %c-4_i32 : i32 to vector<1x256xi32>
    %344 = arith.addi %4, %343 : vector<1x256xi32>
    %c0_i32_124 = arith.constant 0 : i32
    %345 = vector.broadcast %c0_i32_124 : i32 to vector<1x256xi32>
    %346 = arith.cmpi sge, %344, %345 : vector<1x256xi32>
    %c-4_i32_125 = arith.constant -4 : i32
    %347 = vector.broadcast %c-4_i32_125 : i32 to vector<1x256xi32>
    %348 = arith.addi %4, %347 : vector<1x256xi32>
    %c16_i32_126 = arith.constant 16 : i32
    %349 = vector.broadcast %c16_i32_126 : i32 to vector<1x256xi32>
    %350 = arith.cmpi slt, %348, %349 : vector<1x256xi32>
    %351 = arith.andi %346, %350 : vector<1x256xi1>
    %c-4_i32_127 = arith.constant -4 : i32
    %352 = vector.broadcast %c-4_i32_127 : i32 to vector<1x256xi32>
    %353 = arith.addi %6, %352 : vector<1x256xi32>
    %c0_i32_128 = arith.constant 0 : i32
    %354 = vector.broadcast %c0_i32_128 : i32 to vector<1x256xi32>
    %355 = arith.cmpi sge, %353, %354 : vector<1x256xi32>
    %356 = arith.andi %351, %355 : vector<1x256xi1>
    %c-4_i32_129 = arith.constant -4 : i32
    %357 = vector.broadcast %c-4_i32_129 : i32 to vector<1x256xi32>
    %358 = arith.addi %6, %357 : vector<1x256xi32>
    %c16_i32_130 = arith.constant 16 : i32
    %359 = vector.broadcast %c16_i32_130 : i32 to vector<1x256xi32>
    %360 = arith.cmpi slt, %358, %359 : vector<1x256xi32>
    %361 = arith.andi %356, %360 : vector<1x256xi1>
    %362 = arith.extui %361 : vector<1x256xi1> to vector<1x256xi32>
    %363 = arith.sitofp %362 : vector<1x256xi32> to vector<1x256xf32>
    %c-4_i32_131 = arith.constant -4 : i32
    %364 = vector.broadcast %c-4_i32_131 : i32 to vector<1x256xi32>
    %365 = arith.addi %4, %364 : vector<1x256xi32>
    %c0_i32_132 = arith.constant 0 : i32
    %366 = vector.broadcast %c0_i32_132 : i32 to vector<1x256xi32>
    %367 = arith.cmpi sge, %365, %366 : vector<1x256xi32>
    %c-4_i32_133 = arith.constant -4 : i32
    %368 = vector.broadcast %c-4_i32_133 : i32 to vector<1x256xi32>
    %369 = arith.addi %4, %368 : vector<1x256xi32>
    %c16_i32_134 = arith.constant 16 : i32
    %370 = vector.broadcast %c16_i32_134 : i32 to vector<1x256xi32>
    %371 = arith.cmpi slt, %369, %370 : vector<1x256xi32>
    %372 = arith.andi %367, %371 : vector<1x256xi1>
    %c0_i32_135 = arith.constant 0 : i32
    %373 = vector.broadcast %c0_i32_135 : i32 to vector<1x256xi32>
    %374 = arith.addi %6, %373 : vector<1x256xi32>
    %c0_i32_136 = arith.constant 0 : i32
    %375 = vector.broadcast %c0_i32_136 : i32 to vector<1x256xi32>
    %376 = arith.cmpi sge, %374, %375 : vector<1x256xi32>
    %377 = arith.andi %372, %376 : vector<1x256xi1>
    %c0_i32_137 = arith.constant 0 : i32
    %378 = vector.broadcast %c0_i32_137 : i32 to vector<1x256xi32>
    %379 = arith.addi %6, %378 : vector<1x256xi32>
    %c16_i32_138 = arith.constant 16 : i32
    %380 = vector.broadcast %c16_i32_138 : i32 to vector<1x256xi32>
    %381 = arith.cmpi slt, %379, %380 : vector<1x256xi32>
    %382 = arith.andi %377, %381 : vector<1x256xi1>
    %383 = arith.extui %382 : vector<1x256xi1> to vector<1x256xi32>
    %384 = arith.sitofp %383 : vector<1x256xi32> to vector<1x256xf32>
    %c-4_i32_139 = arith.constant -4 : i32
    %385 = vector.broadcast %c-4_i32_139 : i32 to vector<1x256xi32>
    %386 = arith.addi %4, %385 : vector<1x256xi32>
    %c0_i32_140 = arith.constant 0 : i32
    %387 = vector.broadcast %c0_i32_140 : i32 to vector<1x256xi32>
    %388 = arith.cmpi sge, %386, %387 : vector<1x256xi32>
    %c-4_i32_141 = arith.constant -4 : i32
    %389 = vector.broadcast %c-4_i32_141 : i32 to vector<1x256xi32>
    %390 = arith.addi %4, %389 : vector<1x256xi32>
    %c16_i32_142 = arith.constant 16 : i32
    %391 = vector.broadcast %c16_i32_142 : i32 to vector<1x256xi32>
    %392 = arith.cmpi slt, %390, %391 : vector<1x256xi32>
    %393 = arith.andi %388, %392 : vector<1x256xi1>
    %c4_i32_143 = arith.constant 4 : i32
    %394 = vector.broadcast %c4_i32_143 : i32 to vector<1x256xi32>
    %395 = arith.addi %6, %394 : vector<1x256xi32>
    %c0_i32_144 = arith.constant 0 : i32
    %396 = vector.broadcast %c0_i32_144 : i32 to vector<1x256xi32>
    %397 = arith.cmpi sge, %395, %396 : vector<1x256xi32>
    %398 = arith.andi %393, %397 : vector<1x256xi1>
    %c4_i32_145 = arith.constant 4 : i32
    %399 = vector.broadcast %c4_i32_145 : i32 to vector<1x256xi32>
    %400 = arith.addi %6, %399 : vector<1x256xi32>
    %c16_i32_146 = arith.constant 16 : i32
    %401 = vector.broadcast %c16_i32_146 : i32 to vector<1x256xi32>
    %402 = arith.cmpi slt, %400, %401 : vector<1x256xi32>
    %403 = arith.andi %398, %402 : vector<1x256xi1>
    %404 = arith.extui %403 : vector<1x256xi1> to vector<1x256xi32>
    %405 = arith.sitofp %404 : vector<1x256xi32> to vector<1x256xf32>
    %c0_i32_147 = arith.constant 0 : i32
    %406 = vector.broadcast %c0_i32_147 : i32 to vector<1x256xi32>
    %407 = arith.addi %4, %406 : vector<1x256xi32>
    %c0_i32_148 = arith.constant 0 : i32
    %408 = vector.broadcast %c0_i32_148 : i32 to vector<1x256xi32>
    %409 = arith.cmpi sge, %407, %408 : vector<1x256xi32>
    %c0_i32_149 = arith.constant 0 : i32
    %410 = vector.broadcast %c0_i32_149 : i32 to vector<1x256xi32>
    %411 = arith.addi %4, %410 : vector<1x256xi32>
    %c16_i32_150 = arith.constant 16 : i32
    %412 = vector.broadcast %c16_i32_150 : i32 to vector<1x256xi32>
    %413 = arith.cmpi slt, %411, %412 : vector<1x256xi32>
    %414 = arith.andi %409, %413 : vector<1x256xi1>
    %c-4_i32_151 = arith.constant -4 : i32
    %415 = vector.broadcast %c-4_i32_151 : i32 to vector<1x256xi32>
    %416 = arith.addi %6, %415 : vector<1x256xi32>
    %c0_i32_152 = arith.constant 0 : i32
    %417 = vector.broadcast %c0_i32_152 : i32 to vector<1x256xi32>
    %418 = arith.cmpi sge, %416, %417 : vector<1x256xi32>
    %419 = arith.andi %414, %418 : vector<1x256xi1>
    %c-4_i32_153 = arith.constant -4 : i32
    %420 = vector.broadcast %c-4_i32_153 : i32 to vector<1x256xi32>
    %421 = arith.addi %6, %420 : vector<1x256xi32>
    %c16_i32_154 = arith.constant 16 : i32
    %422 = vector.broadcast %c16_i32_154 : i32 to vector<1x256xi32>
    %423 = arith.cmpi slt, %421, %422 : vector<1x256xi32>
    %424 = arith.andi %419, %423 : vector<1x256xi1>
    %425 = arith.extui %424 : vector<1x256xi1> to vector<1x256xi32>
    %426 = arith.sitofp %425 : vector<1x256xi32> to vector<1x256xf32>
    %c0_i32_155 = arith.constant 0 : i32
    %427 = vector.broadcast %c0_i32_155 : i32 to vector<1x256xi32>
    %428 = arith.addi %4, %427 : vector<1x256xi32>
    %c0_i32_156 = arith.constant 0 : i32
    %429 = vector.broadcast %c0_i32_156 : i32 to vector<1x256xi32>
    %430 = arith.cmpi sge, %428, %429 : vector<1x256xi32>
    %c0_i32_157 = arith.constant 0 : i32
    %431 = vector.broadcast %c0_i32_157 : i32 to vector<1x256xi32>
    %432 = arith.addi %4, %431 : vector<1x256xi32>
    %c16_i32_158 = arith.constant 16 : i32
    %433 = vector.broadcast %c16_i32_158 : i32 to vector<1x256xi32>
    %434 = arith.cmpi slt, %432, %433 : vector<1x256xi32>
    %435 = arith.andi %430, %434 : vector<1x256xi1>
    %c4_i32_159 = arith.constant 4 : i32
    %436 = vector.broadcast %c4_i32_159 : i32 to vector<1x256xi32>
    %437 = arith.addi %6, %436 : vector<1x256xi32>
    %c0_i32_160 = arith.constant 0 : i32
    %438 = vector.broadcast %c0_i32_160 : i32 to vector<1x256xi32>
    %439 = arith.cmpi sge, %437, %438 : vector<1x256xi32>
    %440 = arith.andi %435, %439 : vector<1x256xi1>
    %c4_i32_161 = arith.constant 4 : i32
    %441 = vector.broadcast %c4_i32_161 : i32 to vector<1x256xi32>
    %442 = arith.addi %6, %441 : vector<1x256xi32>
    %c16_i32_162 = arith.constant 16 : i32
    %443 = vector.broadcast %c16_i32_162 : i32 to vector<1x256xi32>
    %444 = arith.cmpi slt, %442, %443 : vector<1x256xi32>
    %445 = arith.andi %440, %444 : vector<1x256xi1>
    %446 = arith.extui %445 : vector<1x256xi1> to vector<1x256xi32>
    %447 = arith.sitofp %446 : vector<1x256xi32> to vector<1x256xf32>
    %c4_i32_163 = arith.constant 4 : i32
    %448 = vector.broadcast %c4_i32_163 : i32 to vector<1x256xi32>
    %449 = arith.addi %4, %448 : vector<1x256xi32>
    %c0_i32_164 = arith.constant 0 : i32
    %450 = vector.broadcast %c0_i32_164 : i32 to vector<1x256xi32>
    %451 = arith.cmpi sge, %449, %450 : vector<1x256xi32>
    %c4_i32_165 = arith.constant 4 : i32
    %452 = vector.broadcast %c4_i32_165 : i32 to vector<1x256xi32>
    %453 = arith.addi %4, %452 : vector<1x256xi32>
    %c16_i32_166 = arith.constant 16 : i32
    %454 = vector.broadcast %c16_i32_166 : i32 to vector<1x256xi32>
    %455 = arith.cmpi slt, %453, %454 : vector<1x256xi32>
    %456 = arith.andi %451, %455 : vector<1x256xi1>
    %c-4_i32_167 = arith.constant -4 : i32
    %457 = vector.broadcast %c-4_i32_167 : i32 to vector<1x256xi32>
    %458 = arith.addi %6, %457 : vector<1x256xi32>
    %c0_i32_168 = arith.constant 0 : i32
    %459 = vector.broadcast %c0_i32_168 : i32 to vector<1x256xi32>
    %460 = arith.cmpi sge, %458, %459 : vector<1x256xi32>
    %461 = arith.andi %456, %460 : vector<1x256xi1>
    %c-4_i32_169 = arith.constant -4 : i32
    %462 = vector.broadcast %c-4_i32_169 : i32 to vector<1x256xi32>
    %463 = arith.addi %6, %462 : vector<1x256xi32>
    %c16_i32_170 = arith.constant 16 : i32
    %464 = vector.broadcast %c16_i32_170 : i32 to vector<1x256xi32>
    %465 = arith.cmpi slt, %463, %464 : vector<1x256xi32>
    %466 = arith.andi %461, %465 : vector<1x256xi1>
    %467 = arith.extui %466 : vector<1x256xi1> to vector<1x256xi32>
    %468 = arith.sitofp %467 : vector<1x256xi32> to vector<1x256xf32>
    %c4_i32_171 = arith.constant 4 : i32
    %469 = vector.broadcast %c4_i32_171 : i32 to vector<1x256xi32>
    %470 = arith.addi %4, %469 : vector<1x256xi32>
    %c0_i32_172 = arith.constant 0 : i32
    %471 = vector.broadcast %c0_i32_172 : i32 to vector<1x256xi32>
    %472 = arith.cmpi sge, %470, %471 : vector<1x256xi32>
    %c4_i32_173 = arith.constant 4 : i32
    %473 = vector.broadcast %c4_i32_173 : i32 to vector<1x256xi32>
    %474 = arith.addi %4, %473 : vector<1x256xi32>
    %c16_i32_174 = arith.constant 16 : i32
    %475 = vector.broadcast %c16_i32_174 : i32 to vector<1x256xi32>
    %476 = arith.cmpi slt, %474, %475 : vector<1x256xi32>
    %477 = arith.andi %472, %476 : vector<1x256xi1>
    %c0_i32_175 = arith.constant 0 : i32
    %478 = vector.broadcast %c0_i32_175 : i32 to vector<1x256xi32>
    %479 = arith.addi %6, %478 : vector<1x256xi32>
    %c0_i32_176 = arith.constant 0 : i32
    %480 = vector.broadcast %c0_i32_176 : i32 to vector<1x256xi32>
    %481 = arith.cmpi sge, %479, %480 : vector<1x256xi32>
    %482 = arith.andi %477, %481 : vector<1x256xi1>
    %c0_i32_177 = arith.constant 0 : i32
    %483 = vector.broadcast %c0_i32_177 : i32 to vector<1x256xi32>
    %484 = arith.addi %6, %483 : vector<1x256xi32>
    %c16_i32_178 = arith.constant 16 : i32
    %485 = vector.broadcast %c16_i32_178 : i32 to vector<1x256xi32>
    %486 = arith.cmpi slt, %484, %485 : vector<1x256xi32>
    %487 = arith.andi %482, %486 : vector<1x256xi1>
    %488 = arith.extui %487 : vector<1x256xi1> to vector<1x256xi32>
    %489 = arith.sitofp %488 : vector<1x256xi32> to vector<1x256xf32>
    %c4_i32_179 = arith.constant 4 : i32
    %490 = vector.broadcast %c4_i32_179 : i32 to vector<1x256xi32>
    %491 = arith.addi %4, %490 : vector<1x256xi32>
    %c0_i32_180 = arith.constant 0 : i32
    %492 = vector.broadcast %c0_i32_180 : i32 to vector<1x256xi32>
    %493 = arith.cmpi sge, %491, %492 : vector<1x256xi32>
    %c4_i32_181 = arith.constant 4 : i32
    %494 = vector.broadcast %c4_i32_181 : i32 to vector<1x256xi32>
    %495 = arith.addi %4, %494 : vector<1x256xi32>
    %c16_i32_182 = arith.constant 16 : i32
    %496 = vector.broadcast %c16_i32_182 : i32 to vector<1x256xi32>
    %497 = arith.cmpi slt, %495, %496 : vector<1x256xi32>
    %498 = arith.andi %493, %497 : vector<1x256xi1>
    %c4_i32_183 = arith.constant 4 : i32
    %499 = vector.broadcast %c4_i32_183 : i32 to vector<1x256xi32>
    %500 = arith.addi %6, %499 : vector<1x256xi32>
    %c0_i32_184 = arith.constant 0 : i32
    %501 = vector.broadcast %c0_i32_184 : i32 to vector<1x256xi32>
    %502 = arith.cmpi sge, %500, %501 : vector<1x256xi32>
    %503 = arith.andi %498, %502 : vector<1x256xi1>
    %c4_i32_185 = arith.constant 4 : i32
    %504 = vector.broadcast %c4_i32_185 : i32 to vector<1x256xi32>
    %505 = arith.addi %6, %504 : vector<1x256xi32>
    %c16_i32_186 = arith.constant 16 : i32
    %506 = vector.broadcast %c16_i32_186 : i32 to vector<1x256xi32>
    %507 = arith.cmpi slt, %505, %506 : vector<1x256xi32>
    %508 = arith.andi %503, %507 : vector<1x256xi1>
    %509 = arith.extui %508 : vector<1x256xi1> to vector<1x256xi32>
    %510 = arith.sitofp %509 : vector<1x256xi32> to vector<1x256xf32>
    %c-8_i32 = arith.constant -8 : i32
    %511 = vector.broadcast %c-8_i32 : i32 to vector<1x256xi32>
    %512 = arith.addi %4, %511 : vector<1x256xi32>
    %c0_i32_187 = arith.constant 0 : i32
    %513 = vector.broadcast %c0_i32_187 : i32 to vector<1x256xi32>
    %514 = arith.cmpi sge, %512, %513 : vector<1x256xi32>
    %c-8_i32_188 = arith.constant -8 : i32
    %515 = vector.broadcast %c-8_i32_188 : i32 to vector<1x256xi32>
    %516 = arith.addi %4, %515 : vector<1x256xi32>
    %c16_i32_189 = arith.constant 16 : i32
    %517 = vector.broadcast %c16_i32_189 : i32 to vector<1x256xi32>
    %518 = arith.cmpi slt, %516, %517 : vector<1x256xi32>
    %519 = arith.andi %514, %518 : vector<1x256xi1>
    %c-8_i32_190 = arith.constant -8 : i32
    %520 = vector.broadcast %c-8_i32_190 : i32 to vector<1x256xi32>
    %521 = arith.addi %6, %520 : vector<1x256xi32>
    %c0_i32_191 = arith.constant 0 : i32
    %522 = vector.broadcast %c0_i32_191 : i32 to vector<1x256xi32>
    %523 = arith.cmpi sge, %521, %522 : vector<1x256xi32>
    %524 = arith.andi %519, %523 : vector<1x256xi1>
    %c-8_i32_192 = arith.constant -8 : i32
    %525 = vector.broadcast %c-8_i32_192 : i32 to vector<1x256xi32>
    %526 = arith.addi %6, %525 : vector<1x256xi32>
    %c16_i32_193 = arith.constant 16 : i32
    %527 = vector.broadcast %c16_i32_193 : i32 to vector<1x256xi32>
    %528 = arith.cmpi slt, %526, %527 : vector<1x256xi32>
    %529 = arith.andi %524, %528 : vector<1x256xi1>
    %530 = arith.extui %529 : vector<1x256xi1> to vector<1x256xi32>
    %531 = arith.sitofp %530 : vector<1x256xi32> to vector<1x256xf32>
    %c-8_i32_194 = arith.constant -8 : i32
    %532 = vector.broadcast %c-8_i32_194 : i32 to vector<1x256xi32>
    %533 = arith.addi %4, %532 : vector<1x256xi32>
    %c0_i32_195 = arith.constant 0 : i32
    %534 = vector.broadcast %c0_i32_195 : i32 to vector<1x256xi32>
    %535 = arith.cmpi sge, %533, %534 : vector<1x256xi32>
    %c-8_i32_196 = arith.constant -8 : i32
    %536 = vector.broadcast %c-8_i32_196 : i32 to vector<1x256xi32>
    %537 = arith.addi %4, %536 : vector<1x256xi32>
    %c16_i32_197 = arith.constant 16 : i32
    %538 = vector.broadcast %c16_i32_197 : i32 to vector<1x256xi32>
    %539 = arith.cmpi slt, %537, %538 : vector<1x256xi32>
    %540 = arith.andi %535, %539 : vector<1x256xi1>
    %c0_i32_198 = arith.constant 0 : i32
    %541 = vector.broadcast %c0_i32_198 : i32 to vector<1x256xi32>
    %542 = arith.addi %6, %541 : vector<1x256xi32>
    %c0_i32_199 = arith.constant 0 : i32
    %543 = vector.broadcast %c0_i32_199 : i32 to vector<1x256xi32>
    %544 = arith.cmpi sge, %542, %543 : vector<1x256xi32>
    %545 = arith.andi %540, %544 : vector<1x256xi1>
    %c0_i32_200 = arith.constant 0 : i32
    %546 = vector.broadcast %c0_i32_200 : i32 to vector<1x256xi32>
    %547 = arith.addi %6, %546 : vector<1x256xi32>
    %c16_i32_201 = arith.constant 16 : i32
    %548 = vector.broadcast %c16_i32_201 : i32 to vector<1x256xi32>
    %549 = arith.cmpi slt, %547, %548 : vector<1x256xi32>
    %550 = arith.andi %545, %549 : vector<1x256xi1>
    %551 = arith.extui %550 : vector<1x256xi1> to vector<1x256xi32>
    %552 = arith.sitofp %551 : vector<1x256xi32> to vector<1x256xf32>
    %c-8_i32_202 = arith.constant -8 : i32
    %553 = vector.broadcast %c-8_i32_202 : i32 to vector<1x256xi32>
    %554 = arith.addi %4, %553 : vector<1x256xi32>
    %c0_i32_203 = arith.constant 0 : i32
    %555 = vector.broadcast %c0_i32_203 : i32 to vector<1x256xi32>
    %556 = arith.cmpi sge, %554, %555 : vector<1x256xi32>
    %c-8_i32_204 = arith.constant -8 : i32
    %557 = vector.broadcast %c-8_i32_204 : i32 to vector<1x256xi32>
    %558 = arith.addi %4, %557 : vector<1x256xi32>
    %c16_i32_205 = arith.constant 16 : i32
    %559 = vector.broadcast %c16_i32_205 : i32 to vector<1x256xi32>
    %560 = arith.cmpi slt, %558, %559 : vector<1x256xi32>
    %561 = arith.andi %556, %560 : vector<1x256xi1>
    %c8_i32 = arith.constant 8 : i32
    %562 = vector.broadcast %c8_i32 : i32 to vector<1x256xi32>
    %563 = arith.addi %6, %562 : vector<1x256xi32>
    %c0_i32_206 = arith.constant 0 : i32
    %564 = vector.broadcast %c0_i32_206 : i32 to vector<1x256xi32>
    %565 = arith.cmpi sge, %563, %564 : vector<1x256xi32>
    %566 = arith.andi %561, %565 : vector<1x256xi1>
    %c8_i32_207 = arith.constant 8 : i32
    %567 = vector.broadcast %c8_i32_207 : i32 to vector<1x256xi32>
    %568 = arith.addi %6, %567 : vector<1x256xi32>
    %c16_i32_208 = arith.constant 16 : i32
    %569 = vector.broadcast %c16_i32_208 : i32 to vector<1x256xi32>
    %570 = arith.cmpi slt, %568, %569 : vector<1x256xi32>
    %571 = arith.andi %566, %570 : vector<1x256xi1>
    %572 = arith.extui %571 : vector<1x256xi1> to vector<1x256xi32>
    %573 = arith.sitofp %572 : vector<1x256xi32> to vector<1x256xf32>
    %c0_i32_209 = arith.constant 0 : i32
    %574 = vector.broadcast %c0_i32_209 : i32 to vector<1x256xi32>
    %575 = arith.addi %4, %574 : vector<1x256xi32>
    %c0_i32_210 = arith.constant 0 : i32
    %576 = vector.broadcast %c0_i32_210 : i32 to vector<1x256xi32>
    %577 = arith.cmpi sge, %575, %576 : vector<1x256xi32>
    %c0_i32_211 = arith.constant 0 : i32
    %578 = vector.broadcast %c0_i32_211 : i32 to vector<1x256xi32>
    %579 = arith.addi %4, %578 : vector<1x256xi32>
    %c16_i32_212 = arith.constant 16 : i32
    %580 = vector.broadcast %c16_i32_212 : i32 to vector<1x256xi32>
    %581 = arith.cmpi slt, %579, %580 : vector<1x256xi32>
    %582 = arith.andi %577, %581 : vector<1x256xi1>
    %c-8_i32_213 = arith.constant -8 : i32
    %583 = vector.broadcast %c-8_i32_213 : i32 to vector<1x256xi32>
    %584 = arith.addi %6, %583 : vector<1x256xi32>
    %c0_i32_214 = arith.constant 0 : i32
    %585 = vector.broadcast %c0_i32_214 : i32 to vector<1x256xi32>
    %586 = arith.cmpi sge, %584, %585 : vector<1x256xi32>
    %587 = arith.andi %582, %586 : vector<1x256xi1>
    %c-8_i32_215 = arith.constant -8 : i32
    %588 = vector.broadcast %c-8_i32_215 : i32 to vector<1x256xi32>
    %589 = arith.addi %6, %588 : vector<1x256xi32>
    %c16_i32_216 = arith.constant 16 : i32
    %590 = vector.broadcast %c16_i32_216 : i32 to vector<1x256xi32>
    %591 = arith.cmpi slt, %589, %590 : vector<1x256xi32>
    %592 = arith.andi %587, %591 : vector<1x256xi1>
    %593 = arith.extui %592 : vector<1x256xi1> to vector<1x256xi32>
    %594 = arith.sitofp %593 : vector<1x256xi32> to vector<1x256xf32>
    %c0_i32_217 = arith.constant 0 : i32
    %595 = vector.broadcast %c0_i32_217 : i32 to vector<1x256xi32>
    %596 = arith.addi %4, %595 : vector<1x256xi32>
    %c0_i32_218 = arith.constant 0 : i32
    %597 = vector.broadcast %c0_i32_218 : i32 to vector<1x256xi32>
    %598 = arith.cmpi sge, %596, %597 : vector<1x256xi32>
    %c0_i32_219 = arith.constant 0 : i32
    %599 = vector.broadcast %c0_i32_219 : i32 to vector<1x256xi32>
    %600 = arith.addi %4, %599 : vector<1x256xi32>
    %c16_i32_220 = arith.constant 16 : i32
    %601 = vector.broadcast %c16_i32_220 : i32 to vector<1x256xi32>
    %602 = arith.cmpi slt, %600, %601 : vector<1x256xi32>
    %603 = arith.andi %598, %602 : vector<1x256xi1>
    %c8_i32_221 = arith.constant 8 : i32
    %604 = vector.broadcast %c8_i32_221 : i32 to vector<1x256xi32>
    %605 = arith.addi %6, %604 : vector<1x256xi32>
    %c0_i32_222 = arith.constant 0 : i32
    %606 = vector.broadcast %c0_i32_222 : i32 to vector<1x256xi32>
    %607 = arith.cmpi sge, %605, %606 : vector<1x256xi32>
    %608 = arith.andi %603, %607 : vector<1x256xi1>
    %c8_i32_223 = arith.constant 8 : i32
    %609 = vector.broadcast %c8_i32_223 : i32 to vector<1x256xi32>
    %610 = arith.addi %6, %609 : vector<1x256xi32>
    %c16_i32_224 = arith.constant 16 : i32
    %611 = vector.broadcast %c16_i32_224 : i32 to vector<1x256xi32>
    %612 = arith.cmpi slt, %610, %611 : vector<1x256xi32>
    %613 = arith.andi %608, %612 : vector<1x256xi1>
    %614 = arith.extui %613 : vector<1x256xi1> to vector<1x256xi32>
    %615 = arith.sitofp %614 : vector<1x256xi32> to vector<1x256xf32>
    %c8_i32_225 = arith.constant 8 : i32
    %616 = vector.broadcast %c8_i32_225 : i32 to vector<1x256xi32>
    %617 = arith.addi %4, %616 : vector<1x256xi32>
    %c0_i32_226 = arith.constant 0 : i32
    %618 = vector.broadcast %c0_i32_226 : i32 to vector<1x256xi32>
    %619 = arith.cmpi sge, %617, %618 : vector<1x256xi32>
    %c8_i32_227 = arith.constant 8 : i32
    %620 = vector.broadcast %c8_i32_227 : i32 to vector<1x256xi32>
    %621 = arith.addi %4, %620 : vector<1x256xi32>
    %c16_i32_228 = arith.constant 16 : i32
    %622 = vector.broadcast %c16_i32_228 : i32 to vector<1x256xi32>
    %623 = arith.cmpi slt, %621, %622 : vector<1x256xi32>
    %624 = arith.andi %619, %623 : vector<1x256xi1>
    %c-8_i32_229 = arith.constant -8 : i32
    %625 = vector.broadcast %c-8_i32_229 : i32 to vector<1x256xi32>
    %626 = arith.addi %6, %625 : vector<1x256xi32>
    %c0_i32_230 = arith.constant 0 : i32
    %627 = vector.broadcast %c0_i32_230 : i32 to vector<1x256xi32>
    %628 = arith.cmpi sge, %626, %627 : vector<1x256xi32>
    %629 = arith.andi %624, %628 : vector<1x256xi1>
    %c-8_i32_231 = arith.constant -8 : i32
    %630 = vector.broadcast %c-8_i32_231 : i32 to vector<1x256xi32>
    %631 = arith.addi %6, %630 : vector<1x256xi32>
    %c16_i32_232 = arith.constant 16 : i32
    %632 = vector.broadcast %c16_i32_232 : i32 to vector<1x256xi32>
    %633 = arith.cmpi slt, %631, %632 : vector<1x256xi32>
    %634 = arith.andi %629, %633 : vector<1x256xi1>
    %635 = arith.extui %634 : vector<1x256xi1> to vector<1x256xi32>
    %636 = arith.sitofp %635 : vector<1x256xi32> to vector<1x256xf32>
    %c8_i32_233 = arith.constant 8 : i32
    %637 = vector.broadcast %c8_i32_233 : i32 to vector<1x256xi32>
    %638 = arith.addi %4, %637 : vector<1x256xi32>
    %c0_i32_234 = arith.constant 0 : i32
    %639 = vector.broadcast %c0_i32_234 : i32 to vector<1x256xi32>
    %640 = arith.cmpi sge, %638, %639 : vector<1x256xi32>
    %c8_i32_235 = arith.constant 8 : i32
    %641 = vector.broadcast %c8_i32_235 : i32 to vector<1x256xi32>
    %642 = arith.addi %4, %641 : vector<1x256xi32>
    %c16_i32_236 = arith.constant 16 : i32
    %643 = vector.broadcast %c16_i32_236 : i32 to vector<1x256xi32>
    %644 = arith.cmpi slt, %642, %643 : vector<1x256xi32>
    %645 = arith.andi %640, %644 : vector<1x256xi1>
    %c0_i32_237 = arith.constant 0 : i32
    %646 = vector.broadcast %c0_i32_237 : i32 to vector<1x256xi32>
    %647 = arith.addi %6, %646 : vector<1x256xi32>
    %c0_i32_238 = arith.constant 0 : i32
    %648 = vector.broadcast %c0_i32_238 : i32 to vector<1x256xi32>
    %649 = arith.cmpi sge, %647, %648 : vector<1x256xi32>
    %650 = arith.andi %645, %649 : vector<1x256xi1>
    %c0_i32_239 = arith.constant 0 : i32
    %651 = vector.broadcast %c0_i32_239 : i32 to vector<1x256xi32>
    %652 = arith.addi %6, %651 : vector<1x256xi32>
    %c16_i32_240 = arith.constant 16 : i32
    %653 = vector.broadcast %c16_i32_240 : i32 to vector<1x256xi32>
    %654 = arith.cmpi slt, %652, %653 : vector<1x256xi32>
    %655 = arith.andi %650, %654 : vector<1x256xi1>
    %656 = arith.extui %655 : vector<1x256xi1> to vector<1x256xi32>
    %657 = arith.sitofp %656 : vector<1x256xi32> to vector<1x256xf32>
    %c8_i32_241 = arith.constant 8 : i32
    %658 = vector.broadcast %c8_i32_241 : i32 to vector<1x256xi32>
    %659 = arith.addi %4, %658 : vector<1x256xi32>
    %c0_i32_242 = arith.constant 0 : i32
    %660 = vector.broadcast %c0_i32_242 : i32 to vector<1x256xi32>
    %661 = arith.cmpi sge, %659, %660 : vector<1x256xi32>
    %c8_i32_243 = arith.constant 8 : i32
    %662 = vector.broadcast %c8_i32_243 : i32 to vector<1x256xi32>
    %663 = arith.addi %4, %662 : vector<1x256xi32>
    %c16_i32_244 = arith.constant 16 : i32
    %664 = vector.broadcast %c16_i32_244 : i32 to vector<1x256xi32>
    %665 = arith.cmpi slt, %663, %664 : vector<1x256xi32>
    %666 = arith.andi %661, %665 : vector<1x256xi1>
    %c8_i32_245 = arith.constant 8 : i32
    %667 = vector.broadcast %c8_i32_245 : i32 to vector<1x256xi32>
    %668 = arith.addi %6, %667 : vector<1x256xi32>
    %c0_i32_246 = arith.constant 0 : i32
    %669 = vector.broadcast %c0_i32_246 : i32 to vector<1x256xi32>
    %670 = arith.cmpi sge, %668, %669 : vector<1x256xi32>
    %671 = arith.andi %666, %670 : vector<1x256xi1>
    %c8_i32_247 = arith.constant 8 : i32
    %672 = vector.broadcast %c8_i32_247 : i32 to vector<1x256xi32>
    %673 = arith.addi %6, %672 : vector<1x256xi32>
    %c16_i32_248 = arith.constant 16 : i32
    %674 = vector.broadcast %c16_i32_248 : i32 to vector<1x256xi32>
    %675 = arith.cmpi slt, %673, %674 : vector<1x256xi32>
    %676 = arith.andi %671, %675 : vector<1x256xi1>
    %677 = arith.extui %676 : vector<1x256xi1> to vector<1x256xi32>
    %678 = arith.sitofp %677 : vector<1x256xi32> to vector<1x256xf32>
    %c17_i32 = arith.constant 17 : i32
    %679 = tpu.dynamic_rotate %1 by %c17_i32 dim 1 : vector<8x256xf32>, i32 -> vector<8x256xf32>
    %680 = vector.broadcast %27 : vector<1x256xf32> to vector<8x256xf32>
    %681 = arith.mulf %679, %680 : vector<8x256xf32>
    %c16_i32_249 = arith.constant 16 : i32
    %682 = tpu.dynamic_rotate %1 by %c16_i32_249 dim 1 : vector<8x256xf32>, i32 -> vector<8x256xf32>
    %683 = vector.broadcast %48 : vector<1x256xf32> to vector<8x256xf32>
    %684 = arith.mulf %682, %683 : vector<8x256xf32>
    %c15_i32_250 = arith.constant 15 : i32
    %685 = tpu.dynamic_rotate %1 by %c15_i32_250 dim 1 : vector<8x256xf32>, i32 -> vector<8x256xf32>
    %686 = vector.broadcast %69 : vector<1x256xf32> to vector<8x256xf32>
    %687 = arith.mulf %685, %686 : vector<8x256xf32>
    %c1_i32_251 = arith.constant 1 : i32
    %688 = tpu.dynamic_rotate %1 by %c1_i32_251 dim 1 : vector<8x256xf32>, i32 -> vector<8x256xf32>
    %689 = vector.broadcast %90 : vector<1x256xf32> to vector<8x256xf32>
    %690 = arith.mulf %688, %689 : vector<8x256xf32>
    %c255_i32 = arith.constant 255 : i32
    %691 = tpu.dynamic_rotate %1 by %c255_i32 dim 1 : vector<8x256xf32>, i32 -> vector<8x256xf32>
    %692 = vector.broadcast %111 : vector<1x256xf32> to vector<8x256xf32>
    %693 = arith.mulf %691, %692 : vector<8x256xf32>
    %c241_i32 = arith.constant 241 : i32
    %694 = tpu.dynamic_rotate %1 by %c241_i32 dim 1 : vector<8x256xf32>, i32 -> vector<8x256xf32>
    %695 = vector.broadcast %132 : vector<1x256xf32> to vector<8x256xf32>
    %696 = arith.mulf %694, %695 : vector<8x256xf32>
    %c240_i32 = arith.constant 240 : i32
    %697 = tpu.dynamic_rotate %1 by %c240_i32 dim 1 : vector<8x256xf32>, i32 -> vector<8x256xf32>
    %698 = vector.broadcast %153 : vector<1x256xf32> to vector<8x256xf32>
    %699 = arith.mulf %697, %698 : vector<8x256xf32>
    %c239_i32 = arith.constant 239 : i32
    %700 = tpu.dynamic_rotate %1 by %c239_i32 dim 1 : vector<8x256xf32>, i32 -> vector<8x256xf32>
    %701 = vector.broadcast %174 : vector<1x256xf32> to vector<8x256xf32>
    %702 = arith.mulf %700, %701 : vector<8x256xf32>
    %703 = tpu.concatenate %681, %684, %687, %690, %1, %693, %696, %699, %702 in 0 : vector<8x256xf32>, vector<8x256xf32>, vector<8x256xf32>, vector<8x256xf32>, vector<8x256xf32>, vector<8x256xf32>, vector<8x256xf32>, vector<8x256xf32>, vector<8x256xf32> -> vector<72x256xf32>
    %c0_252 = arith.constant 0 : index
    %c0_253 = arith.constant 0 : index
    %704 = vector.load %arg2[%c0_252, %c0_253] : memref<8x72xf32, #tpu.memory_space<vmem>>, vector<8x72xf32>
    %cst = arith.constant dense<0.000000e+00> : vector<8x256xf32>
    %705 = tpu.matmul %704, %703, %cst {dimension_numbers = #tpu.dot_dimension_numbers<[1], [0], [0], [1], [0, 0, 1, 1], [], []>} : vector<8x72xf32>, vector<72x256xf32>, vector<8x256xf32> -> vector<8x256xf32>
    %c0_254 = arith.constant 0 : index
    %c0_255 = arith.constant 0 : index
    %706 = vector.load %arg3[%c0_254, %c0_255] : memref<8x1xf32, #tpu.memory_space<vmem>>, vector<8x1xf32>
    %707 = vector.broadcast %706 : vector<8x1xf32> to vector<8x256xf32>
    %708 = arith.addf %705, %707 : vector<8x256xf32>
    %cst_256 = arith.constant 0.000000e+00 : f32
    %709 = vector.broadcast %cst_256 : f32 to vector<8x256xf32>
    %710 = arith.maximumf %708, %709 : vector<8x256xf32>
    %c17_i32_257 = arith.constant 17 : i32
    %711 = tpu.dynamic_rotate %710 by %c17_i32_257 dim 1 : vector<8x256xf32>, i32 -> vector<8x256xf32>
    %712 = vector.broadcast %27 : vector<1x256xf32> to vector<8x256xf32>
    %713 = arith.mulf %711, %712 : vector<8x256xf32>
    %c16_i32_258 = arith.constant 16 : i32
    %714 = tpu.dynamic_rotate %710 by %c16_i32_258 dim 1 : vector<8x256xf32>, i32 -> vector<8x256xf32>
    %715 = vector.broadcast %48 : vector<1x256xf32> to vector<8x256xf32>
    %716 = arith.mulf %714, %715 : vector<8x256xf32>
    %c15_i32_259 = arith.constant 15 : i32
    %717 = tpu.dynamic_rotate %710 by %c15_i32_259 dim 1 : vector<8x256xf32>, i32 -> vector<8x256xf32>
    %718 = vector.broadcast %69 : vector<1x256xf32> to vector<8x256xf32>
    %719 = arith.mulf %717, %718 : vector<8x256xf32>
    %c1_i32_260 = arith.constant 1 : i32
    %720 = tpu.dynamic_rotate %710 by %c1_i32_260 dim 1 : vector<8x256xf32>, i32 -> vector<8x256xf32>
    %721 = vector.broadcast %90 : vector<1x256xf32> to vector<8x256xf32>
    %722 = arith.mulf %720, %721 : vector<8x256xf32>
    %c255_i32_261 = arith.constant 255 : i32
    %723 = tpu.dynamic_rotate %710 by %c255_i32_261 dim 1 : vector<8x256xf32>, i32 -> vector<8x256xf32>
    %724 = vector.broadcast %111 : vector<1x256xf32> to vector<8x256xf32>
    %725 = arith.mulf %723, %724 : vector<8x256xf32>
    %c241_i32_262 = arith.constant 241 : i32
    %726 = tpu.dynamic_rotate %710 by %c241_i32_262 dim 1 : vector<8x256xf32>, i32 -> vector<8x256xf32>
    %727 = vector.broadcast %132 : vector<1x256xf32> to vector<8x256xf32>
    %728 = arith.mulf %726, %727 : vector<8x256xf32>
    %c240_i32_263 = arith.constant 240 : i32
    %729 = tpu.dynamic_rotate %710 by %c240_i32_263 dim 1 : vector<8x256xf32>, i32 -> vector<8x256xf32>
    %730 = vector.broadcast %153 : vector<1x256xf32> to vector<8x256xf32>
    %731 = arith.mulf %729, %730 : vector<8x256xf32>
    %c239_i32_264 = arith.constant 239 : i32
    %732 = tpu.dynamic_rotate %710 by %c239_i32_264 dim 1 : vector<8x256xf32>, i32 -> vector<8x256xf32>
    %733 = vector.broadcast %174 : vector<1x256xf32> to vector<8x256xf32>
    %734 = arith.mulf %732, %733 : vector<8x256xf32>
    %735 = tpu.concatenate %713, %716, %719, %722, %710, %725, %728, %731, %734 in 0 : vector<8x256xf32>, vector<8x256xf32>, vector<8x256xf32>, vector<8x256xf32>, vector<8x256xf32>, vector<8x256xf32>, vector<8x256xf32>, vector<8x256xf32>, vector<8x256xf32> -> vector<72x256xf32>
    %c0_265 = arith.constant 0 : index
    %c0_266 = arith.constant 0 : index
    %736 = vector.load %arg4[%c0_265, %c0_266] : memref<8x72xf32, #tpu.memory_space<vmem>>, vector<8x72xf32>
    %cst_267 = arith.constant dense<0.000000e+00> : vector<8x256xf32>
    %737 = tpu.matmul %736, %735, %cst_267 {dimension_numbers = #tpu.dot_dimension_numbers<[1], [0], [0], [1], [0, 0, 1, 1], [], []>} : vector<8x72xf32>, vector<72x256xf32>, vector<8x256xf32> -> vector<8x256xf32>
    %c0_268 = arith.constant 0 : index
    %c0_269 = arith.constant 0 : index
    %738 = vector.load %arg5[%c0_268, %c0_269] : memref<8x1xf32, #tpu.memory_space<vmem>>, vector<8x1xf32>
    %739 = vector.broadcast %738 : vector<8x1xf32> to vector<8x256xf32>
    %740 = arith.addf %737, %739 : vector<8x256xf32>
    %cst_270 = arith.constant 0.000000e+00 : f32
    %741 = vector.broadcast %cst_270 : f32 to vector<8x256xf32>
    %742 = arith.maximumf %740, %741 : vector<8x256xf32>
    %c34_i32 = arith.constant 34 : i32
    %743 = tpu.dynamic_rotate %742 by %c34_i32 dim 1 : vector<8x256xf32>, i32 -> vector<8x256xf32>
    %744 = vector.broadcast %195 : vector<1x256xf32> to vector<8x256xf32>
    %745 = arith.mulf %743, %744 : vector<8x256xf32>
    %c32_i32 = arith.constant 32 : i32
    %746 = tpu.dynamic_rotate %742 by %c32_i32 dim 1 : vector<8x256xf32>, i32 -> vector<8x256xf32>
    %747 = vector.broadcast %216 : vector<1x256xf32> to vector<8x256xf32>
    %748 = arith.mulf %746, %747 : vector<8x256xf32>
    %c30_i32 = arith.constant 30 : i32
    %749 = tpu.dynamic_rotate %742 by %c30_i32 dim 1 : vector<8x256xf32>, i32 -> vector<8x256xf32>
    %750 = vector.broadcast %237 : vector<1x256xf32> to vector<8x256xf32>
    %751 = arith.mulf %749, %750 : vector<8x256xf32>
    %c2_i32_271 = arith.constant 2 : i32
    %752 = tpu.dynamic_rotate %742 by %c2_i32_271 dim 1 : vector<8x256xf32>, i32 -> vector<8x256xf32>
    %753 = vector.broadcast %258 : vector<1x256xf32> to vector<8x256xf32>
    %754 = arith.mulf %752, %753 : vector<8x256xf32>
    %c254_i32 = arith.constant 254 : i32
    %755 = tpu.dynamic_rotate %742 by %c254_i32 dim 1 : vector<8x256xf32>, i32 -> vector<8x256xf32>
    %756 = vector.broadcast %279 : vector<1x256xf32> to vector<8x256xf32>
    %757 = arith.mulf %755, %756 : vector<8x256xf32>
    %c226_i32 = arith.constant 226 : i32
    %758 = tpu.dynamic_rotate %742 by %c226_i32 dim 1 : vector<8x256xf32>, i32 -> vector<8x256xf32>
    %759 = vector.broadcast %300 : vector<1x256xf32> to vector<8x256xf32>
    %760 = arith.mulf %758, %759 : vector<8x256xf32>
    %c224_i32 = arith.constant 224 : i32
    %761 = tpu.dynamic_rotate %742 by %c224_i32 dim 1 : vector<8x256xf32>, i32 -> vector<8x256xf32>
    %762 = vector.broadcast %321 : vector<1x256xf32> to vector<8x256xf32>
    %763 = arith.mulf %761, %762 : vector<8x256xf32>
    %c222_i32 = arith.constant 222 : i32
    %764 = tpu.dynamic_rotate %742 by %c222_i32 dim 1 : vector<8x256xf32>, i32 -> vector<8x256xf32>
    %765 = vector.broadcast %342 : vector<1x256xf32> to vector<8x256xf32>
    %766 = arith.mulf %764, %765 : vector<8x256xf32>
    %767 = tpu.concatenate %745, %748, %751, %754, %742, %757, %760, %763, %766 in 0 : vector<8x256xf32>, vector<8x256xf32>, vector<8x256xf32>, vector<8x256xf32>, vector<8x256xf32>, vector<8x256xf32>, vector<8x256xf32>, vector<8x256xf32>, vector<8x256xf32> -> vector<72x256xf32>
    %c0_272 = arith.constant 0 : index
    %c0_273 = arith.constant 0 : index
    %768 = vector.load %arg6[%c0_272, %c0_273] : memref<8x72xf32, #tpu.memory_space<vmem>>, vector<8x72xf32>
    %cst_274 = arith.constant dense<0.000000e+00> : vector<8x256xf32>
    %769 = tpu.matmul %768, %767, %cst_274 {dimension_numbers = #tpu.dot_dimension_numbers<[1], [0], [0], [1], [0, 0, 1, 1], [], []>} : vector<8x72xf32>, vector<72x256xf32>, vector<8x256xf32> -> vector<8x256xf32>
    %c0_275 = arith.constant 0 : index
    %c0_276 = arith.constant 0 : index
    %770 = vector.load %arg7[%c0_275, %c0_276] : memref<8x1xf32, #tpu.memory_space<vmem>>, vector<8x1xf32>
    %771 = vector.broadcast %770 : vector<8x1xf32> to vector<8x256xf32>
    %772 = arith.addf %769, %771 : vector<8x256xf32>
    %cst_277 = arith.constant 0.000000e+00 : f32
    %773 = vector.broadcast %cst_277 : f32 to vector<8x256xf32>
    %774 = arith.maximumf %772, %773 : vector<8x256xf32>
    %c68_i32 = arith.constant 68 : i32
    %775 = tpu.dynamic_rotate %774 by %c68_i32 dim 1 : vector<8x256xf32>, i32 -> vector<8x256xf32>
    %776 = vector.broadcast %363 : vector<1x256xf32> to vector<8x256xf32>
    %777 = arith.mulf %775, %776 : vector<8x256xf32>
    %c64_i32 = arith.constant 64 : i32
    %778 = tpu.dynamic_rotate %774 by %c64_i32 dim 1 : vector<8x256xf32>, i32 -> vector<8x256xf32>
    %779 = vector.broadcast %384 : vector<1x256xf32> to vector<8x256xf32>
    %780 = arith.mulf %778, %779 : vector<8x256xf32>
    %c60_i32 = arith.constant 60 : i32
    %781 = tpu.dynamic_rotate %774 by %c60_i32 dim 1 : vector<8x256xf32>, i32 -> vector<8x256xf32>
    %782 = vector.broadcast %405 : vector<1x256xf32> to vector<8x256xf32>
    %783 = arith.mulf %781, %782 : vector<8x256xf32>
    %c4_i32_278 = arith.constant 4 : i32
    %784 = tpu.dynamic_rotate %774 by %c4_i32_278 dim 1 : vector<8x256xf32>, i32 -> vector<8x256xf32>
    %785 = vector.broadcast %426 : vector<1x256xf32> to vector<8x256xf32>
    %786 = arith.mulf %784, %785 : vector<8x256xf32>
    %c252_i32 = arith.constant 252 : i32
    %787 = tpu.dynamic_rotate %774 by %c252_i32 dim 1 : vector<8x256xf32>, i32 -> vector<8x256xf32>
    %788 = vector.broadcast %447 : vector<1x256xf32> to vector<8x256xf32>
    %789 = arith.mulf %787, %788 : vector<8x256xf32>
    %c196_i32 = arith.constant 196 : i32
    %790 = tpu.dynamic_rotate %774 by %c196_i32 dim 1 : vector<8x256xf32>, i32 -> vector<8x256xf32>
    %791 = vector.broadcast %468 : vector<1x256xf32> to vector<8x256xf32>
    %792 = arith.mulf %790, %791 : vector<8x256xf32>
    %c192_i32 = arith.constant 192 : i32
    %793 = tpu.dynamic_rotate %774 by %c192_i32 dim 1 : vector<8x256xf32>, i32 -> vector<8x256xf32>
    %794 = vector.broadcast %489 : vector<1x256xf32> to vector<8x256xf32>
    %795 = arith.mulf %793, %794 : vector<8x256xf32>
    %c188_i32 = arith.constant 188 : i32
    %796 = tpu.dynamic_rotate %774 by %c188_i32 dim 1 : vector<8x256xf32>, i32 -> vector<8x256xf32>
    %797 = vector.broadcast %510 : vector<1x256xf32> to vector<8x256xf32>
    %798 = arith.mulf %796, %797 : vector<8x256xf32>
    %799 = tpu.concatenate %777, %780, %783, %786, %774, %789, %792, %795, %798 in 0 : vector<8x256xf32>, vector<8x256xf32>, vector<8x256xf32>, vector<8x256xf32>, vector<8x256xf32>, vector<8x256xf32>, vector<8x256xf32>, vector<8x256xf32>, vector<8x256xf32> -> vector<72x256xf32>
    %c0_279 = arith.constant 0 : index
    %c0_280 = arith.constant 0 : index
    %800 = vector.load %arg8[%c0_279, %c0_280] : memref<8x72xf32, #tpu.memory_space<vmem>>, vector<8x72xf32>
    %cst_281 = arith.constant dense<0.000000e+00> : vector<8x256xf32>
    %801 = tpu.matmul %800, %799, %cst_281 {dimension_numbers = #tpu.dot_dimension_numbers<[1], [0], [0], [1], [0, 0, 1, 1], [], []>} : vector<8x72xf32>, vector<72x256xf32>, vector<8x256xf32> -> vector<8x256xf32>
    %c0_282 = arith.constant 0 : index
    %c0_283 = arith.constant 0 : index
    %802 = vector.load %arg9[%c0_282, %c0_283] : memref<8x1xf32, #tpu.memory_space<vmem>>, vector<8x1xf32>
    %803 = vector.broadcast %802 : vector<8x1xf32> to vector<8x256xf32>
    %804 = arith.addf %801, %803 : vector<8x256xf32>
    %cst_284 = arith.constant 0.000000e+00 : f32
    %805 = vector.broadcast %cst_284 : f32 to vector<8x256xf32>
    %806 = arith.maximumf %804, %805 : vector<8x256xf32>
    %c136_i32 = arith.constant 136 : i32
    %807 = tpu.dynamic_rotate %806 by %c136_i32 dim 1 : vector<8x256xf32>, i32 -> vector<8x256xf32>
    %808 = vector.broadcast %531 : vector<1x256xf32> to vector<8x256xf32>
    %809 = arith.mulf %807, %808 : vector<8x256xf32>
    %c128_i32 = arith.constant 128 : i32
    %810 = tpu.dynamic_rotate %806 by %c128_i32 dim 1 : vector<8x256xf32>, i32 -> vector<8x256xf32>
    %811 = vector.broadcast %552 : vector<1x256xf32> to vector<8x256xf32>
    %812 = arith.mulf %810, %811 : vector<8x256xf32>
    %c120_i32 = arith.constant 120 : i32
    %813 = tpu.dynamic_rotate %806 by %c120_i32 dim 1 : vector<8x256xf32>, i32 -> vector<8x256xf32>
    %814 = vector.broadcast %573 : vector<1x256xf32> to vector<8x256xf32>
    %815 = arith.mulf %813, %814 : vector<8x256xf32>
    %c8_i32_285 = arith.constant 8 : i32
    %816 = tpu.dynamic_rotate %806 by %c8_i32_285 dim 1 : vector<8x256xf32>, i32 -> vector<8x256xf32>
    %817 = vector.broadcast %594 : vector<1x256xf32> to vector<8x256xf32>
    %818 = arith.mulf %816, %817 : vector<8x256xf32>
    %c248_i32 = arith.constant 248 : i32
    %819 = tpu.dynamic_rotate %806 by %c248_i32 dim 1 : vector<8x256xf32>, i32 -> vector<8x256xf32>
    %820 = vector.broadcast %615 : vector<1x256xf32> to vector<8x256xf32>
    %821 = arith.mulf %819, %820 : vector<8x256xf32>
    %c136_i32_286 = arith.constant 136 : i32
    %822 = tpu.dynamic_rotate %806 by %c136_i32_286 dim 1 : vector<8x256xf32>, i32 -> vector<8x256xf32>
    %823 = vector.broadcast %636 : vector<1x256xf32> to vector<8x256xf32>
    %824 = arith.mulf %822, %823 : vector<8x256xf32>
    %c128_i32_287 = arith.constant 128 : i32
    %825 = tpu.dynamic_rotate %806 by %c128_i32_287 dim 1 : vector<8x256xf32>, i32 -> vector<8x256xf32>
    %826 = vector.broadcast %657 : vector<1x256xf32> to vector<8x256xf32>
    %827 = arith.mulf %825, %826 : vector<8x256xf32>
    %c120_i32_288 = arith.constant 120 : i32
    %828 = tpu.dynamic_rotate %806 by %c120_i32_288 dim 1 : vector<8x256xf32>, i32 -> vector<8x256xf32>
    %829 = vector.broadcast %678 : vector<1x256xf32> to vector<8x256xf32>
    %830 = arith.mulf %828, %829 : vector<8x256xf32>
    %831 = tpu.concatenate %809, %812, %815, %818, %806, %821, %824, %827, %830 in 0 : vector<8x256xf32>, vector<8x256xf32>, vector<8x256xf32>, vector<8x256xf32>, vector<8x256xf32>, vector<8x256xf32>, vector<8x256xf32>, vector<8x256xf32>, vector<8x256xf32> -> vector<72x256xf32>
    %c0_289 = arith.constant 0 : index
    %c0_290 = arith.constant 0 : index
    %832 = vector.load %arg10[%c0_289, %c0_290] : memref<8x72xf32, #tpu.memory_space<vmem>>, vector<8x72xf32>
    %cst_291 = arith.constant dense<0.000000e+00> : vector<8x256xf32>
    %833 = tpu.matmul %832, %831, %cst_291 {dimension_numbers = #tpu.dot_dimension_numbers<[1], [0], [0], [1], [0, 0, 1, 1], [], []>} : vector<8x72xf32>, vector<72x256xf32>, vector<8x256xf32> -> vector<8x256xf32>
    %c0_292 = arith.constant 0 : index
    %c0_293 = arith.constant 0 : index
    %834 = vector.load %arg11[%c0_292, %c0_293] : memref<8x1xf32, #tpu.memory_space<vmem>>, vector<8x1xf32>
    %835 = vector.broadcast %834 : vector<8x1xf32> to vector<8x256xf32>
    %836 = arith.addf %833, %835 : vector<8x256xf32>
    %cst_294 = arith.constant 0.000000e+00 : f32
    %837 = vector.broadcast %cst_294 : f32 to vector<8x256xf32>
    %838 = arith.maximumf %836, %837 : vector<8x256xf32>
    %839 = tpu.concatenate %838, %806 in 0 : vector<8x256xf32>, vector<8x256xf32> -> vector<16x256xf32>
    %c68_i32_295 = arith.constant 68 : i32
    %840 = tpu.dynamic_rotate %839 by %c68_i32_295 dim 1 : vector<16x256xf32>, i32 -> vector<16x256xf32>
    %841 = vector.broadcast %363 : vector<1x256xf32> to vector<16x256xf32>
    %842 = arith.mulf %840, %841 : vector<16x256xf32>
    %c64_i32_296 = arith.constant 64 : i32
    %843 = tpu.dynamic_rotate %839 by %c64_i32_296 dim 1 : vector<16x256xf32>, i32 -> vector<16x256xf32>
    %844 = vector.broadcast %384 : vector<1x256xf32> to vector<16x256xf32>
    %845 = arith.mulf %843, %844 : vector<16x256xf32>
    %c60_i32_297 = arith.constant 60 : i32
    %846 = tpu.dynamic_rotate %839 by %c60_i32_297 dim 1 : vector<16x256xf32>, i32 -> vector<16x256xf32>
    %847 = vector.broadcast %405 : vector<1x256xf32> to vector<16x256xf32>
    %848 = arith.mulf %846, %847 : vector<16x256xf32>
    %c4_i32_298 = arith.constant 4 : i32
    %849 = tpu.dynamic_rotate %839 by %c4_i32_298 dim 1 : vector<16x256xf32>, i32 -> vector<16x256xf32>
    %850 = vector.broadcast %426 : vector<1x256xf32> to vector<16x256xf32>
    %851 = arith.mulf %849, %850 : vector<16x256xf32>
    %c252_i32_299 = arith.constant 252 : i32
    %852 = tpu.dynamic_rotate %839 by %c252_i32_299 dim 1 : vector<16x256xf32>, i32 -> vector<16x256xf32>
    %853 = vector.broadcast %447 : vector<1x256xf32> to vector<16x256xf32>
    %854 = arith.mulf %852, %853 : vector<16x256xf32>
    %c196_i32_300 = arith.constant 196 : i32
    %855 = tpu.dynamic_rotate %839 by %c196_i32_300 dim 1 : vector<16x256xf32>, i32 -> vector<16x256xf32>
    %856 = vector.broadcast %468 : vector<1x256xf32> to vector<16x256xf32>
    %857 = arith.mulf %855, %856 : vector<16x256xf32>
    %c192_i32_301 = arith.constant 192 : i32
    %858 = tpu.dynamic_rotate %839 by %c192_i32_301 dim 1 : vector<16x256xf32>, i32 -> vector<16x256xf32>
    %859 = vector.broadcast %489 : vector<1x256xf32> to vector<16x256xf32>
    %860 = arith.mulf %858, %859 : vector<16x256xf32>
    %c188_i32_302 = arith.constant 188 : i32
    %861 = tpu.dynamic_rotate %839 by %c188_i32_302 dim 1 : vector<16x256xf32>, i32 -> vector<16x256xf32>
    %862 = vector.broadcast %510 : vector<1x256xf32> to vector<16x256xf32>
    %863 = arith.mulf %861, %862 : vector<16x256xf32>
    %864 = tpu.concatenate %842, %845, %848, %851, %839, %854, %857, %860, %863 in 0 : vector<16x256xf32>, vector<16x256xf32>, vector<16x256xf32>, vector<16x256xf32>, vector<16x256xf32>, vector<16x256xf32>, vector<16x256xf32>, vector<16x256xf32>, vector<16x256xf32> -> vector<144x256xf32>
    %c0_303 = arith.constant 0 : index
    %c0_304 = arith.constant 0 : index
    %865 = vector.load %arg12[%c0_303, %c0_304] : memref<8x144xf32, #tpu.memory_space<vmem>>, vector<8x144xf32>
    %cst_305 = arith.constant dense<0.000000e+00> : vector<8x256xf32>
    %866 = tpu.matmul %865, %864, %cst_305 {dimension_numbers = #tpu.dot_dimension_numbers<[1], [0], [0], [1], [0, 0, 1, 1], [], []>} : vector<8x144xf32>, vector<144x256xf32>, vector<8x256xf32> -> vector<8x256xf32>
    %c0_306 = arith.constant 0 : index
    %c0_307 = arith.constant 0 : index
    %867 = vector.load %arg13[%c0_306, %c0_307] : memref<8x1xf32, #tpu.memory_space<vmem>>, vector<8x1xf32>
    %868 = vector.broadcast %867 : vector<8x1xf32> to vector<8x256xf32>
    %869 = arith.addf %866, %868 : vector<8x256xf32>
    %cst_308 = arith.constant 0.000000e+00 : f32
    %870 = vector.broadcast %cst_308 : f32 to vector<8x256xf32>
    %871 = arith.maximumf %869, %870 : vector<8x256xf32>
    %872 = tpu.concatenate %871, %774 in 0 : vector<8x256xf32>, vector<8x256xf32> -> vector<16x256xf32>
    %c34_i32_309 = arith.constant 34 : i32
    %873 = tpu.dynamic_rotate %872 by %c34_i32_309 dim 1 : vector<16x256xf32>, i32 -> vector<16x256xf32>
    %874 = vector.broadcast %195 : vector<1x256xf32> to vector<16x256xf32>
    %875 = arith.mulf %873, %874 : vector<16x256xf32>
    %c32_i32_310 = arith.constant 32 : i32
    %876 = tpu.dynamic_rotate %872 by %c32_i32_310 dim 1 : vector<16x256xf32>, i32 -> vector<16x256xf32>
    %877 = vector.broadcast %216 : vector<1x256xf32> to vector<16x256xf32>
    %878 = arith.mulf %876, %877 : vector<16x256xf32>
    %c30_i32_311 = arith.constant 30 : i32
    %879 = tpu.dynamic_rotate %872 by %c30_i32_311 dim 1 : vector<16x256xf32>, i32 -> vector<16x256xf32>
    %880 = vector.broadcast %237 : vector<1x256xf32> to vector<16x256xf32>
    %881 = arith.mulf %879, %880 : vector<16x256xf32>
    %c2_i32_312 = arith.constant 2 : i32
    %882 = tpu.dynamic_rotate %872 by %c2_i32_312 dim 1 : vector<16x256xf32>, i32 -> vector<16x256xf32>
    %883 = vector.broadcast %258 : vector<1x256xf32> to vector<16x256xf32>
    %884 = arith.mulf %882, %883 : vector<16x256xf32>
    %c254_i32_313 = arith.constant 254 : i32
    %885 = tpu.dynamic_rotate %872 by %c254_i32_313 dim 1 : vector<16x256xf32>, i32 -> vector<16x256xf32>
    %886 = vector.broadcast %279 : vector<1x256xf32> to vector<16x256xf32>
    %887 = arith.mulf %885, %886 : vector<16x256xf32>
    %c226_i32_314 = arith.constant 226 : i32
    %888 = tpu.dynamic_rotate %872 by %c226_i32_314 dim 1 : vector<16x256xf32>, i32 -> vector<16x256xf32>
    %889 = vector.broadcast %300 : vector<1x256xf32> to vector<16x256xf32>
    %890 = arith.mulf %888, %889 : vector<16x256xf32>
    %c224_i32_315 = arith.constant 224 : i32
    %891 = tpu.dynamic_rotate %872 by %c224_i32_315 dim 1 : vector<16x256xf32>, i32 -> vector<16x256xf32>
    %892 = vector.broadcast %321 : vector<1x256xf32> to vector<16x256xf32>
    %893 = arith.mulf %891, %892 : vector<16x256xf32>
    %c222_i32_316 = arith.constant 222 : i32
    %894 = tpu.dynamic_rotate %872 by %c222_i32_316 dim 1 : vector<16x256xf32>, i32 -> vector<16x256xf32>
    %895 = vector.broadcast %342 : vector<1x256xf32> to vector<16x256xf32>
    %896 = arith.mulf %894, %895 : vector<16x256xf32>
    %897 = tpu.concatenate %875, %878, %881, %884, %872, %887, %890, %893, %896 in 0 : vector<16x256xf32>, vector<16x256xf32>, vector<16x256xf32>, vector<16x256xf32>, vector<16x256xf32>, vector<16x256xf32>, vector<16x256xf32>, vector<16x256xf32>, vector<16x256xf32> -> vector<144x256xf32>
    %c0_317 = arith.constant 0 : index
    %c0_318 = arith.constant 0 : index
    %898 = vector.load %arg14[%c0_317, %c0_318] : memref<8x144xf32, #tpu.memory_space<vmem>>, vector<8x144xf32>
    %cst_319 = arith.constant dense<0.000000e+00> : vector<8x256xf32>
    %899 = tpu.matmul %898, %897, %cst_319 {dimension_numbers = #tpu.dot_dimension_numbers<[1], [0], [0], [1], [0, 0, 1, 1], [], []>} : vector<8x144xf32>, vector<144x256xf32>, vector<8x256xf32> -> vector<8x256xf32>
    %c0_320 = arith.constant 0 : index
    %c0_321 = arith.constant 0 : index
    %900 = vector.load %arg15[%c0_320, %c0_321] : memref<8x1xf32, #tpu.memory_space<vmem>>, vector<8x1xf32>
    %901 = vector.broadcast %900 : vector<8x1xf32> to vector<8x256xf32>
    %902 = arith.addf %899, %901 : vector<8x256xf32>
    %cst_322 = arith.constant 0.000000e+00 : f32
    %903 = vector.broadcast %cst_322 : f32 to vector<8x256xf32>
    %904 = arith.maximumf %902, %903 : vector<8x256xf32>
    %905 = tpu.concatenate %904, %742 in 0 : vector<8x256xf32>, vector<8x256xf32> -> vector<16x256xf32>
    %c17_i32_323 = arith.constant 17 : i32
    %906 = tpu.dynamic_rotate %905 by %c17_i32_323 dim 1 : vector<16x256xf32>, i32 -> vector<16x256xf32>
    %907 = vector.broadcast %27 : vector<1x256xf32> to vector<16x256xf32>
    %908 = arith.mulf %906, %907 : vector<16x256xf32>
    %c16_i32_324 = arith.constant 16 : i32
    %909 = tpu.dynamic_rotate %905 by %c16_i32_324 dim 1 : vector<16x256xf32>, i32 -> vector<16x256xf32>
    %910 = vector.broadcast %48 : vector<1x256xf32> to vector<16x256xf32>
    %911 = arith.mulf %909, %910 : vector<16x256xf32>
    %c15_i32_325 = arith.constant 15 : i32
    %912 = tpu.dynamic_rotate %905 by %c15_i32_325 dim 1 : vector<16x256xf32>, i32 -> vector<16x256xf32>
    %913 = vector.broadcast %69 : vector<1x256xf32> to vector<16x256xf32>
    %914 = arith.mulf %912, %913 : vector<16x256xf32>
    %c1_i32_326 = arith.constant 1 : i32
    %915 = tpu.dynamic_rotate %905 by %c1_i32_326 dim 1 : vector<16x256xf32>, i32 -> vector<16x256xf32>
    %916 = vector.broadcast %90 : vector<1x256xf32> to vector<16x256xf32>
    %917 = arith.mulf %915, %916 : vector<16x256xf32>
    %c255_i32_327 = arith.constant 255 : i32
    %918 = tpu.dynamic_rotate %905 by %c255_i32_327 dim 1 : vector<16x256xf32>, i32 -> vector<16x256xf32>
    %919 = vector.broadcast %111 : vector<1x256xf32> to vector<16x256xf32>
    %920 = arith.mulf %918, %919 : vector<16x256xf32>
    %c241_i32_328 = arith.constant 241 : i32
    %921 = tpu.dynamic_rotate %905 by %c241_i32_328 dim 1 : vector<16x256xf32>, i32 -> vector<16x256xf32>
    %922 = vector.broadcast %132 : vector<1x256xf32> to vector<16x256xf32>
    %923 = arith.mulf %921, %922 : vector<16x256xf32>
    %c240_i32_329 = arith.constant 240 : i32
    %924 = tpu.dynamic_rotate %905 by %c240_i32_329 dim 1 : vector<16x256xf32>, i32 -> vector<16x256xf32>
    %925 = vector.broadcast %153 : vector<1x256xf32> to vector<16x256xf32>
    %926 = arith.mulf %924, %925 : vector<16x256xf32>
    %c239_i32_330 = arith.constant 239 : i32
    %927 = tpu.dynamic_rotate %905 by %c239_i32_330 dim 1 : vector<16x256xf32>, i32 -> vector<16x256xf32>
    %928 = vector.broadcast %174 : vector<1x256xf32> to vector<16x256xf32>
    %929 = arith.mulf %927, %928 : vector<16x256xf32>
    %930 = tpu.concatenate %908, %911, %914, %917, %905, %920, %923, %926, %929 in 0 : vector<16x256xf32>, vector<16x256xf32>, vector<16x256xf32>, vector<16x256xf32>, vector<16x256xf32>, vector<16x256xf32>, vector<16x256xf32>, vector<16x256xf32>, vector<16x256xf32> -> vector<144x256xf32>
    %c0_331 = arith.constant 0 : index
    %c0_332 = arith.constant 0 : index
    %931 = vector.load %arg16[%c0_331, %c0_332] : memref<8x144xf32, #tpu.memory_space<vmem>>, vector<8x144xf32>
    %cst_333 = arith.constant dense<0.000000e+00> : vector<8x256xf32>
    %932 = tpu.matmul %931, %930, %cst_333 {dimension_numbers = #tpu.dot_dimension_numbers<[1], [0], [0], [1], [0, 0, 1, 1], [], []>} : vector<8x144xf32>, vector<144x256xf32>, vector<8x256xf32> -> vector<8x256xf32>
    %c0_334 = arith.constant 0 : index
    %c0_335 = arith.constant 0 : index
    %933 = vector.load %arg17[%c0_334, %c0_335] : memref<8x1xf32, #tpu.memory_space<vmem>>, vector<8x1xf32>
    %934 = vector.broadcast %933 : vector<8x1xf32> to vector<8x256xf32>
    %935 = arith.addf %932, %934 : vector<8x256xf32>
    %cst_336 = arith.constant 0.000000e+00 : f32
    %936 = vector.broadcast %cst_336 : f32 to vector<8x256xf32>
    %937 = arith.maximumf %935, %936 : vector<8x256xf32>
    %938 = arith.addf %937, %710 : vector<8x256xf32>
    %c0_337 = arith.constant 0 : index
    %c0_338 = arith.constant 0 : index
    %c0_339 = arith.constant 0 : index
    %939 = vector.load %arg18[%c0_337, %c0_338, %c0_339] : memref<1x8x256xf32, #tpu.memory_space<vmem>>, vector<1x8x256xf32>
    %940 = vector.shape_cast %939 : vector<1x8x256xf32> to vector<8x256xf32>
    %941 = vector.shape_cast %938 : vector<8x256xf32> to vector<1x8x256xf32>
    tpu.vector_store %arg18[%c0_337, %c0_338, %c0_339], %941 {strides = array<i32>} : memref<1x8x256xf32, #tpu.memory_space<vmem>>, vector<1x8x256xf32>,
    return
  }
  func.func @transform_0(%arg0: i32) -> (i32, i32, i32) {
    %c0_i32 = arith.constant 0 : i32
    %c0_i32_0 = arith.constant 0 : i32
    %c0_i32_1 = arith.constant 0 : i32
    return %arg0, %c0_i32, %c0_i32_0 : i32, i32, i32
  }
  func.func @transform_1(%arg0: i32) -> (i32, i32) {
    %c0_i32 = arith.constant 0 : i32
    %c0_i32_0 = arith.constant 0 : i32
    %c0_i32_1 = arith.constant 0 : i32
    return %c0_i32, %c0_i32_0 : i32, i32
  }
  func.func @transform_2(%arg0: i32) -> (i32, i32) {
    %c0_i32 = arith.constant 0 : i32
    %c0_i32_0 = arith.constant 0 : i32
    %c0_i32_1 = arith.constant 0 : i32
    return %c0_i32, %c0_i32_0 : i32, i32
  }
  func.func @transform_3(%arg0: i32) -> (i32, i32) {
    %c0_i32 = arith.constant 0 : i32
    %c0_i32_0 = arith.constant 0 : i32
    %c0_i32_1 = arith.constant 0 : i32
    return %c0_i32, %c0_i32_0 : i32, i32
  }
  func.func @transform_4(%arg0: i32) -> (i32, i32) {
    %c0_i32 = arith.constant 0 : i32
    %c0_i32_0 = arith.constant 0 : i32
    %c0_i32_1 = arith.constant 0 : i32
    return %c0_i32, %c0_i32_0 : i32, i32
  }
  func.func @transform_5(%arg0: i32) -> (i32, i32) {
    %c0_i32 = arith.constant 0 : i32
    %c0_i32_0 = arith.constant 0 : i32
    %c0_i32_1 = arith.constant 0 : i32
    return %c0_i32, %c0_i32_0 : i32, i32
  }
  func.func @transform_6(%arg0: i32) -> (i32, i32) {
    %c0_i32 = arith.constant 0 : i32
    %c0_i32_0 = arith.constant 0 : i32
    %c0_i32_1 = arith.constant 0 : i32
    return %c0_i32, %c0_i32_0 : i32, i32
  }
  func.func @transform_7(%arg0: i32) -> (i32, i32) {
    %c0_i32 = arith.constant 0 : i32
    %c0_i32_0 = arith.constant 0 : i32
    %c0_i32_1 = arith.constant 0 : i32
    return %c0_i32, %c0_i32_0 : i32, i32
  }
  func.func @transform_8(%arg0: i32) -> (i32, i32) {
    %c0_i32 = arith.constant 0 : i32
    %c0_i32_0 = arith.constant 0 : i32
    %c0_i32_1 = arith.constant 0 : i32
    return %c0_i32, %c0_i32_0 : i32, i32
  }
  func.func @transform_9(%arg0: i32) -> (i32, i32) {
    %c0_i32 = arith.constant 0 : i32
    %c0_i32_0 = arith.constant 0 : i32
    %c0_i32_1 = arith.constant 0 : i32
    return %c0_i32, %c0_i32_0 : i32, i32
  }
  func.func @transform_10(%arg0: i32) -> (i32, i32) {
    %c0_i32 = arith.constant 0 : i32
    %c0_i32_0 = arith.constant 0 : i32
    %c0_i32_1 = arith.constant 0 : i32
    return %c0_i32, %c0_i32_0 : i32, i32
  }
  func.func @transform_11(%arg0: i32) -> (i32, i32) {
    %c0_i32 = arith.constant 0 : i32
    %c0_i32_0 = arith.constant 0 : i32
    %c0_i32_1 = arith.constant 0 : i32
    return %c0_i32, %c0_i32_0 : i32, i32
  }
  func.func @transform_12(%arg0: i32) -> (i32, i32) {
    %c0_i32 = arith.constant 0 : i32
    %c0_i32_0 = arith.constant 0 : i32
    %c0_i32_1 = arith.constant 0 : i32
    return %c0_i32, %c0_i32_0 : i32, i32
  }
  func.func @transform_13(%arg0: i32) -> (i32, i32) {
    %c0_i32 = arith.constant 0 : i32
    %c0_i32_0 = arith.constant 0 : i32
    %c0_i32_1 = arith.constant 0 : i32
    return %c0_i32, %c0_i32_0 : i32, i32
  }
  func.func @transform_14(%arg0: i32) -> (i32, i32) {
    %c0_i32 = arith.constant 0 : i32
    %c0_i32_0 = arith.constant 0 : i32
    %c0_i32_1 = arith.constant 0 : i32
    return %c0_i32, %c0_i32_0 : i32, i32
  }
  func.func @transform_15(%arg0: i32) -> (i32, i32) {
    %c0_i32 = arith.constant 0 : i32
    %c0_i32_0 = arith.constant 0 : i32
    %c0_i32_1 = arith.constant 0 : i32
    return %c0_i32, %c0_i32_0 : i32, i32
  }
  func.func @transform_16(%arg0: i32) -> (i32, i32) {
    %c0_i32 = arith.constant 0 : i32
    %c0_i32_0 = arith.constant 0 : i32
    %c0_i32_1 = arith.constant 0 : i32
    return %c0_i32, %c0_i32_0 : i32, i32
  }
  func.func @transform_17(%arg0: i32) -> (i32, i32, i32) {
    %c0_i32 = arith.constant 0 : i32
    %c0_i32_0 = arith.constant 0 : i32
    %c0_i32_1 = arith.constant 0 : i32
    return %arg0, %c0_i32, %c0_i32_0 : i32, i32, i32
  }
}

</mosaic_0001>

<llo_original>
// kernel: rsu_4f_forward.1
$region0: #{rsu_4f_forward.1}
  #allocation0 [shape = 'u32[]', space=smem, size = 0x4, offset = 0x4, fixed_abs, tag = 'smem constant byte address 0x4 - core index']
  #allocation1 [shape = 'u32[144,128]{1,0:T(1,128)}', space=vmem, size = 0x12000, scoped, tag = 'internal scratch']
  %s0 = inlined_call_operand.vmem [shape: f32[2,8,256], index: 0, kind: input, shape index: {}]
  %s1 = inlined_call_operand.vmem [shape: f32[8,72], index: 1, kind: input, shape index: {}]
  %s2 = inlined_call_operand.vmem [shape: f32[8,1], index: 2, kind: input, shape index: {}]
  %s3 = inlined_call_operand.vmem [shape: f32[8,72], index: 3, kind: input, shape index: {}]
  %s4 = inlined_call_operand.vmem [shape: f32[8,1], index: 4, kind: input, shape index: {}]
  %s5 = inlined_call_operand.vmem [shape: f32[8,72], index: 5, kind: input, shape index: {}]
  %s6 = inlined_call_operand.vmem [shape: f32[8,1], index: 6, kind: input, shape index: {}]
  %s7 = inlined_call_operand.vmem [shape: f32[8,72], index: 7, kind: input, shape index: {}]
  %s8 = inlined_call_operand.vmem [shape: f32[8,1], index: 8, kind: input, shape index: {}]
  %s9 = inlined_call_operand.vmem [shape: f32[8,72], index: 9, kind: input, shape index: {}]
  %s10 = inlined_call_operand.vmem [shape: f32[8,1], index: 10, kind: input, shape index: {}]
  %s11 = inlined_call_operand.vmem [shape: f32[8,144], index: 11, kind: input, shape index: {}]
  %s12 = inlined_call_operand.vmem [shape: f32[8,1], index: 12, kind: input, shape index: {}]
  %s13 = inlined_call_operand.vmem [shape: f32[8,144], index: 13, kind: input, shape index: {}]
  %s14 = inlined_call_operand.vmem [shape: f32[8,1], index: 14, kind: input, shape index: {}]
  %s15 = inlined_call_operand.vmem [shape: f32[8,144], index: 15, kind: input, shape index: {}]
  %s16 = inlined_call_operand.vmem [shape: f32[8,1], index: 16, kind: input, shape index: {}]
  %s17 = inlined_call_operand.vmem [shape: f32[2,8,256], index: 17, kind: output, shape index: {}]
  %s18 = sld [smem:[#allocation0]]
  $region101: #{rsu_4f_forward.1} parent=0
    _
  %s20 = ssub.s32 1, %s18
  %s21 = scalar_select 0, %s20, %s18
  loop: start=0, step=1, limit=4
  $region2: #{rsu_4f_forward.1} parent=0 // loop_pre_header
    _
  $region3: #{rsu_4f_forward.1} parent=0 // loop_header
    %s23 = sphi 0, %s27
    %p24 = scmp.ge.s32.totalorder %s23, 4
    %s33 = sphi 0, %s35
    %s36 = sphi 0, %s33
    %s37 = sphi 0, %s36
    %s53 = sphi 0, %s37
    %s57 = sphi 0, %s57
    %s59 = sphi 0, %s57
    %s60 = sphi 0, %s59
    %s74 = sphi 0, %s60
    %s78 = sphi 0, %s78
    %s80 = sphi 0, %s78
    %s81 = sphi 0, %s80
    %s95 = sphi 0, %s81
    %s99 = sphi 0, %s99
    %s101 = sphi 0, %s99
    %s102 = sphi 0, %s101
    %s116 = sphi 0, %s102
    %s120 = sphi 0, %s120
    %s122 = sphi 0, %s120
    %s123 = sphi 0, %s122
    %s137 = sphi 0, %s123
    %s141 = sphi 0, %s141
    %s143 = sphi 0, %s141
    %s144 = sphi 0, %s143
    %s158 = sphi 0, %s144
    %s162 = sphi 0, %s162
    %s164 = sphi 0, %s162
    %s165 = sphi 0, %s164
    %s179 = sphi 0, %s165
    %s183 = sphi 0, %s183
    %s185 = sphi 0, %s183
    %s186 = sphi 0, %s185
    %s200 = sphi 0, %s186
    %s204 = sphi 0, %s204
    %s206 = sphi 0, %s204
    %s207 = sphi 0, %s206
    %s221 = sphi 0, %s207
    %s225 = sphi 0, %s225
    %s227 = sphi 0, %s225
    %s228 = sphi 0, %s227
    %s242 = sphi 0, %s228
    %s246 = sphi 0, %s246
    %s248 = sphi 0, %s246
    %s249 = sphi 0, %s248
    %s263 = sphi 0, %s249
    %s267 = sphi 0, %s267
    %s269 = sphi 0, %s267
    %s270 = sphi 0, %s269
    %s284 = sphi 0, %s270
    %s288 = sphi 0, %s288
    %s290 = sphi 0, %s288
    %s291 = sphi 0, %s290
    %s305 = sphi 0, %s291
    %s309 = sphi 0, %s309
    %s311 = sphi 0, %s309
    %s312 = sphi 0, %s311
    %s326 = sphi 0, %s312
    %s330 = sphi 0, %s330
    %s332 = sphi 0, %s330
    %s333 = sphi 0, %s332
    %s347 = sphi 0, %s333
    %s351 = sphi 0, %s351
    %s353 = sphi 0, %s351
    %s354 = sphi 0, %s353
    %s368 = sphi 0, %s354
    %s372 = sphi 0, %s372
    %s374 = sphi 0, %s372
    %s375 = sphi 0, %s374
    %s389 = sphi 0, %s375
    %s395 = sphi 0, %s397
    %s398 = sphi 0, %s395
    %s399 = sphi 0, %s398
    %s415 = sphi 0, %s399
  $region4: #{rsu_4f_forward.1} parent=0 // loop_header_branch
    %26 = sbr.rel (%p24) target = $region8
  $region5: #{rsu_4f_forward.1} parent=0 // loop_body
    %s28 = ssub.s32 %s23, 1
    %s29 = ssub.s32 %s23, 2
    %s30 = sadd.s32 %s23, 1
    %s31 = ssub.s32 %s23, %s30
    %p32 = scmp.eq.s32.totalorder %s31, 0
    %s34 = sadd.s32 %s33, 1
    %s35 = scalar_select %p32, %s33, %s34
    %p38 = pneg %p32
    %p39 = scmp.eq.s32.totalorder %s23, 1
    %p40 = por %p38, %p39
    %p41 = scmp.ne.s32.totalorder %s33, %s36
    %p42 = scmp.eq.s32.totalorder %s23, 0
    %p43 = por %p41, %p42
    %p44 = scmp.ne.s32.totalorder %s33, %s36
    %p45 = scmp.eq.s32.totalorder %s28, 1
    %p46 = por %p44, %p45
    %p47 = scmp.ne.s32.totalorder %s36, %s37
    %p48 = scmp.eq.s32.totalorder %s28, 0
    %p49 = por %p47, %p48
    %p50 = scmp.ne.s32.totalorder %s36, %s37
    %p51 = scmp.eq.s32.totalorder %s29, 1
    %p52 = por %p50, %p51
    %p54 = scmp.ne.s32.totalorder %s37, %s53
    %p55 = scmp.eq.s32.totalorder %s29, 0
    %p56 = por %p54, %p55
    %s58 = sadd.s32 %s57, 1
    %p61 = scmp.eq.s32.totalorder %s23, 1
    %p62 = scmp.ne.s32.totalorder %s57, %s59
    %p63 = scmp.eq.s32.totalorder %s23, 0
    %p64 = por %p62, %p63
    %p65 = scmp.ne.s32.totalorder %s57, %s59
    %p66 = scmp.eq.s32.totalorder %s28, 1
    %p67 = por %p65, %p66
    %p68 = scmp.ne.s32.totalorder %s59, %s60
    %p69 = scmp.eq.s32.totalorder %s28, 0
    %p70 = por %p68, %p69
    %p71 = scmp.ne.s32.totalorder %s59, %s60
    %p72 = scmp.eq.s32.totalorder %s29, 1
    %p73 = por %p71, %p72
    %p75 = scmp.ne.s32.totalorder %s60, %s74
    %p76 = scmp.eq.s32.totalorder %s29, 0
    %p77 = por %p75, %p76
    %s79 = sadd.s32 %s78, 1
    %p82 = scmp.eq.s32.totalorder %s23, 1
    %p83 = scmp.ne.s32.totalorder %s78, %s80
    %p84 = scmp.eq.s32.totalorder %s23, 0
    %p85 = por %p83, %p84
    %p86 = scmp.ne.s32.totalorder %s78, %s80
    %p87 = scmp.eq.s32.totalorder %s28, 1
    %p88 = por %p86, %p87
    %p89 = scmp.ne.s32.totalorder %s80, %s81
    %p90 = scmp.eq.s32.totalorder %s28, 0
    %p91 = por %p89, %p90
    %p92 = scmp.ne.s32.totalorder %s80, %s81
    %p93 = scmp.eq.s32.totalorder %s29, 1
    %p94 = por %p92, %p93
    %p96 = scmp.ne.s32.totalorder %s81, %s95
    %p97 = scmp.eq.s32.totalorder %s29, 0
    %p98 = por %p96, %p97
    %s100 = sadd.s32 %s99, 1
    %p103 = scmp.eq.s32.totalorder %s23, 1
    %p104 = scmp.ne.s32.totalorder %s99, %s101
    %p105 = scmp.eq.s32.totalorder %s23, 0
    %p106 = por %p104, %p105
    %p107 = scmp.ne.s32.totalorder %s99, %s101
    %p108 = scmp.eq.s32.totalorder %s28, 1
    %p109 = por %p107, %p108
    %p110 = scmp.ne.s32.totalorder %s101, %s102
    %p111 = scmp.eq.s32.totalorder %s28, 0
    %p112 = por %p110, %p111
    %p113 = scmp.ne.s32.totalorder %s101, %s102
    %p114 = scmp.eq.s32.totalorder %s29, 1
    %p115 = por %p113, %p114
    %p117 = scmp.ne.s32.totalorder %s102, %s116
    %p118 = scmp.eq.s32.totalorder %s29, 0
    %p119 = por %p117, %p118
    %s121 = sadd.s32 %s120, 1
    %p124 = scmp.eq.s32.totalorder %s23, 1
    %p125 = scmp.ne.s32.totalorder %s120, %s122
    %p126 = scmp.eq.s32.totalorder %s23, 0
    %p127 = por %p125, %p126
    %p128 = scmp.ne.s32.totalorder %s120, %s122
    %p129 = scmp.eq.s32.totalorder %s28, 1
    %p130 = por %p128, %p129
    %p131 = scmp.ne.s32.totalorder %s122, %s123
    %p132 = scmp.eq.s32.totalorder %s28, 0
    %p133 = por %p131, %p132
    %p134 = scmp.ne.s32.totalorder %s122, %s123
    %p135 = scmp.eq.s32.totalorder %s29, 1
    %p136 = por %p134, %p135
    %p138 = scmp.ne.s32.totalorder %s123, %s137
    %p139 = scmp.eq.s32.totalorder %s29, 0
    %p140 = por %p138, %p139
    %s142 = sadd.s32 %s141, 1
    %p145 = scmp.eq.s32.totalorder %s23, 1
    %p146 = scmp.ne.s32.totalorder %s141, %s143
    %p147 = scmp.eq.s32.totalorder %s23, 0
    %p148 = por %p146, %p147
    %p149 = scmp.ne.s32.totalorder %s141, %s143
    %p150 = scmp.eq.s32.totalorder %s28, 1
    %p151 = por %p149, %p150
    %p152 = scmp.ne.s32.totalorder %s143, %s144
    %p153 = scmp.eq.s32.totalorder %s28, 0
    %p154 = por %p152, %p153
    %p155 = scmp.ne.s32.totalorder %s143, %s144
    %p156 = scmp.eq.s32.totalorder %s29, 1
    %p157 = por %p155, %p156
    %p159 = scmp.ne.s32.totalorder %s144, %s158
    %p160 = scmp.eq.s32.totalorder %s29, 0
    %p161 = por %p159, %p160
    %s163 = sadd.s32 %s162, 1
    %p166 = scmp.eq.s32.totalorder %s23, 1
    %p167 = scmp.ne.s32.totalorder %s162, %s164
    %p168 = scmp.eq.s32.totalorder %s23, 0
    %p169 = por %p167, %p168
    %p170 = scmp.ne.s32.totalorder %s162, %s164
    %p171 = scmp.eq.s32.totalorder %s28, 1
    %p172 = por %p170, %p171
    %p173 = scmp.ne.s32.totalorder %s164, %s165
    %p174 = scmp.eq.s32.totalorder %s28, 0
    %p175 = por %p173, %p174
    %p176 = scmp.ne.s32.totalorder %s164, %s165
    %p177 = scmp.eq.s32.totalorder %s29, 1
    %p178 = por %p176, %p177
    %p180 = scmp.ne.s32.totalorder %s165, %s179
    %p181 = scmp.eq.s32.totalorder %s29, 0
    %p182 = por %p180, %p181
    %s184 = sadd.s32 %s183, 1
    %p187 = scmp.eq.s32.totalorder %s23, 1
    %p188 = scmp.ne.s32.totalorder %s183, %s185
    %p189 = scmp.eq.s32.totalorder %s23, 0
    %p190 = por %p188, %p189
    %p191 = scmp.ne.s32.totalorder %s183, %s185
    %p192 = scmp.eq.s32.totalorder %s28, 1
    %p193 = por %p191, %p192
    %p194 = scmp.ne.s32.totalorder %s185, %s186
    %p195 = scmp.eq.s32.totalorder %s28, 0
    %p196 = por %p194, %p195
    %p197 = scmp.ne.s32.totalorder %s185, %s186
    %p198 = scmp.eq.s32.totalorder %s29, 1
    %p199 = por %p197, %p198
    %p201 = scmp.ne.s32.totalorder %s186, %s200
    %p202 = scmp.eq.s32.totalorder %s29, 0
    %p203 = por %p201, %p202
    %s205 = sadd.s32 %s204, 1
    %p208 = scmp.eq.s32.totalorder %s23, 1
    %p209 = scmp.ne.s32.totalorder %s204, %s206
    %p210 = scmp.eq.s32.totalorder %s23, 0
    %p211 = por %p209, %p210
    %p212 = scmp.ne.s32.totalorder %s204, %s206
    %p213 = scmp.eq.s32.totalorder %s28, 1
    %p214 = por %p212, %p213
    %p215 = scmp.ne.s32.totalorder %s206, %s207
    %p216 = scmp.eq.s32.totalorder %s28, 0
    %p217 = por %p215, %p216
    %p218 = scmp.ne.s32.totalorder %s206, %s207
    %p219 = scmp.eq.s32.totalorder %s29, 1
    %p220 = por %p218, %p219
    %p222 = scmp.ne.s32.totalorder %s207, %s221
    %p223 = scmp.eq.s32.totalorder %s29, 0
    %p224 = por %p222, %p223
    %s226 = sadd.s32 %s225, 1
    %p229 = scmp.eq.s32.totalorder %s23, 1
    %p230 = scmp.ne.s32.totalorder %s225, %s227
    %p231 = scmp.eq.s32.totalorder %s23, 0
    %p232 = por %p230, %p231
    %p233 = scmp.ne.s32.totalorder %s225, %s227
    %p234 = scmp.eq.s32.totalorder %s28, 1
    %p235 = por %p233, %p234
    %p236 = scmp.ne.s32.totalorder %s227, %s228
    %p237 = scmp.eq.s32.totalorder %s28, 0
    %p238 = por %p236, %p237
    %p239 = scmp.ne.s32.totalorder %s227, %s228
    %p240 = scmp.eq.s32.totalorder %s29, 1
    %p241 = por %p239, %p240
    %p243 = scmp.ne.s32.totalorder %s228, %s242
    %p244 = scmp.eq.s32.totalorder %s29, 0
    %p245 = por %p243, %p244
    %s247 = sadd.s32 %s246, 1
    %p250 = scmp.eq.s32.totalorder %s23, 1
    %p251 = scmp.ne.s32.totalorder %s246, %s248
    %p252 = scmp.eq.s32.totalorder %s23, 0
    %p253 = por %p251, %p252
    %p254 = scmp.ne.s32.totalorder %s246, %s248
    %p255 = scmp.eq.s32.totalorder %s28, 1
    %p256 = por %p254, %p255
    %p257 = scmp.ne.s32.totalorder %s248, %s249
    %p258 = scmp.eq.s32.totalorder %s28, 0
    %p259 = por %p257, %p258
    %p260 = scmp.ne.s32.totalorder %s248, %s249
    %p261 = scmp.eq.s32.totalorder %s29, 1
    %p262 = por %p260, %p261
    %p264 = scmp.ne.s32.totalorder %s249, %s263
    %p265 = scmp.eq.s32.totalorder %s29, 0
    %p266 = por %p264, %p265
    %s268 = sadd.s32 %s267, 1
    %p271 = scmp.eq.s32.totalorder %s23, 1
    %p272 = scmp.ne.s32.totalorder %s267, %s269
    %p273 = scmp.eq.s32.totalorder %s23, 0
    %p274 = por %p272, %p273
    %p275 = scmp.ne.s32.totalorder %s267, %s269
    %p276 = scmp.eq.s32.totalorder %s28, 1
    %p277 = por %p275, %p276
    %p278 = scmp.ne.s32.totalorder %s269, %s270
    %p279 = scmp.eq.s32.totalorder %s28, 0
    %p280 = por %p278, %p279
    %p281 = scmp.ne.s32.totalorder %s269, %s270
    %p282 = scmp.eq.s32.totalorder %s29, 1
    %p283 = por %p281, %p282
    %p285 = scmp.ne.s32.totalorder %s270, %s284
    %p286 = scmp.eq.s32.totalorder %s29, 0
    %p287 = por %p285, %p286
    %s289 = sadd.s32 %s288, 1
    %p292 = scmp.eq.s32.totalorder %s23, 1
    %p293 = scmp.ne.s32.totalorder %s288, %s290
    %p294 = scmp.eq.s32.totalorder %s23, 0
    %p295 = por %p293, %p294
    %p296 = scmp.ne.s32.totalorder %s288, %s290
    %p297 = scmp.eq.s32.totalorder %s28, 1
    %p298 = por %p296, %p297
    %p299 = scmp.ne.s32.totalorder %s290, %s291
    %p300 = scmp.eq.s32.totalorder %s28, 0
    %p301 = por %p299, %p300
    %p302 = scmp.ne.s32.totalorder %s290, %s291
    %p303 = scmp.eq.s32.totalorder %s29, 1
    %p304 = por %p302, %p303
    %p306 = scmp.ne.s32.totalorder %s291, %s305
    %p307 = scmp.eq.s32.totalorder %s29, 0
    %p308 = por %p306, %p307
    %s310 = sadd.s32 %s309, 1
    %p313 = scmp.eq.s32.totalorder %s23, 1
    %p314 = scmp.ne.s32.totalorder %s309, %s311
    %p315 = scmp.eq.s32.totalorder %s23, 0
    %p316 = por %p314, %p315
    %p317 = scmp.ne.s32.totalorder %s309, %s311
    %p318 = scmp.eq.s32.totalorder %s28, 1
    %p319 = por %p317, %p318
    %p320 = scmp.ne.s32.totalorder %s311, %s312
    %p321 = scmp.eq.s32.totalorder %s28, 0
    %p322 = por %p320, %p321
    %p323 = scmp.ne.s32.totalorder %s311, %s312
    %p324 = scmp.eq.s32.totalorder %s29, 1
    %p325 = por %p323, %p324
    %p327 = scmp.ne.s32.totalorder %s312, %s326
    %p328 = scmp.eq.s32.totalorder %s29, 0
    %p329 = por %p327, %p328
    %s331 = sadd.s32 %s330, 1
    %p334 = scmp.eq.s32.totalorder %s23, 1
    %p335 = scmp.ne.s32.totalorder %s330, %s332
    %p336 = scmp.eq.s32.totalorder %s23, 0
    %p337 = por %p335, %p336
    %p338 = scmp.ne.s32.totalorder %s330, %s332
    %p339 = scmp.eq.s32.totalorder %s28, 1
    %p340 = por %p338, %p339
    %p341 = scmp.ne.s32.totalorder %s332, %s333
    %p342 = scmp.eq.s32.totalorder %s28, 0
    %p343 = por %p341, %p342
    %p344 = scmp.ne.s32.totalorder %s332, %s333
    %p345 = scmp.eq.s32.totalorder %s29, 1
    %p346 = por %p344, %p345
    %p348 = scmp.ne.s32.totalorder %s333, %s347
    %p349 = scmp.eq.s32.totalorder %s29, 0
    %p350 = por %p348, %p349
    %s352 = sadd.s32 %s351, 1
    %p355 = scmp.eq.s32.totalorder %s23, 1
    %p356 = scmp.ne.s32.totalorder %s351, %s353
    %p357 = scmp.eq.s32.totalorder %s23, 0
    %p358 = por %p356, %p357
    %p359 = scmp.ne.s32.totalorder %s351, %s353
    %p360 = scmp.eq.s32.totalorder %s28, 1
    %p361 = por %p359, %p360
    %p362 = scmp.ne.s32.totalorder %s353, %s354
    %p363 = scmp.eq.s32.totalorder %s28, 0
    %p364 = por %p362, %p363
    %p365 = scmp.ne.s32.totalorder %s353, %s354
    %p366 = scmp.eq.s32.totalorder %s29, 1
    %p367 = por %p365, %p366
    %p369 = scmp.ne.s32.totalorder %s354, %s368
    %p370 = scmp.eq.s32.totalorder %s29, 0
    %p371 = por %p369, %p370
    %s373 = sadd.s32 %s372, 1
    %p376 = scmp.eq.s32.totalorder %s23, 1
    %p377 = scmp.ne.s32.totalorder %s372, %s374
    %p378 = scmp.eq.s32.totalorder %s23, 0
    %p379 = por %p377, %p378
    %p380 = scmp.ne.s32.totalorder %s372, %s374
    %p381 = scmp.eq.s32.totalorder %s28, 1
    %p382 = por %p380, %p381
    %p383 = scmp.ne.s32.totalorder %s374, %s375
    %p384 = scmp.eq.s32.totalorder %s28, 0
    %p385 = por %p383, %p384
    %p386 = scmp.ne.s32.totalorder %s374, %s375
    %p387 = scmp.eq.s32.totalorder %s29, 1
    %p388 = por %p386, %p387
    %p390 = scmp.ne.s32.totalorder %s375, %s389
    %p391 = scmp.eq.s32.totalorder %s29, 0
    %p392 = por %p390, %p391
    %s393 = ssub.s32 %s23, %s30
    %p394 = scmp.eq.s32.totalorder %s393, 0
    %s396 = sadd.s32 %s395, 1
    %s397 = scalar_select %p394, %s395, %s396
    %p400 = pneg %p394
    %p401 = scmp.eq.s32.totalorder %s23, 1
    %p402 = por %p400, %p401
    %p403 = scmp.ne.s32.totalorder %s395, %s398
    %p404 = scmp.eq.s32.totalorder %s23, 0
    %p405 = por %p403, %p404
    %p406 = scmp.ne.s32.totalorder %s395, %s398
    %p407 = scmp.eq.s32.totalorder %s28, 1
    %p408 = por %p406, %p407
    %p409 = scmp.ne.s32.totalorder %s398, %s399
    %p410 = scmp.eq.s32.totalorder %s28, 0
    %p411 = por %p409, %p410
    %p412 = scmp.ne.s32.totalorder %s398, %s399
    %p413 = scmp.eq.s32.totalorder %s29, 1
    %p414 = por %p412, %p413
    %p416 = scmp.ne.s32.totalorder %s399, %s415
    %p417 = scmp.eq.s32.totalorder %s29, 0
    %p418 = por %p416, %p417
    %p419 = scmp.le.s32.totalorder 1, %s23
    %p420 = scmp.lt.s32.totalorder %s23, 3
    %p421 = pnand %p419, %p420
    %p422 = pneg %p421
    // Predicated region
    $region9: #{rsu_4f_forward.1} parent=5 // pred_check
      _
    $region10: #{rsu_4f_forward.1} parent=5 // pred_check_branch
      %424 = sbr.rel (%p421) target = $region12
    $region11: #{rsu_4f_forward.1} parent=5 // pred_region
      %s425 = ssub.s32 %s23, 1
      // Predicated region
      $region13: #{rsu_4f_forward.1} parent=11 // pred_check
        %p426 = pneg %p70
      $region14: #{rsu_4f_forward.1} parent=11 // pred_check_branch
        %428 = sbr.rel (%p426) target = $region16
      $region15: #{rsu_4f_forward.1} parent=11 // pred_region
        _
      $region16: #{rsu_4f_forward.1} parent=11 // pred_fallthru
        _
      // Predicated region
      $region17: #{rsu_4f_forward.1} parent=11 // pred_check
        %p429 = pneg %p91
      $region18: #{rsu_4f_forward.1} parent=11 // pred_check_branch
        %431 = sbr.rel (%p429) target = $region20
      $region19: #{rsu_4f_forward.1} parent=11 // pred_region
        _
      $region20: #{rsu_4f_forward.1} parent=11 // pred_fallthru
        _
      // Predicated region
      $region21: #{rsu_4f_forward.1} parent=11 // pred_check
        %p432 = pneg %p112
      $region22: #{rsu_4f_forward.1} parent=11 // pred_check_branch
        %434 = sbr.rel (%p432) target = $region24
      $region23: #{rsu_4f_forward.1} parent=11 // pred_region
        _
      $region24: #{rsu_4f_forward.1} parent=11 // pred_fallthru
        _
      // Predicated region
      $region25: #{rsu_4f_forward.1} parent=11 // pred_check
        %p435 = pneg %p133
      $region26: #{rsu_4f_forward.1} parent=11 // pred_check_branch
        %437 = sbr.rel (%p435) target = $region28
      $region27: #{rsu_4f_forward.1} parent=11 // pred_region
        _
      $region28: #{rsu_4f_forward.1} parent=11 // pred_fallthru
        _
      // Predicated region
      $region29: #{rsu_4f_forward.1} parent=11 // pred_check
        %p438 = pneg %p154
      $region30: #{rsu_4f_forward.1} parent=11 // pred_check_branch
        %440 = sbr.rel (%p438) target = $region32
      $region31: #{rsu_4f_forward.1} parent=11 // pred_region
        _
      $region32: #{rsu_4f_forward.1} parent=11 // pred_fallthru
        _
      // Predicated region
      $region33: #{rsu_4f_forward.1} parent=11 // pred_check
        %p441 = pneg %p175
      $region34: #{rsu_4f_forward.1} parent=11 // pred_check_branch
        %443 = sbr.rel (%p441) target = $region36
      $region35: #{rsu_4f_forward.1} parent=11 // pred_region
        _
      $region36: #{rsu_4f_forward.1} parent=11 // pred_fallthru
        _
      // Predicated region
      $region37: #{rsu_4f_forward.1} parent=11 // pred_check
        %p444 = pneg %p196
      $region38: #{rsu_4f_forward.1} parent=11 // pred_check_branch
        %446 = sbr.rel (%p444) target = $region40
      $region39: #{rsu_4f_forward.1} parent=11 // pred_region
        _
      $region40: #{rsu_4f_forward.1} parent=11 // pred_fallthru
        _
      // Predicated region
      $region41: #{rsu_4f_forward.1} parent=11 // pred_check
        %p447 = pneg %p217
      $region42: #{rsu_4f_forward.1} parent=11 // pred_check_branch
        %449 = sbr.rel (%p447) target = $region44
      $region43: #{rsu_4f_forward.1} parent=11 // pred_region
        _
      $region44: #{rsu_4f_forward.1} parent=11 // pred_fallthru
        _
      // Predicated region
      $region45: #{rsu_4f_forward.1} parent=11 // pred_check
        %p450 = pneg %p238
      $region46: #{rsu_4f_forward.1} parent=11 // pred_check_branch
        %452 = sbr.rel (%p450) target = $region48
      $region47: #{rsu_4f_forward.1} parent=11 // pred_region
        _
      $region48: #{rsu_4f_forward.1} parent=11 // pred_fallthru
        _
      // Predicated region
      $region49: #{rsu_4f_forward.1} parent=11 // pred_check
        %p453 = pneg %p259
      $region50: #{rsu_4f_forward.1} parent=11 // pred_check_branch
        %455 = sbr.rel (%p453) target = $region52
      $region51: #{rsu_4f_forward.1} parent=11 // pred_region
        _
      $region52: #{rsu_4f_forward.1} parent=11 // pred_fallthru
        _
      // Predicated region
      $region53: #{rsu_4f_forward.1} parent=11 // pred_check
        %p456 = pneg %p280
      $region54: #{rsu_4f_forward.1} parent=11 // pred_check_branch
        %458 = sbr.rel (%p456) target = $region56
      $region55: #{rsu_4f_forward.1} parent=11 // pred_region
        _
      $region56: #{rsu_4f_forward.1} parent=11 // pred_fallthru
        _
      // Predicated region
      $region57: #{rsu_4f_forward.1} parent=11 // pred_check
        %p459 = pneg %p301
      $region58: #{rsu_4f_forward.1} parent=11 // pred_check_branch
        %461 = sbr.rel (%p459) target = $region60
      $region59: #{rsu_4f_forward.1} parent=11 // pred_region
        _
      $region60: #{rsu_4f_forward.1} parent=11 // pred_fallthru
        _
      // Predicated region
      $region61: #{rsu_4f_forward.1} parent=11 // pred_check
        %p462 = pneg %p322
      $region62: #{rsu_4f_forward.1} parent=11 // pred_check_branch
        %464 = sbr.rel (%p462) target = $region64
      $region63: #{rsu_4f_forward.1} parent=11 // pred_region
        _
      $region64: #{rsu_4f_forward.1} parent=11 // pred_fallthru
        _
      // Predicated region
      $region65: #{rsu_4f_forward.1} parent=11 // pred_check
        %p465 = pneg %p343
      $region66: #{rsu_4f_forward.1} parent=11 // pred_check_branch
        %467 = sbr.rel (%p465) target = $region68
      $region67: #{rsu_4f_forward.1} parent=11 // pred_region
        _
      $region68: #{rsu_4f_forward.1} parent=11 // pred_fallthru
        _
      // Predicated region
      $region69: #{rsu_4f_forward.1} parent=11 // pred_check
        %p468 = pneg %p364
      $region70: #{rsu_4f_forward.1} parent=11 // pred_check_branch
        %470 = sbr.rel (%p468) target = $region72
      $region71: #{rsu_4f_forward.1} parent=11 // pred_region
        _
      $region72: #{rsu_4f_forward.1} parent=11 // pred_fallthru
        _
      // Predicated region
      $region73: #{rsu_4f_forward.1} parent=11 // pred_check
        %p471 = pneg %p385
      $region74: #{rsu_4f_forward.1} parent=11 // pred_check_branch
        %473 = sbr.rel (%p471) target = $region76
      $region75: #{rsu_4f_forward.1} parent=11 // pred_region
        _
      $region76: #{rsu_4f_forward.1} parent=11 // pred_fallthru
        _
    $region12: #{rsu_4f_forward.1} parent=5 // pred_fallthru
      _
    %p474 = scmp.lt.s32.totalorder %s23, 2
    // Predicated region
    $region77: #{rsu_4f_forward.1} parent=5 // pred_check
      %p475 = pneg %p474
    $region78: #{rsu_4f_forward.1} parent=5 // pred_check_branch
      %477 = sbr.rel (%p475) target = $region80
    $region79: #{rsu_4f_forward.1} parent=5 // pred_region
      // Predicated region
      $region81: #{rsu_4f_forward.1} parent=79 // pred_check
        %p478 = pneg %p43
      $region82: #{rsu_4f_forward.1} parent=79 // pred_check_branch
        %480 = sbr.rel (%p478) target = $region84
      $region83: #{rsu_4f_forward.1} parent=79 // pred_region
        %p481 = scmp.lt.s32.totalorder %s23, 1
        %s482 = scalar_select %p481, %s23, 1
        %s483 = smul.addr %s482, 2
        %s484 = smul.addr %s483, 8
        %s485 = scalar_lea.vmem %s0, %s484
      $region84: #{rsu_4f_forward.1} parent=79 // pred_fallthru
        _
    $region80: #{rsu_4f_forward.1} parent=5 // pred_fallthru
      _
    %p486 = scmp.le.s32.totalorder 1, %s23
    %p487 = scmp.lt.s32.totalorder %s23, 3
    %p488 = pnand %p486, %p487
    %p489 = pneg %p488
    // Predicated region
    $region85: #{rsu_4f_forward.1} parent=5 // pred_check
      _
    $region86: #{rsu_4f_forward.1} parent=5 // pred_check_branch
      %491 = sbr.rel (%p488) target = $region88
    $region87: #{rsu_4f_forward.1} parent=5 // pred_region
      %s492 = ssub.s32 %s23, 1
      %p493 = scmp.lt.s32.totalorder %s28, 1
      %s494 = scalar_select %p493, %s28, 1
      %s495 = smul.addr %s494, 2
      %s496 = smul.addr %s495, 8
      %s497 = scalar_lea.vmem %s0, %s496
      %p498 = pneg %p49
      %p499 = pneg %p46
      %p500 = pneg %p70
      %p501 = pneg %p67
      %p502 = pneg %p91
      %p503 = pneg %p88
      %p504 = pneg %p112
      %p505 = pneg %p109
      %p506 = pneg %p133
      %p507 = pneg %p130
      %p508 = pneg %p154
      %p509 = pneg %p151
      %p510 = pneg %p175
      %p511 = pneg %p172
      %p512 = pneg %p196
      %p513 = pneg %p193
      %p514 = pneg %p217
      %p515 = pneg %p214
      %p516 = pneg %p238
      %p517 = pneg %p235
      %p518 = pneg %p259
      %p519 = pneg %p256
      %p520 = pneg %p280
      %p521 = pneg %p277
      %p522 = pneg %p301
      %p523 = pneg %p298
      %p524 = pneg %p322
      %p525 = pneg %p319
      %p526 = pneg %p343
      %p527 = pneg %p340
      %p528 = pneg %p364
      %p529 = pneg %p361
      %p530 = pneg %p385
      %p531 = pneg %p382
      %p532 = pneg %p411
      %p533 = pneg %p408
      %p534 = scmp.lt.s32.totalorder %s28, 1
      %s535 = scalar_select %p534, %s28, 1
      %s536 = smul.addr %s535, 2
      %s537 = smul.addr %s536, 8
      %s538 = scalar_lea.vmem %s17, %s537
      %p539 = scmp.lt.s32.totalorder %s28, 1
      %s540 = scalar_select %p539, %s28, 1
      %s541 = smul.addr %s540, 2
      %s542 = smul.addr %s541, 8
      %s543 = scalar_lea.vmem %s0, %s542
      %p544 = scmp.lt.s32.totalorder %s28, 1
      %s545 = scalar_select %p544, %s28, 1
      %s546 = smul.addr %s545, 2
      %s547 = smul.addr %s546, 8
      %s548 = scalar_lea.vmem %s17, %s547
      %v549 = vld [vmem:[%s543] sm:$0xff]
      %v550 = vld [vmem:[%s543 + $0x8] sm:$0xff]
      %v551 = vlaneseq
      %v552 = vand.u32 %v551, 127
      %v553 = vadd.s32 %v552, 128
      %v554 = vshra.s32 %v552, 4
      %v555 = vshra.s32 %v553, 4
      %v556 = vand.u32 %v552, 15
      %v557 = vand.u32 %v553, 15
      %v558 = vadd.s32 %v554, 4294967295
      %v559 = vadd.s32 %v555, 4294967295
      %vm560 = vcmp.ge.s32.totalorder %v558, 0
      %vm561 = vcmp.ge.s32.totalorder %v559, 0
      %vm562 = vcmp.lt.s32.totalorder %v558, 16
      %vm563 = vcmp.lt.s32.totalorder %v559, 16
      %vm564 = vmand %vm560, %vm562
      %vm565 = vmand %vm561, %vm563
      %v566 = vadd.s32 %v556, 4294967295
      %v567 = vadd.s32 %v557, 4294967295
      %vm568 = vcmp.ge.s32.totalorder %v566, 0
      %vm569 = vcmp.ge.s32.totalorder %v567, 0
      %vm570 = vmand %vm564, %vm568
      %vm571 = vmand %vm565, %vm569
      %vm572 = vcmp.lt.s32.totalorder %v566, 16
      %vm573 = vcmp.lt.s32.totalorder %v567, 16
      %vm574 = vmand %vm570, %vm572
      %vm575 = vmand %vm571, %vm573
      %v576 = vsel %vm574, 1, 0
      %v577 = vsel %vm575, 1, 0
      %v578 = vcvt.s32.f32 %v576
      %v579 = vcvt.s32.f32 %v577
      %vm580 = vcmp.ge.s32.totalorder %v556, 0
      %vm581 = vcmp.ge.s32.totalorder %v557, 0
      %vm582 = vmand %vm564, %vm580
      %vm583 = vmand %vm565, %vm581
      %vm584 = vcmp.lt.s32.totalorder %v556, 16
      %vm585 = vcmp.lt.s32.totalorder %v557, 16
      %vm586 = vmand %vm582, %vm584
      %vm587 = vmand %vm583, %vm585
      %v588 = vsel %vm586, 1, 0
      %v589 = vsel %vm587, 1, 0
      %v590 = vcvt.s32.f32 %v588
      %v591 = vcvt.s32.f32 %v589
      %v592 = vadd.s32 %v556, 1
      %v593 = vadd.s32 %v557, 1
      %vm594 = vcmp.ge.s32.totalorder %v592, 0
      %vm595 = vcmp.ge.s32.totalorder %v593, 0
      %vm596 = vmand %vm564, %vm594
      %vm597 = vmand %vm565, %vm595
      %vm598 = vcmp.lt.s32.totalorder %v592, 16
      %vm599 = vcmp.lt.s32.totalorder %v593, 16
      %vm600 = vmand %vm596, %vm598
      %vm601 = vmand %vm597, %vm599
      %v602 = vsel %vm600, 1, 0
      %v603 = vsel %vm601, 1, 0
      %v604 = vcvt.s32.f32 %v602
      %v605 = vcvt.s32.f32 %v603
      %vm606 = vcmp.ge.s32.totalorder %v554, 0
      %vm607 = vcmp.ge.s32.totalorder %v555, 0
      %vm608 = vcmp.lt.s32.totalorder %v554, 16
      %vm609 = vcmp.lt.s32.totalorder %v555, 16
      %vm610 = vmand %vm606, %vm608
      %vm611 = vmand %vm607, %vm609
      %vm612 = vmand %vm610, %vm568
      %vm613 = vmand %vm611, %vm569
      %vm614 = vmand %vm612, %vm572
      %vm615 = vmand %vm613, %vm573
      %v616 = vsel %vm614, 1, 0
      %v617 = vsel %vm615, 1, 0
      %v618 = vcvt.s32.f32 %v616
      %v619 = vcvt.s32.f32 %v617
      %vm620 = vmand %vm610, %vm594
      %vm621 = vmand %vm611, %vm595
      %vm622 = vmand %vm620, %vm598
      %vm623 = vmand %vm621, %vm599
      %v624 = vsel %vm622, 1, 0
      %v625 = vsel %vm623, 1, 0
      %v626 = vcvt.s32.f32 %v624
      %v627 = vcvt.s32.f32 %v625
      %v628 = vadd.s32 %v554, 1
      %v629 = vadd.s32 %v555, 1
      %vm630 = vcmp.ge.s32.totalorder %v628, 0
      %vm631 = vcmp.ge.s32.totalorder %v629, 0
      %vm632 = vcmp.lt.s32.totalorder %v628, 16
      %vm633 = vcmp.lt.s32.totalorder %v629, 16
      %vm634 = vmand %vm630, %vm632
      %vm635 = vmand %vm631, %vm633
      %vm636 = vmand %vm634, %vm568
      %vm637 = vmand %vm635, %vm569
      %vm638 = vmand %vm636, %vm572
      %vm639 = vmand %vm637, %vm573
      %v640 = vsel %vm638, 1, 0
      %v641 = vsel %vm639, 1, 0
      %v642 = vcvt.s32.f32 %v640
      %v643 = vcvt.s32.f32 %v641
      %vm644 = vmand %vm634, %vm580
      %vm645 = vmand %vm635, %vm581
      %vm646 = vmand %vm644, %vm584
      %vm647 = vmand %vm645, %vm585
      %v648 = vsel %vm646, 1, 0
      %v649 = vsel %vm647, 1, 0
      %v650 = vcvt.s32.f32 %v648
      %v651 = vcvt.s32.f32 %v649
      %vm652 = vmand %vm634, %vm594
      %vm653 = vmand %vm635, %vm595
      %vm654 = vmand %vm652, %vm598
      %vm655 = vmand %vm653, %vm599
      %v656 = vsel %vm654, 1, 0
      %v657 = vsel %vm655, 1, 0
      %v658 = vcvt.s32.f32 %v656
      %v659 = vcvt.s32.f32 %v657
      %v660 = vadd.s32 %v554, 4294967294
      %v661 = vadd.s32 %v555, 4294967294
      %vm662 = vcmp.ge.s32.totalorder %v660, 0
      %vm663 = vcmp.ge.s32.totalorder %v661, 0
      %vm664 = vcmp.lt.s32.totalorder %v660, 16
      %vm665 = vcmp.lt.s32.totalorder %v661, 16
      %vm666 = vmand %vm662, %vm664
      %vm667 = vmand %vm663, %vm665
      %v668 = vadd.s32 %v556, 4294967294
      %v669 = vadd.s32 %v557, 4294967294
      %vm670 = vcmp.ge.s32.totalorder %v668, 0
      %vm671 = vcmp.ge.s32.totalorder %v669, 0
      %vm672 = vmand %vm666, %vm670
      %vm673 = vmand %vm667, %vm671
      %vm674 = vcmp.lt.s32.totalorder %v668, 16
      %vm675 = vcmp.lt.s32.totalorder %v669, 16
      %vm676 = vmand %vm672, %vm674
      %vm677 = vmand %vm673, %vm675
      %v678 = vsel %vm676, 1, 0
      %v679 = vsel %vm677, 1, 0
      %v680 = vcvt.s32.f32 %v678
      %v681 = vcvt.s32.f32 %v679
      %vm682 = vmand %vm666, %vm580
      %vm683 = vmand %vm667, %vm581
      %vm684 = vmand %vm682, %vm584
      %vm685 = vmand %vm683, %vm585
      %v686 = vsel %vm684, 1, 0
      %v687 = vsel %vm685, 1, 0
      %v688 = vcvt.s32.f32 %v686
      %v689 = vcvt.s32.f32 %v687
      %v690 = vadd.s32 %v556, 2
      %v691 = vadd.s32 %v557, 2
      %vm692 = vcmp.ge.s32.totalorder %v690, 0
      %vm693 = vcmp.ge.s32.totalorder %v691, 0
      %vm694 = vmand %vm666, %vm692
      %vm695 = vmand %vm667, %vm693
      %vm696 = vcmp.lt.s32.totalorder %v690, 16
      %vm697 = vcmp.lt.s32.totalorder %v691, 16
      %vm698 = vmand %vm694, %vm696
      %vm699 = vmand %vm695, %vm697
      %v700 = vsel %vm698, 1, 0
      %v701 = vsel %vm699, 1, 0
      %v702 = vcvt.s32.f32 %v700
      %v703 = vcvt.s32.f32 %v701
      %vm704 = vmand %vm610, %vm670
      %vm705 = vmand %vm611, %vm671
      %vm706 = vmand %vm704, %vm674
      %vm707 = vmand %vm705, %vm675
      %v708 = vsel %vm706, 1, 0
      %v709 = vsel %vm707, 1, 0
      %v710 = vcvt.s32.f32 %v708
      %v711 = vcvt.s32.f32 %v709
      %vm712 = vmand %vm610, %vm692
      %vm713 = vmand %vm611, %vm693
      %vm714 = vmand %vm712, %vm696
      %vm715 = vmand %vm713, %vm697
      %v716 = vsel %vm714, 1, 0
      %v717 = vsel %vm715, 1, 0
      %v718 = vcvt.s32.f32 %v716
      %v719 = vcvt.s32.f32 %v717
      %v720 = vadd.s32 %v554, 2
      %v721 = vadd.s32 %v555, 2
      %vm722 = vcmp.ge.s32.totalorder %v720, 0
      %vm723 = vcmp.ge.s32.totalorder %v721, 0
      %vm724 = vcmp.lt.s32.totalorder %v720, 16
      %vm725 = vcmp.lt.s32.totalorder %v721, 16
      %vm726 = vmand %vm722, %vm724
      %vm727 = vmand %vm723, %vm725
      %vm728 = vmand %vm726, %vm670
      %vm729 = vmand %vm727, %vm671
      %vm730 = vmand %vm728, %vm674
      %vm731 = vmand %vm729, %vm675
      %v732 = vsel %vm730, 1, 0
      %v733 = vsel %vm731, 1, 0
      %v734 = vcvt.s32.f32 %v732
      %v735 = vcvt.s32.f32 %v733
      %vm736 = vmand %vm726, %vm580
      %vm737 = vmand %vm727, %vm581
      %vm738 = vmand %vm736, %vm584
      %vm739 = vmand %vm737, %vm585
      %v740 = vsel %vm738, 1, 0
      %v741 = vsel %vm739, 1, 0
      %v742 = vcvt.s32.f32 %v740
      %v743 = vcvt.s32.f32 %v741
      %vm744 = vmand %vm726, %vm692
      %vm745 = vmand %vm727, %vm693
      %vm746 = vmand %vm744, %vm696
      %vm747 = vmand %vm745, %vm697
      %v748 = vsel %vm746, 1, 0
      %v749 = vsel %vm747, 1, 0
      %v750 = vcvt.s32.f32 %v748
      %v751 = vcvt.s32.f32 %v749
      %v752 = vadd.s32 %v554, 4294967292
      %v753 = vadd.s32 %v555, 4294967292
      %vm754 = vcmp.ge.s32.totalorder %v752, 0
      %vm755 = vcmp.ge.s32.totalorder %v753, 0
      %vm756 = vcmp.lt.s32.totalorder %v752, 16
      %vm757 = vcmp.lt.s32.totalorder %v753, 16
      %vm758 = vmand %vm754, %vm756
      %vm759 = vmand %vm755, %vm757
      %v760 = vadd.s32 %v556, 4294967292
      %v761 = vadd.s32 %v557, 4294967292
      %vm762 = vcmp.ge.s32.totalorder %v760, 0
      %vm763 = vcmp.ge.s32.totalorder %v761, 0
      %vm764 = vmand %vm758, %vm762
      %vm765 = vmand %vm759, %vm763
      %vm766 = vcmp.lt.s32.totalorder %v760, 16
      %vm767 = vcmp.lt.s32.totalorder %v761, 16
      %vm768 = vmand %vm764, %vm766
      %vm769 = vmand %vm765, %vm767
      %v770 = vsel %vm768, 1, 0
      %v771 = vsel %vm769, 1, 0
      %v772 = vcvt.s32.f32 %v770
      %v773 = vcvt.s32.f32 %v771
      %vm774 = vmand %vm758, %vm580
      %vm775 = vmand %vm759, %vm581
      %vm776 = vmand %vm774, %vm584
      %vm777 = vmand %vm775, %vm585
      %v778 = vsel %vm776, 1, 0
      %v779 = vsel %vm777, 1, 0
      %v780 = vcvt.s32.f32 %v778
      %v781 = vcvt.s32.f32 %v779
      %v782 = vadd.s32 %v556, 4
      %v783 = vadd.s32 %v557, 4
      %vm784 = vcmp.ge.s32.totalorder %v782, 0
      %vm785 = vcmp.ge.s32.totalorder %v783, 0
      %vm786 = vmand %vm758, %vm784
      %vm787 = vmand %vm759, %vm785
      %vm788 = vcmp.lt.s32.totalorder %v782, 16
      %vm789 = vcmp.lt.s32.totalorder %v783, 16
      %vm790 = vmand %vm786, %vm788
      %vm791 = vmand %vm787, %vm789
      %v792 = vsel %vm790, 1, 0
      %v793 = vsel %vm791, 1, 0
      %v794 = vcvt.s32.f32 %v792
      %v795 = vcvt.s32.f32 %v793
      %vm796 = vmand %vm610, %vm762
      %vm797 = vmand %vm611, %vm763
      %vm798 = vmand %vm796, %vm766
      %vm799 = vmand %vm797, %vm767
      %v800 = vsel %vm798, 1, 0
      %v801 = vsel %vm799, 1, 0
      %v802 = vcvt.s32.f32 %v800
      %v803 = vcvt.s32.f32 %v801
      %vm804 = vmand %vm610, %vm784
      %vm805 = vmand %vm611, %vm785
      %vm806 = vmand %vm804, %vm788
      %vm807 = vmand %vm805, %vm789
      %v808 = vsel %vm806, 1, 0
      %v809 = vsel %vm807, 1, 0
      %v810 = vcvt.s32.f32 %v808
      %v811 = vcvt.s32.f32 %v809
      %v812 = vadd.s32 %v554, 4
      %v813 = vadd.s32 %v555, 4
      %vm814 = vcmp.ge.s32.totalorder %v812, 0
      %vm815 = vcmp.ge.s32.totalorder %v813, 0
      %vm816 = vcmp.lt.s32.totalorder %v812, 16
      %vm817 = vcmp.lt.s32.totalorder %v813, 16
      %vm818 = vmand %vm814, %vm816
      %vm819 = vmand %vm815, %vm817
      %vm820 = vmand %vm818, %vm762
      %vm821 = vmand %vm819, %vm763
      %vm822 = vmand %vm820, %vm766
      %vm823 = vmand %vm821, %vm767
      %v824 = vsel %vm822, 1, 0
      %v825 = vsel %vm823, 1, 0
      %v826 = vcvt.s32.f32 %v824
      %v827 = vcvt.s32.f32 %v825
      %vm828 = vmand %vm818, %vm580
      %vm829 = vmand %vm819, %vm581
      %vm830 = vmand %vm828, %vm584
      %vm831 = vmand %vm829, %vm585
      %v832 = vsel %vm830, 1, 0
      %v833 = vsel %vm831, 1, 0
      %v834 = vcvt.s32.f32 %v832
      %v835 = vcvt.s32.f32 %v833
      %vm836 = vmand %vm818, %vm784
      %vm837 = vmand %vm819, %vm785
      %vm838 = vmand %vm836, %vm788
      %vm839 = vmand %vm837, %vm789
      %v840 = vsel %vm838, 1, 0
      %v841 = vsel %vm839, 1, 0
      %v842 = vcvt.s32.f32 %v840
      %v843 = vcvt.s32.f32 %v841
      %v844 = vadd.s32 %v554, 4294967288
      %v845 = vadd.s32 %v555, 4294967288
      %vm846 = vcmp.ge.s32.totalorder %v844, 0
      %vm847 = vcmp.ge.s32.totalorder %v845, 0
      %vm848 = vcmp.lt.s32.totalorder %v844, 16
      %vm849 = vcmp.lt.s32.totalorder %v845, 16
      %vm850 = vmand %vm846, %vm848
      %vm851 = vmand %vm847, %vm849
      %v852 = vadd.s32 %v556, 4294967288
      %v853 = vadd.s32 %v557, 4294967288
      %vm854 = vcmp.ge.s32.totalorder %v852, 0
      %vm855 = vcmp.ge.s32.totalorder %v853, 0
      %vm856 = vmand %vm850, %vm854
      %vm857 = vmand %vm851, %vm855
      %vm858 = vcmp.lt.s32.totalorder %v852, 16
      %vm859 = vcmp.lt.s32.totalorder %v853, 16
      %vm860 = vmand %vm856, %vm858
      %vm861 = vmand %vm857, %vm859
      %v862 = vsel %vm860, 1, 0
      %v863 = vsel %vm861, 1, 0
      %v864 = vcvt.s32.f32 %v862
      %v865 = vcvt.s32.f32 %v863
      %vm866 = vmand %vm850, %vm580
      %vm867 = vmand %vm851, %vm581
      %vm868 = vmand %vm866, %vm584
      %vm869 = vmand %vm867, %vm585
      %v870 = vsel %vm868, 1, 0
      %v871 = vsel %vm869, 1, 0
      %v872 = vcvt.s32.f32 %v870
      %v873 = vcvt.s32.f32 %v871
      %v874 = vadd.s32 %v556, 8
      %v875 = vadd.s32 %v557, 8
      %vm876 = vcmp.ge.s32.totalorder %v874, 0
      %vm877 = vcmp.ge.s32.totalorder %v875, 0
      %vm878 = vmand %vm850, %vm876
      %vm879 = vmand %vm851, %vm877
      %vm880 = vcmp.lt.s32.totalorder %v874, 16
      %vm881 = vcmp.lt.s32.totalorder %v875, 16
      %vm882 = vmand %vm878, %vm880
      %vm883 = vmand %vm879, %vm881
      %v884 = vsel %vm882, 1, 0
      %v885 = vsel %vm883, 1, 0
      %v886 = vcvt.s32.f32 %v884
      %v887 = vcvt.s32.f32 %v885
      %vm888 = vmand %vm610, %vm854
      %vm889 = vmand %vm611, %vm855
      %vm890 = vmand %vm888, %vm858
      %vm891 = vmand %vm889, %vm859
      %v892 = vsel %vm890, 1, 0
      %v893 = vsel %vm891, 1, 0
      %v894 = vcvt.s32.f32 %v892
      %v895 = vcvt.s32.f32 %v893
      %vm896 = vmand %vm610, %vm876
      %vm897 = vmand %vm611, %vm877
      %vm898 = vmand %vm896, %vm880
      %vm899 = vmand %vm897, %vm881
      %v900 = vsel %vm898, 1, 0
      %v901 = vsel %vm899, 1, 0
      %v902 = vcvt.s32.f32 %v900
      %v903 = vcvt.s32.f32 %v901
      %v904 = vadd.s32 %v554, 8
      %v905 = vadd.s32 %v555, 8
      %vm906 = vcmp.ge.s32.totalorder %v904, 0
      %vm907 = vcmp.ge.s32.totalorder %v905, 0
      %vm908 = vcmp.lt.s32.totalorder %v904, 16
      %vm909 = vcmp.lt.s32.totalorder %v905, 16
      %vm910 = vmand %vm906, %vm908
      %vm911 = vmand %vm907, %vm909
      %vm912 = vmand %vm910, %vm854
      %vm913 = vmand %vm911, %vm855
      %vm914 = vmand %vm912, %vm858
      %vm915 = vmand %vm913, %vm859
      %v916 = vsel %vm914, 1, 0
      %v917 = vsel %vm915, 1, 0
      %v918 = vcvt.s32.f32 %v916
      %v919 = vcvt.s32.f32 %v917
      %vm920 = vmand %vm910, %vm580
      %vm921 = vmand %vm911, %vm581
      %vm922 = vmand %vm920, %vm584
      %vm923 = vmand %vm921, %vm585
      %v924 = vsel %vm922, 1, 0
      %v925 = vsel %vm923, 1, 0
      %v926 = vcvt.s32.f32 %v924
      %v927 = vcvt.s32.f32 %v925
      %vm928 = vmand %vm910, %vm876
      %vm929 = vmand %vm911, %vm877
      %vm930 = vmand %vm928, %vm880
      %vm931 = vmand %vm929, %vm881
      %v932 = vsel %vm930, 1, 0
      %v933 = vsel %vm931, 1, 0
      %v934 = vcvt.s32.f32 %v932
      %v935 = vcvt.s32.f32 %v933
      %936 = vrot.lane.b32.xlu0 %v549, 17
      %v937 = vpop.permute.xlu0 %936
      %938 = vrot.lane.b32.xlu0 %v550, 17
      %v939 = vpop.permute.xlu0 %938
      %vm940 = vcmp.lt.s32.totalorder %v552, 17
      %v941 = vsel %vm940, %v937, %v939
      %v942 = vsel %vm940, %v939, %v937
      %v943 = vmul.f32 %v942, %v578
      %v944 = vmul.f32 %v941, %v579
      %945 = vrot.lane.b32.xlu0 %v549, 16
      %v946 = vpop.permute.xlu0 %945
      %947 = vrot.lane.b32.xlu0 %v550, 16
      %v948 = vpop.permute.xlu0 %947
      %vm949 = vcmp.lt.s32.totalorder %v552, 16
      %v950 = vsel %vm949, %v946, %v948
      %v951 = vsel %vm949, %v948, %v946
      %v952 = vmul.f32 %v951, %v590
      %v953 = vmul.f32 %v950, %v591
      %954 = vrot.lane.b32.xlu0 %v549, 15
      %v955 = vpop.permute.xlu0 %954
      %956 = vrot.lane.b32.xlu0 %v550, 15
      %v957 = vpop.permute.xlu0 %956
      %vm958 = vcmp.lt.s32.totalorder %v552, 15
      %v959 = vsel %vm958, %v955, %v957
      %v960 = vsel %vm958, %v957, %v955
      %v961 = vmul.f32 %v960, %v604
      %v962 = vmul.f32 %v959, %v605
      %963 = vrot.lane.b32.xlu0 %v549, 1
      %v964 = vpop.permute.xlu0 %963
      %965 = vrot.lane.b32.xlu0 %v550, 1
      %v966 = vpop.permute.xlu0 %965
      %vm967 = vcmp.lt.s32.totalorder %v552, 1
      %v968 = vsel %vm967, %v964, %v966
      %v969 = vsel %vm967, %v966, %v964
      %v970 = vmul.f32 %v969, %v618
      %v971 = vmul.f32 %v968, %v619
      %972 = vrot.lane.b32.xlu0 %v549, 127
      %v973 = vpop.permute.xlu0 %972
      %974 = vrot.lane.b32.xlu0 %v550, 127
      %v975 = vpop.permute.xlu0 %974
      %vm976 = vcmp.lt.s32.totalorder %v552, 127
      %v977 = vsel %vm976, %v973, %v975
      %v978 = vsel %vm976, %v975, %v973
      %v979 = vmul.f32 %v977, %v626
      %v980 = vmul.f32 %v978, %v627
      %981 = vrot.lane.b32.xlu0 %v549, 113
      %v982 = vpop.permute.xlu0 %981
      %983 = vrot.lane.b32.xlu0 %v550, 113
      %v984 = vpop.permute.xlu0 %983
      %vm985 = vcmp.lt.s32.totalorder %v552, 113
      %v986 = vsel %vm985, %v982, %v984
      %v987 = vsel %vm985, %v984, %v982
      %v988 = vmul.f32 %v986, %v642
      %v989 = vmul.f32 %v987, %v643
      %990 = vrot.lane.b32.xlu0 %v549, 112
      %v991 = vpop.permute.xlu0 %990
      %992 = vrot.lane.b32.xlu0 %v550, 112
      %v993 = vpop.permute.xlu0 %992
      %vm994 = vcmp.lt.s32.totalorder %v552, 112
      %v995 = vsel %vm994, %v991, %v993
      %v996 = vsel %vm994, %v993, %v991
      %v997 = vmul.f32 %v995, %v650
      %v998 = vmul.f32 %v996, %v651
      %999 = vrot.lane.b32.xlu0 %v549, 111
      %v1000 = vpop.permute.xlu0 %999
      %1001 = vrot.lane.b32.xlu0 %v550, 111
      %v1002 = vpop.permute.xlu0 %1001
      %vm1003 = vcmp.lt.s32.totalorder %v552, 111
      %v1004 = vsel %vm1003, %v1000, %v1002
      %v1005 = vsel %vm1003, %v1002, %v1000
      %v1006 = vmul.f32 %v1004, %v658
      %v1007 = vmul.f32 %v1005, %v659
      %v1008 = vld [vmem:[%s1] sm:$0xff]
      %v1009 = vld [vmem:[%s2] sm:$0xff]
      %1011 = vset.pattern.permute.xlu0 0
      %1012 = vperm.xlu0 %1011, %v1009
      %v1013 = vpop.permute.xlu0 %1012
      %vm1015 = vcmask 588800
      %v1017 = vsel %vm1015, %v1008, 0
      %1019 = vmatprep.subr.mxu0 %v944
      %1020 = vmatpush1.msra.mxu0 %v943
      %1021 = vmatprep.subr.mxu0 %v953
      %1022 = vmatpush1.msra.mxu0 %v952
      %1023 = vmatprep.subr.mxu0 %v962
      %1024 = vmatpush1.msra.mxu0 %v961
      %1025 = vmatprep.subr.mxu0 %v971
      %1026 = vmatpush1.msra.mxu0 %v970
      %1027 = vmatprep.subr.mxu0 %v550
      %1028 = vmatpush1.msra.mxu0 %v549
      %1029 = vmatprep.subr.mxu0 %v980
      %1030 = vmatpush1.msra.mxu0 %v979
      %1031 = vmatprep.subr.mxu0 %v989
      %1032 = vmatpush1.msra.mxu0 %v988
      %1033 = vmatprep.subr.mxu0 %v998
      %1034 = vmatpush1.msra.mxu0 %v997
      %1035 = vmatprep.subr.mxu0 %v1007
      %1036 = vmatpush1.msra.mxu0 %v1006
      %1037 = vmatprep.subr.mxu0 0.0
      %1038 = vmatpush1.msra.mxu0 0.0
      %1039 = vmatprep.subr.mxu0 0.0
      %1040 = vmatpush1.msra.mxu0 0.0
      %1041 = vmatprep.subr.mxu0 0.0
      %1042 = vmatpush1.msra.mxu0 0.0
      %1043 = vmatprep.subr.mxu0 0.0
      %1044 = vmatpush1.msra.mxu0 0.0
      %1045 = vmatprep.subr.mxu0 0.0
      %1046 = vmatpush1.msra.mxu0 0.0
      %1047 = vmatprep.subr.mxu0 0.0
      %1048 = vmatpush1.msra.mxu0 0.0
      %1049 = vmatprep.subr.mxu0 0.0
      %1050 = vmatpush1.msra.mxu0 0.0
      %1051 = vmatprep.subr.mxu0 0.0
      %1052 = vmatpush1.msra.mxu0 0.0
      %1053 = vmatprep.subr.mxu0 0.0
      %1054 = vmatpush1.msra.mxu0 0.0
      %1055 = vmatprep.subr.mxu0 0.0
      %1056 = vmatpush1.msra.mxu0 0.0
      %1057 = vmatprep.subr.mxu0 0.0
      %1058 = vmatpush1.msra.mxu0 0.0
      %1059 = vmatprep.subr.mxu0 0.0
      %1060 = vmatpush1.msra.mxu0 0.0
      %1061 = vmatprep.subr.mxu0 0.0
      %1062 = vmatpush1.msra.mxu0 0.0
      %1063 = vmatprep.subr.mxu0 0.0
      %1064 = vmatpush1.msra.mxu0 0.0
      %1065 = vmatprep.subr.mxu0 0.0
      %1066 = vmatpush1.msra.mxu0 0.0
      %1067 = vmatprep.subr.mxu0 0.0
      %1068 = vmatpush1.msra.mxu0 0.0
      %1069 = vmatprep.subr.mxu0 0.0
      %1070 = vmatpush1.msra.mxu0 0.0
      %1071 = vmatprep.subr.mxu0 0.0
      %1072 = vmatpush1.msra.mxu0 0.0
      %1073 = vmatprep.subr.mxu0 0.0
      %1074 = vmatpush1.msra.mxu0 0.0
      %1075 = vmatprep.subr.mxu0 0.0
      %1076 = vmatpush1.msra.mxu0 0.0
      %1077 = vmatprep.subr.mxu0 0.0
      %1078 = vmatpush1.msra.mxu0 0.0
      %1079 = vmatprep.subr.mxu0 0.0
      %1080 = vmatpush1.msra.mxu0 0.0
      %1081 = vmatprep.subr.mxu0 0.0
      %1082 = vmatpush1.msra.mxu0 0.0
      %1083 = vmatprep.mubr.f32.mxu0 0.0
      %1084 = vmatmul.mubr.f32.gmra.mrb[0].mxu0 %v1017
      %v1085 = vpop.f32.mrb[0].mxu0
      %v1086 = vadd.f32 %v1013, %v1085
      %v1087 = vpop.f32.mrb[0].mxu0
      %v1088 = vadd.f32 %v1013, %v1087
      %1089 = vdwg.mxu0
      %v1090 = vmax.f32 %v1086, 0.0
      %v1091 = vmax.f32 %v1088, 0.0
      %1092 = vrot.lane.b32.xlu0 %v1090, 17
      %v1093 = vpop.permute.xlu0 %1092
      %1094 = vrot.lane.b32.xlu0 %v1091, 17
      %v1095 = vpop.permute.xlu0 %1094
      %v1096 = vsel %vm940, %v1093, %v1095
      %v1097 = vsel %vm940, %v1095, %v1093
      %v1098 = vmul.f32 %v1097, %v578
      %v1099 = vmul.f32 %v1096, %v579
      %1100 = vrot.lane.b32.xlu0 %v1090, 16
      %v1101 = vpop.permute.xlu0 %1100
      %1102 = vrot.lane.b32.xlu0 %v1091, 16
      %v1103 = vpop.permute.xlu0 %1102
      %v1104 = vsel %vm949, %v1101, %v1103
      %v1105 = vsel %vm949, %v1103, %v1101
      %v1106 = vmul.f32 %v1105, %v590
      %v1107 = vmul.f32 %v1104, %v591
      %1108 = vrot.lane.b32.xlu0 %v1090, 15
      %v1109 = vpop.permute.xlu0 %1108
      %1110 = vrot.lane.b32.xlu0 %v1091, 15
      %v1111 = vpop.permute.xlu0 %1110
      %v1112 = vsel %vm958, %v1109, %v1111
      %v1113 = vsel %vm958, %v1111, %v1109
      %v1114 = vmul.f32 %v1113, %v604
      %v1115 = vmul.f32 %v1112, %v605
      %1116 = vrot.lane.b32.xlu0 %v1090, 1
      %v1117 = vpop.permute.xlu0 %1116
      %1118 = vrot.lane.b32.xlu0 %v1091, 1
      %v1119 = vpop.permute.xlu0 %1118
      %v1120 = vsel %vm967, %v1117, %v1119
      %v1121 = vsel %vm967, %v1119, %v1117
      %v1122 = vmul.f32 %v1121, %v618
      %v1123 = vmul.f32 %v1120, %v619
      %1124 = vrot.lane.b32.xlu0 %v1090, 127
      %v1125 = vpop.permute.xlu0 %1124
      %1126 = vrot.lane.b32.xlu0 %v1091, 127
      %v1127 = vpop.permute.xlu0 %1126
      %v1128 = vsel %vm976, %v1125, %v1127
      %v1129 = vsel %vm976, %v1127, %v1125
      %v1130 = vmul.f32 %v1128, %v626
      %v1131 = vmul.f32 %v1129, %v627
      %1132 = vrot.lane.b32.xlu0 %v1090, 113
      %v1133 = vpop.permute.xlu0 %1132
      %1134 = vrot.lane.b32.xlu0 %v1091, 113
      %v1135 = vpop.permute.xlu0 %1134
      %v1136 = vsel %vm985, %v1133, %v1135
      %v1137 = vsel %vm985, %v1135, %v1133
      %v1138 = vmul.f32 %v1136, %v642
      %v1139 = vmul.f32 %v1137, %v643
      %1140 = vrot.lane.b32.xlu0 %v1090, 112
      %v1141 = vpop.permute.xlu0 %1140
      %1142 = vrot.lane.b32.xlu0 %v1091, 112
      %v1143 = vpop.permute.xlu0 %1142
      %v1144 = vsel %vm994, %v1141, %v1143
      %v1145 = vsel %vm994, %v1143, %v1141
      %v1146 = vmul.f32 %v1144, %v650
      %v1147 = vmul.f32 %v1145, %v651
      %1148 = vrot.lane.b32.xlu0 %v1090, 111
      %v1149 = vpop.permute.xlu0 %1148
      %1150 = vrot.lane.b32.xlu0 %v1091, 111
      %v1151 = vpop.permute.xlu0 %1150
      %v1152 = vsel %vm1003, %v1149, %v1151
      %v1153 = vsel %vm1003, %v1151, %v1149
      %v1154 = vmul.f32 %v1152, %v658
      %v1155 = vmul.f32 %v1153, %v659
      %v1156 = vld [vmem:[%s3] sm:$0xff]
      %v1157 = vld [vmem:[%s4] sm:$0xff]
      %1159 = vset.pattern.permute.xlu0 0
      %1160 = vperm.xlu0 %1159, %v1157
      %v1161 = vpop.permute.xlu0 %1160
      %v1164 = vsel %vm1015, %v1156, 0
      %1166 = vmatprep.subr.mxu0 %v1099
      %1167 = vmatpush1.msra.mxu0 %v1098
      %1168 = vmatprep.subr.mxu0 %v1107
      %1169 = vmatpush1.msra.mxu0 %v1106
      %1170 = vmatprep.subr.mxu0 %v1115
      %1171 = vmatpush1.msra.mxu0 %v1114
      %1172 = vmatprep.subr.mxu0 %v1123
      %1173 = vmatpush1.msra.mxu0 %v1122
      %1174 = vmatprep.subr.mxu0 %v1091
      %1175 = vmatpush1.msra.mxu0 %v1090
      %1176 = vmatprep.subr.mxu0 %v1131
      %1177 = vmatpush1.msra.mxu0 %v1130
      %1178 = vmatprep.subr.mxu0 %v1139
      %1179 = vmatpush1.msra.mxu0 %v1138
      %1180 = vmatprep.subr.mxu0 %v1147
      %1181 = vmatpush1.msra.mxu0 %v1146
      %1182 = vmatprep.subr.mxu0 %v1155
      %1183 = vmatpush1.msra.mxu0 %v1154
      %1184 = vmatprep.subr.mxu0 0.0
      %1185 = vmatpush1.msra.mxu0 0.0
      %1186 = vmatprep.subr.mxu0 0.0
      %1187 = vmatpush1.msra.mxu0 0.0
      %1188 = vmatprep.subr.mxu0 0.0
      %1189 = vmatpush1.msra.mxu0 0.0
      %1190 = vmatprep.subr.mxu0 0.0
      %1191 = vmatpush1.msra.mxu0 0.0
      %1192 = vmatprep.subr.mxu0 0.0
      %1193 = vmatpush1.msra.mxu0 0.0
      %1194 = vmatprep.subr.mxu0 0.0
      %1195 = vmatpush1.msra.mxu0 0.0
      %1196 = vmatprep.subr.mxu0 0.0
      %1197 = vmatpush1.msra.mxu0 0.0
      %1198 = vmatprep.subr.mxu0 0.0
      %1199 = vmatpush1.msra.mxu0 0.0
      %1200 = vmatprep.subr.mxu0 0.0
      %1201 = vmatpush1.msra.mxu0 0.0
      %1202 = vmatprep.subr.mxu0 0.0
      %1203 = vmatpush1.msra.mxu0 0.0
      %1204 = vmatprep.subr.mxu0 0.0
      %1205 = vmatpush1.msra.mxu0 0.0
      %1206 = vmatprep.subr.mxu0 0.0
      %1207 = vmatpush1.msra.mxu0 0.0
      %1208 = vmatprep.subr.mxu0 0.0
      %1209 = vmatpush1.msra.mxu0 0.0
      %1210 = vmatprep.subr.mxu0 0.0
      %1211 = vmatpush1.msra.mxu0 0.0
      %1212 = vmatprep.subr.mxu0 0.0
      %1213 = vmatpush1.msra.mxu0 0.0
      %1214 = vmatprep.subr.mxu0 0.0
      %1215 = vmatpush1.msra.mxu0 0.0
      %1216 = vmatprep.subr.mxu0 0.0
      %1217 = vmatpush1.msra.mxu0 0.0
      %1218 = vmatprep.subr.mxu0 0.0
      %1219 = vmatpush1.msra.mxu0 0.0
      %1220 = vmatprep.subr.mxu0 0.0
      %1221 = vmatpush1.msra.mxu0 0.0
      %1222 = vmatprep.subr.mxu0 0.0
      %1223 = vmatpush1.msra.mxu0 0.0
      %1224 = vmatprep.subr.mxu0 0.0
      %1225 = vmatpush1.msra.mxu0 0.0
      %1226 = vmatprep.subr.mxu0 0.0
      %1227 = vmatpush1.msra.mxu0 0.0
      %1228 = vmatprep.subr.mxu0 0.0
      %1229 = vmatpush1.msra.mxu0 0.0
      %1230 = vmatprep.mubr.f32.mxu0 0.0
      %1231 = vmatmul.mubr.f32.gmra.mrb[0].mxu0 %v1164
      %v1232 = vpop.f32.mrb[0].mxu0
      %v1233 = vadd.f32 %v1161, %v1232
      %v1234 = vpop.f32.mrb[0].mxu0
      %v1235 = vadd.f32 %v1161, %v1234
      %1236 = vdwg.mxu0
      %v1237 = vmax.f32 %v1233, 0.0
      %v1238 = vmax.f32 %v1235, 0.0
      %1239 = vrot.lane.b32.xlu0 %v1237, 34
      %v1240 = vpop.permute.xlu0 %1239
      %1241 = vrot.lane.b32.xlu0 %v1238, 34
      %v1242 = vpop.permute.xlu0 %1241
      %vm1243 = vcmp.lt.s32.totalorder %v552, 34
      %v1244 = vsel %vm1243, %v1240, %v1242
      %v1245 = vsel %vm1243, %v1242, %v1240
      %v1246 = vmul.f32 %v1245, %v680
      %v1247 = vmul.f32 %v1244, %v681
      %1248 = vrot.lane.b32.xlu0 %v1237, 32
      %v1249 = vpop.permute.xlu0 %1248
      %1250 = vrot.lane.b32.xlu0 %v1238, 32
      %v1251 = vpop.permute.xlu0 %1250
      %vm1252 = vcmp.lt.s32.totalorder %v552, 32
      %v1253 = vsel %vm1252, %v1249, %v1251
      %v1254 = vsel %vm1252, %v1251, %v1249
      %v1255 = vmul.f32 %v1254, %v688
      %v1256 = vmul.f32 %v1253, %v689
      %1257 = vrot.lane.b32.xlu0 %v1237, 30
      %v1258 = vpop.permute.xlu0 %1257
      %1259 = vrot.lane.b32.xlu0 %v1238, 30
      %v1260 = vpop.permute.xlu0 %1259
      %vm1261 = vcmp.lt.s32.totalorder %v552, 30
      %v1262 = vsel %vm1261, %v1258, %v1260
      %v1263 = vsel %vm1261, %v1260, %v1258
      %v1264 = vmul.f32 %v1263, %v702
      %v1265 = vmul.f32 %v1262, %v703
      %1266 = vrot.lane.b32.xlu0 %v1237, 2
      %v1267 = vpop.permute.xlu0 %1266
      %1268 = vrot.lane.b32.xlu0 %v1238, 2
      %v1269 = vpop.permute.xlu0 %1268
      %vm1270 = vcmp.lt.s32.totalorder %v552, 2
      %v1271 = vsel %vm1270, %v1267, %v1269
      %v1272 = vsel %vm1270, %v1269, %v1267
      %v1273 = vmul.f32 %v1272, %v710
      %v1274 = vmul.f32 %v1271, %v711
      %1275 = vrot.lane.b32.xlu0 %v1237, 126
      %v1276 = vpop.permute.xlu0 %1275
      %1277 = vrot.lane.b32.xlu0 %v1238, 126
      %v1278 = vpop.permute.xlu0 %1277
      %vm1279 = vcmp.lt.s32.totalorder %v552, 126
      %v1280 = vsel %vm1279, %v1276, %v1278
      %v1281 = vsel %vm1279, %v1278, %v1276
      %v1282 = vmul.f32 %v1280, %v718
      %v1283 = vmul.f32 %v1281, %v719
      %1284 = vrot.lane.b32.xlu0 %v1237, 98
      %v1285 = vpop.permute.xlu0 %1284
      %1286 = vrot.lane.b32.xlu0 %v1238, 98
      %v1287 = vpop.permute.xlu0 %1286
      %vm1288 = vcmp.lt.s32.totalorder %v552, 98
      %v1289 = vsel %vm1288, %v1285, %v1287
      %v1290 = vsel %vm1288, %v1287, %v1285
      %v1291 = vmul.f32 %v1289, %v734
      %v1292 = vmul.f32 %v1290, %v735
      %1293 = vrot.lane.b32.xlu0 %v1237, 96
      %v1294 = vpop.permute.xlu0 %1293
      %1295 = vrot.lane.b32.xlu0 %v1238, 96
      %v1296 = vpop.permute.xlu0 %1295
      %vm1297 = vcmp.lt.s32.totalorder %v552, 96
      %v1298 = vsel %vm1297, %v1294, %v1296
      %v1299 = vsel %vm1297, %v1296, %v1294
      %v1300 = vmul.f32 %v1298, %v742
      %v1301 = vmul.f32 %v1299, %v743
      %1302 = vrot.lane.b32.xlu0 %v1237, 94
      %v1303 = vpop.permute.xlu0 %1302
      %1304 = vrot.lane.b32.xlu0 %v1238, 94
      %v1305 = vpop.permute.xlu0 %1304
      %vm1306 = vcmp.lt.s32.totalorder %v552, 94
      %v1307 = vsel %vm1306, %v1303, %v1305
      %v1308 = vsel %vm1306, %v1305, %v1303
      %v1309 = vmul.f32 %v1307, %v750
      %v1310 = vmul.f32 %v1308, %v751
      %v1311 = vld [vmem:[%s5] sm:$0xff]
      %v1312 = vld [vmem:[%s6] sm:$0xff]
      %1314 = vset.pattern.permute.xlu0 0
      %1315 = vperm.xlu0 %1314, %v1312
      %v1316 = vpop.permute.xlu0 %1315
      %v1319 = vsel %vm1015, %v1311, 0
      %1321 = vmatprep.subr.mxu0 %v1247
      %1322 = vmatpush1.msra.mxu0 %v1246
      %1323 = vmatprep.subr.mxu0 %v1256
      %1324 = vmatpush1.msra.mxu0 %v1255
      %1325 = vmatprep.subr.mxu0 %v1265
      %1326 = vmatpush1.msra.mxu0 %v1264
      %1327 = vmatprep.subr.mxu0 %v1274
      %1328 = vmatpush1.msra.mxu0 %v1273
      %1329 = vmatprep.subr.mxu0 %v1238
      %1330 = vmatpush1.msra.mxu0 %v1237
      %1331 = vmatprep.subr.mxu0 %v1283
      %1332 = vmatpush1.msra.mxu0 %v1282
      %1333 = vmatprep.subr.mxu0 %v1292
      %1334 = vmatpush1.msra.mxu0 %v1291
      %1335 = vmatprep.subr.mxu0 %v1301
      %1336 = vmatpush1.msra.mxu0 %v1300
      %1337 = vmatprep.subr.mxu0 %v1310
      %1338 = vmatpush1.msra.mxu0 %v1309
      %1339 = vmatprep.subr.mxu0 0.0
      %1340 = vmatpush1.msra.mxu0 0.0
      %1341 = vmatprep.subr.mxu0 0.0
      %1342 = vmatpush1.msra.mxu0 0.0
      %1343 = vmatprep.subr.mxu0 0.0
      %1344 = vmatpush1.msra.mxu0 0.0
      %1345 = vmatprep.subr.mxu0 0.0
      %1346 = vmatpush1.msra.mxu0 0.0
      %1347 = vmatprep.subr.mxu0 0.0
      %1348 = vmatpush1.msra.mxu0 0.0
      %1349 = vmatprep.subr.mxu0 0.0
      %1350 = vmatpush1.msra.mxu0 0.0
      %1351 = vmatprep.subr.mxu0 0.0
      %1352 = vmatpush1.msra.mxu0 0.0
      %1353 = vmatprep.subr.mxu0 0.0
      %1354 = vmatpush1.msra.mxu0 0.0
      %1355 = vmatprep.subr.mxu0 0.0
      %1356 = vmatpush1.msra.mxu0 0.0
      %1357 = vmatprep.subr.mxu0 0.0
      %1358 = vmatpush1.msra.mxu0 0.0
      %1359 = vmatprep.subr.mxu0 0.0
      %1360 = vmatpush1.msra.mxu0 0.0
      %1361 = vmatprep.subr.mxu0 0.0
      %1362 = vmatpush1.msra.mxu0 0.0
      %1363 = vmatprep.subr.mxu0 0.0
      %1364 = vmatpush1.msra.mxu0 0.0
      %1365 = vmatprep.subr.mxu0 0.0
      %1366 = vmatpush1.msra.mxu0 0.0
      %1367 = vmatprep.subr.mxu0 0.0
      %1368 = vmatpush1.msra.mxu0 0.0
      %1369 = vmatprep.subr.mxu0 0.0
      %1370 = vmatpush1.msra.mxu0 0.0
      %1371 = vmatprep.subr.mxu0 0.0
      %1372 = vmatpush1.msra.mxu0 0.0
      %1373 = vmatprep.subr.mxu0 0.0
      %1374 = vmatpush1.msra.mxu0 0.0
      %1375 = vmatprep.subr.mxu0 0.0
      %1376 = vmatpush1.msra.mxu0 0.0
      %1377 = vmatprep.subr.mxu0 0.0
      %1378 = vmatpush1.msra.mxu0 0.0
      %1379 = vmatprep.subr.mxu0 0.0
      %1380 = vmatpush1.msra.mxu0 0.0
      %1381 = vmatprep.subr.mxu0 0.0
      %1382 = vmatpush1.msra.mxu0 0.0
      %1383 = vmatprep.subr.mxu0 0.0
      %1384 = vmatpush1.msra.mxu0 0.0
      %1385 = vmatprep.mubr.f32.mxu0 0.0
      %1386 = vmatmul.mubr.f32.gmra.mrb[0].mxu0 %v1319
      %v1387 = vpop.f32.mrb[0].mxu0
      %v1388 = vadd.f32 %v1316, %v1387
      %v1389 = vpop.f32.mrb[0].mxu0
      %v1390 = vadd.f32 %v1316, %v1389
      %1391 = vdwg.mxu0
      %v1392 = vmax.f32 %v1388, 0.0
      %v1393 = vmax.f32 %v1390, 0.0
      %1394 = vrot.lane.b32.xlu0 %v1392, 68
      %v1395 = vpop.permute.xlu0 %1394
      %1396 = vrot.lane.b32.xlu0 %v1393, 68
      %v1397 = vpop.permute.xlu0 %1396
      %vm1398 = vcmp.lt.s32.totalorder %v552, 68
      %v1399 = vsel %vm1398, %v1395, %v1397
      %v1400 = vsel %vm1398, %v1397, %v1395
      %v1401 = vmul.f32 %v1400, %v772
      %v1402 = vmul.f32 %v1399, %v773
      %1403 = vrot.lane.b32.xlu0 %v1392, 64
      %v1404 = vpop.permute.xlu0 %1403
      %1405 = vrot.lane.b32.xlu0 %v1393, 64
      %v1406 = vpop.permute.xlu0 %1405
      %vm1407 = vcmp.lt.s32.totalorder %v552, 64
      %v1408 = vsel %vm1407, %v1404, %v1406
      %v1409 = vsel %vm1407, %v1406, %v1404
      %v1410 = vmul.f32 %v1409, %v780
      %v1411 = vmul.f32 %v1408, %v781
      %1412 = vrot.lane.b32.xlu0 %v1392, 60
      %v1413 = vpop.permute.xlu0 %1412
      %1414 = vrot.lane.b32.xlu0 %v1393, 60
      %v1415 = vpop.permute.xlu0 %1414
      %vm1416 = vcmp.lt.s32.totalorder %v552, 60
      %v1417 = vsel %vm1416, %v1413, %v1415
      %v1418 = vsel %vm1416, %v1415, %v1413
      %v1419 = vmul.f32 %v1418, %v794
      %v1420 = vmul.f32 %v1417, %v795
      %1421 = vrot.lane.b32.xlu0 %v1392, 4
      %v1422 = vpop.permute.xlu0 %1421
      %1423 = vrot.lane.b32.xlu0 %v1393, 4
      %v1424 = vpop.permute.xlu0 %1423
      %vm1425 = vcmp.lt.s32.totalorder %v552, 4
      %v1426 = vsel %vm1425, %v1422, %v1424
      %v1427 = vsel %vm1425, %v1424, %v1422
      %v1428 = vmul.f32 %v1427, %v802
      %v1429 = vmul.f32 %v1426, %v803
      %1430 = vrot.lane.b32.xlu0 %v1392, 124
      %v1431 = vpop.permute.xlu0 %1430
      %1432 = vrot.lane.b32.xlu0 %v1393, 124
      %v1433 = vpop.permute.xlu0 %1432
      %vm1434 = vcmp.lt.s32.totalorder %v552, 124
      %v1435 = vsel %vm1434, %v1431, %v1433
      %v1436 = vsel %vm1434, %v1433, %v1431
      %v1437 = vmul.f32 %v1435, %v810
      %v1438 = vmul.f32 %v1436, %v811
      %v1439 = vmul.f32 %v1399, %v826
      %v1440 = vmul.f32 %v1400, %v827
      %v1441 = vmul.f32 %v1408, %v834
      %v1442 = vmul.f32 %v1409, %v835
      %v1443 = vmul.f32 %v1417, %v842
      %v1444 = vmul.f32 %v1418, %v843
      %v1445 = vld [vmem:[%s7] sm:$0xff]
      %v1446 = vld [vmem:[%s8] sm:$0xff]
      %1448 = vset.pattern.permute.xlu0 0
      %1449 = vperm.xlu0 %1448, %v1446
      %v1450 = vpop.permute.xlu0 %1449
      %v1453 = vsel %vm1015, %v1445, 0
      %1455 = vmatprep.subr.mxu0 %v1402
      %1456 = vmatpush1.msra.mxu0 %v1401
      %1457 = vmatprep.subr.mxu0 %v1411
      %1458 = vmatpush1.msra.mxu0 %v1410
      %1459 = vmatprep.subr.mxu0 %v1420
      %1460 = vmatpush1.msra.mxu0 %v1419
      %1461 = vmatprep.subr.mxu0 %v1429
      %1462 = vmatpush1.msra.mxu0 %v1428
      %1463 = vmatprep.subr.mxu0 %v1393
      %1464 = vmatpush1.msra.mxu0 %v1392
      %1465 = vmatprep.subr.mxu0 %v1438
      %1466 = vmatpush1.msra.mxu0 %v1437
      %1467 = vmatprep.subr.mxu0 %v1440
      %1468 = vmatpush1.msra.mxu0 %v1439
      %1469 = vmatprep.subr.mxu0 %v1442
      %1470 = vmatpush1.msra.mxu0 %v1441
      %1471 = vmatprep.subr.mxu0 %v1444
      %1472 = vmatpush1.msra.mxu0 %v1443
      %1473 = vmatprep.subr.mxu0 0.0
      %1474 = vmatpush1.msra.mxu0 0.0
      %1475 = vmatprep.subr.mxu0 0.0
      %1476 = vmatpush1.msra.mxu0 0.0
      %1477 = vmatprep.subr.mxu0 0.0
      %1478 = vmatpush1.msra.mxu0 0.0
      %1479 = vmatprep.subr.mxu0 0.0
      %1480 = vmatpush1.msra.mxu0 0.0
      %1481 = vmatprep.subr.mxu0 0.0
      %1482 = vmatpush1.msra.mxu0 0.0
      %1483 = vmatprep.subr.mxu0 0.0
      %1484 = vmatpush1.msra.mxu0 0.0
      %1485 = vmatprep.subr.mxu0 0.0
      %1486 = vmatpush1.msra.mxu0 0.0
      %1487 = vmatprep.subr.mxu0 0.0
      %1488 = vmatpush1.msra.mxu0 0.0
      %1489 = vmatprep.subr.mxu0 0.0
      %1490 = vmatpush1.msra.mxu0 0.0
      %1491 = vmatprep.subr.mxu0 0.0
      %1492 = vmatpush1.msra.mxu0 0.0
      %1493 = vmatprep.subr.mxu0 0.0
      %1494 = vmatpush1.msra.mxu0 0.0
      %1495 = vmatprep.subr.mxu0 0.0
      %1496 = vmatpush1.msra.mxu0 0.0
      %1497 = vmatprep.subr.mxu0 0.0
      %1498 = vmatpush1.msra.mxu0 0.0
      %1499 = vmatprep.subr.mxu0 0.0
      %1500 = vmatpush1.msra.mxu0 0.0
      %1501 = vmatprep.subr.mxu0 0.0
      %1502 = vmatpush1.msra.mxu0 0.0
      %1503 = vmatprep.subr.mxu0 0.0
      %1504 = vmatpush1.msra.mxu0 0.0
      %1505 = vmatprep.subr.mxu0 0.0
      %1506 = vmatpush1.msra.mxu0 0.0
      %1507 = vmatprep.subr.mxu0 0.0
      %1508 = vmatpush1.msra.mxu0 0.0
      %1509 = vmatprep.subr.mxu0 0.0
      %1510 = vmatpush1.msra.mxu0 0.0
      %1511 = vmatprep.subr.mxu0 0.0
      %1512 = vmatpush1.msra.mxu0 0.0
      %1513 = vmatprep.subr.mxu0 0.0
      %1514 = vmatpush1.msra.mxu0 0.0
      %1515 = vmatprep.subr.mxu0 0.0
      %1516 = vmatpush1.msra.mxu0 0.0
      %1517 = vmatprep.subr.mxu0 0.0
      %1518 = vmatpush1.msra.mxu0 0.0
      %1519 = vmatprep.mubr.f32.mxu0 0.0
      %1520 = vmatmul.mubr.f32.gmra.mrb[0].mxu0 %v1453
      %v1521 = vpop.f32.mrb[0].mxu0
      %v1522 = vadd.f32 %v1450, %v1521
      %v1523 = vpop.f32.mrb[0].mxu0
      %v1524 = vadd.f32 %v1450, %v1523
      %1525 = vdwg.mxu0
      %v1526 = vmax.f32 %v1522, 0.0
      %v1527 = vmax.f32 %v1524, 0.0
      %1528 = vrot.lane.b32.xlu0 %v1526, 8
      %v1529 = vpop.permute.xlu0 %1528
      %1530 = vrot.lane.b32.xlu0 %v1527, 8
      %v1531 = vpop.permute.xlu0 %1530
      %vm1532 = vcmp.lt.s32.totalorder %v552, 8
      %v1533 = vsel %vm1532, %v1529, %v1531
      %v1534 = vsel %vm1532, %v1531, %v1529
      %v1535 = vmul.f32 %v1533, %v864
      %v1536 = vmul.f32 %v1534, %v865
      %v1537 = vmul.f32 %v1527, %v872
      %v1538 = vmul.f32 %v1526, %v873
      %1539 = vrot.lane.b32.xlu0 %v1526, 120
      %v1540 = vpop.permute.xlu0 %1539
      %1541 = vrot.lane.b32.xlu0 %v1527, 120
      %v1542 = vpop.permute.xlu0 %1541
      %vm1543 = vcmp.lt.s32.totalorder %v552, 120
      %v1544 = vsel %vm1543, %v1540, %v1542
      %v1545 = vsel %vm1543, %v1542, %v1540
      %v1546 = vmul.f32 %v1545, %v886
      %v1547 = vmul.f32 %v1544, %v887
      %v1548 = vmul.f32 %v1534, %v894
      %v1549 = vmul.f32 %v1533, %v895
      %v1550 = vmul.f32 %v1544, %v902
      %v1551 = vmul.f32 %v1545, %v903
      %v1552 = vmul.f32 %v1533, %v918
      %v1553 = vmul.f32 %v1534, %v919
      %v1554 = vmul.f32 %v1527, %v926
      %v1555 = vmul.f32 %v1526, %v927
      %v1556 = vmul.f32 %v1545, %v934
      %v1557 = vmul.f32 %v1544, %v935
      %v1558 = vld [vmem:[%s9] sm:$0xff]
      %v1559 = vld [vmem:[%s10] sm:$0xff]
      %1561 = vset.pattern.permute.xlu0 0
      %1562 = vperm.xlu0 %1561, %v1559
      %v1563 = vpop.permute.xlu0 %1562
      %v1566 = vsel %vm1015, %v1558, 0
      %1568 = vmatprep.subr.mxu0 %v1536
      %1569 = vmatpush1.msra.mxu0 %v1535
      %1570 = vmatprep.subr.mxu0 %v1538
      %1571 = vmatpush1.msra.mxu0 %v1537
      %1572 = vmatprep.subr.mxu0 %v1547
      %1573 = vmatpush1.msra.mxu0 %v1546
      %1574 = vmatprep.subr.mxu0 %v1549
      %1575 = vmatpush1.msra.mxu0 %v1548
      %1576 = vmatprep.subr.mxu0 %v1527
      %1577 = vmatpush1.msra.mxu0 %v1526
      %1578 = vmatprep.subr.mxu0 %v1551
      %1579 = vmatpush1.msra.mxu0 %v1550
      %1580 = vmatprep.subr.mxu0 %v1553
      %1581 = vmatpush1.msra.mxu0 %v1552
      %1582 = vmatprep.subr.mxu0 %v1555
      %1583 = vmatpush1.msra.mxu0 %v1554
      %1584 = vmatprep.subr.mxu0 %v1557
      %1585 = vmatpush1.msra.mxu0 %v1556
      %1586 = vmatprep.subr.mxu0 0.0
      %1587 = vmatpush1.msra.mxu0 0.0
      %1588 = vmatprep.subr.mxu0 0.0
      %1589 = vmatpush1.msra.mxu0 0.0
      %1590 = vmatprep.subr.mxu0 0.0
      %1591 = vmatpush1.msra.mxu0 0.0
      %1592 = vmatprep.subr.mxu0 0.0
      %1593 = vmatpush1.msra.mxu0 0.0
      %1594 = vmatprep.subr.mxu0 0.0
      %1595 = vmatpush1.msra.mxu0 0.0
      %1596 = vmatprep.subr.mxu0 0.0
      %1597 = vmatpush1.msra.mxu0 0.0
      %1598 = vmatprep.subr.mxu0 0.0
      %1599 = vmatpush1.msra.mxu0 0.0
      %1600 = vmatprep.subr.mxu0 0.0
      %1601 = vmatpush1.msra.mxu0 0.0
      %1602 = vmatprep.subr.mxu0 0.0
      %1603 = vmatpush1.msra.mxu0 0.0
      %1604 = vmatprep.subr.mxu0 0.0
      %1605 = vmatpush1.msra.mxu0 0.0
      %1606 = vmatprep.subr.mxu0 0.0
      %1607 = vmatpush1.msra.mxu0 0.0
      %1608 = vmatprep.subr.mxu0 0.0
      %1609 = vmatpush1.msra.mxu0 0.0
      %1610 = vmatprep.subr.mxu0 0.0
      %1611 = vmatpush1.msra.mxu0 0.0
      %1612 = vmatprep.subr.mxu0 0.0
      %1613 = vmatpush1.msra.mxu0 0.0
      %1614 = vmatprep.subr.mxu0 0.0
      %1615 = vmatpush1.msra.mxu0 0.0
      %1616 = vmatprep.subr.mxu0 0.0
      %1617 = vmatpush1.msra.mxu0 0.0
      %1618 = vmatprep.subr.mxu0 0.0
      %1619 = vmatpush1.msra.mxu0 0.0
      %1620 = vmatprep.subr.mxu0 0.0
      %1621 = vmatpush1.msra.mxu0 0.0
      %1622 = vmatprep.subr.mxu0 0.0
      %1623 = vmatpush1.msra.mxu0 0.0
      %1624 = vmatprep.subr.mxu0 0.0
      %1625 = vmatpush1.msra.mxu0 0.0
      %1626 = vmatprep.subr.mxu0 0.0
      %1627 = vmatpush1.msra.mxu0 0.0
      %1628 = vmatprep.subr.mxu0 0.0
      %1629 = vmatpush1.msra.mxu0 0.0
      %1630 = vmatprep.subr.mxu0 0.0
      %1631 = vmatpush1.msra.mxu0 0.0
      %1632 = vmatprep.mubr.f32.mxu0 0.0
      %1633 = vmatmul.mubr.f32.gmra.mrb[0].mxu0 %v1566
      %v1634 = vpop.f32.mrb[0].mxu0
      %v1635 = vadd.f32 %v1563, %v1634
      %v1636 = vpop.f32.mrb[0].mxu0
      %v1637 = vadd.f32 %v1563, %v1636
      %1638 = vdwg.mxu0
      %v1639 = vmax.f32 %v1635, 0.0
      %v1640 = vmax.f32 %v1637, 0.0
      %1641 = vrot.lane.b32.xlu0 %v1639, 68
      %v1642 = vpop.permute.xlu0 %1641
      %1643 = vrot.lane.b32.xlu0 %v1526, 68
      %v1644 = vpop.permute.xlu0 %1643
      %1645 = vrot.lane.b32.xlu0 %v1640, 68
      %v1646 = vpop.permute.xlu0 %1645
      %1647 = vrot.lane.b32.xlu0 %v1527, 68
      %v1648 = vpop.permute.xlu0 %1647
      %v1649 = vsel %vm1398, %v1642, %v1646
      %v1650 = vsel %vm1398, %v1644, %v1648
      %v1651 = vsel %vm1398, %v1646, %v1642
      %v1652 = vsel %vm1398, %v1648, %v1644
      %v1653 = vmul.f32 %v1651, %v772
      %v1654 = vmul.f32 %v1649, %v773
      %v1655 = vmul.f32 %v1652, %v772
      %v1656 = vmul.f32 %v1650, %v773
      %1657 = vrot.lane.b32.xlu0 %v1639, 64
      %v1658 = vpop.permute.xlu0 %1657
      %1659 = vrot.lane.b32.xlu0 %v1526, 64
      %v1660 = vpop.permute.xlu0 %1659
      %1661 = vrot.lane.b32.xlu0 %v1640, 64
      %v1662 = vpop.permute.xlu0 %1661
      %1663 = vrot.lane.b32.xlu0 %v1527, 64
      %v1664 = vpop.permute.xlu0 %1663
      %v1665 = vsel %vm1407, %v1658, %v1662
      %v1666 = vsel %vm1407, %v1660, %v1664
      %v1667 = vsel %vm1407, %v1662, %v1658
      %v1668 = vsel %vm1407, %v1664, %v1660
      %v1669 = vmul.f32 %v1667, %v780
      %v1670 = vmul.f32 %v1665, %v781
      %v1671 = vmul.f32 %v1668, %v780
      %v1672 = vmul.f32 %v1666, %v781
      %1673 = vrot.lane.b32.xlu0 %v1639, 60
      %v1674 = vpop.permute.xlu0 %1673
      %1675 = vrot.lane.b32.xlu0 %v1526, 60
      %v1676 = vpop.permute.xlu0 %1675
      %1677 = vrot.lane.b32.xlu0 %v1640, 60
      %v1678 = vpop.permute.xlu0 %1677
      %1679 = vrot.lane.b32.xlu0 %v1527, 60
      %v1680 = vpop.permute.xlu0 %1679
      %v1681 = vsel %vm1416, %v1674, %v1678
      %v1682 = vsel %vm1416, %v1676, %v1680
      %v1683 = vsel %vm1416, %v1678, %v1674
      %v1684 = vsel %vm1416, %v1680, %v1676
      %v1685 = vmul.f32 %v1683, %v794
      %v1686 = vmul.f32 %v1681, %v795
      %v1687 = vmul.f32 %v1684, %v794
      %v1688 = vmul.f32 %v1682, %v795
      %1689 = vrot.lane.b32.xlu0 %v1639, 4
      %v1690 = vpop.permute.xlu0 %1689
      %1691 = vrot.lane.b32.xlu0 %v1526, 4
      %v1692 = vpop.permute.xlu0 %1691
      %1693 = vrot.lane.b32.xlu0 %v1640, 4
      %v1694 = vpop.permute.xlu0 %1693
      %1695 = vrot.lane.b32.xlu0 %v1527, 4
      %v1696 = vpop.permute.xlu0 %1695
      %v1697 = vsel %vm1425, %v1690, %v1694
      %v1698 = vsel %vm1425, %v1692, %v1696
      %v1699 = vsel %vm1425, %v1694, %v1690
      %v1700 = vsel %vm1425, %v1696, %v1692
      %v1701 = vmul.f32 %v1699, %v802
      %v1702 = vmul.f32 %v1697, %v803
      %v1703 = vmul.f32 %v1700, %v802
      %v1704 = vmul.f32 %v1698, %v803
      %1705 = vrot.lane.b32.xlu0 %v1639, 124
      %v1706 = vpop.permute.xlu0 %1705
      %1707 = vrot.lane.b32.xlu0 %v1526, 124
      %v1708 = vpop.permute.xlu0 %1707
      %1709 = vrot.lane.b32.xlu0 %v1640, 124
      %v1710 = vpop.permute.xlu0 %1709
      %1711 = vrot.lane.b32.xlu0 %v1527, 124
      %v1712 = vpop.permute.xlu0 %1711
      %v1713 = vsel %vm1434, %v1706, %v1710
      %v1714 = vsel %vm1434, %v1708, %v1712
      %v1715 = vsel %vm1434, %v1710, %v1706
      %v1716 = vsel %vm1434, %v1712, %v1708
      %v1717 = vmul.f32 %v1713, %v810
      %v1718 = vmul.f32 %v1715, %v811
      %v1719 = vmul.f32 %v1714, %v810
      %v1720 = vmul.f32 %v1716, %v811
      %v1721 = vmul.f32 %v1649, %v826
      %v1722 = vmul.f32 %v1651, %v827
      %v1723 = vmul.f32 %v1650, %v826
      %v1724 = vmul.f32 %v1652, %v827
      %v1725 = vmul.f32 %v1665, %v834
      %v1726 = vmul.f32 %v1667, %v835
      %v1727 = vmul.f32 %v1666, %v834
      %v1728 = vmul.f32 %v1668, %v835
      %v1729 = vmul.f32 %v1681, %v842
      %v1730 = vmul.f32 %v1683, %v843
      %v1731 = vmul.f32 %v1682, %v842
      %v1732 = vmul.f32 %v1684, %v843
      %v1733 = vld [vmem:[%s11] sm:$0xff]
      %v1734 = vld [vmem:[%s11 + $0x8] sm:$0xff]
      %v1735 = vld [vmem:[%s12] sm:$0xff]
      %1737 = vset.pattern.permute.xlu0 0
      %1738 = vperm.xlu0 %1737, %v1735
      %v1739 = vpop.permute.xlu0 %1738
      %vm1741 = vcmask 130048
      %v1743 = vsel %vm1741, %v1734, 0
      %1745 = vmatprep.subr.mxu0 %v1654
      %1746 = vmatpush1.msra.mxu0 %v1653
      %1747 = vmatprep.subr.mxu0 %v1656
      %1748 = vmatpush1.msra.mxu0 %v1655
      %1749 = vmatprep.subr.mxu0 %v1670
      %1750 = vmatpush1.msra.mxu0 %v1669
      %1751 = vmatprep.subr.mxu0 %v1672
      %1752 = vmatpush1.msra.mxu0 %v1671
      %1753 = vmatprep.subr.mxu0 %v1686
      %1754 = vmatpush1.msra.mxu0 %v1685
      %1755 = vmatprep.subr.mxu0 %v1688
      %1756 = vmatpush1.msra.mxu0 %v1687
      %1757 = vmatprep.subr.mxu0 %v1702
      %1758 = vmatpush1.msra.mxu0 %v1701
      %1759 = vmatprep.subr.mxu0 %v1704
      %1760 = vmatpush1.msra.mxu0 %v1703
      %1761 = vmatprep.subr.mxu0 %v1640
      %1762 = vmatpush1.msra.mxu0 %v1639
      %1763 = vmatprep.subr.mxu0 %v1527
      %1764 = vmatpush1.msra.mxu0 %v1526
      %1765 = vmatprep.subr.mxu0 %v1718
      %1766 = vmatpush1.msra.mxu0 %v1717
      %1767 = vmatprep.subr.mxu0 %v1720
      %1768 = vmatpush1.msra.mxu0 %v1719
      %1769 = vmatprep.subr.mxu0 %v1722
      %1770 = vmatpush1.msra.mxu0 %v1721
      %1771 = vmatprep.subr.mxu0 %v1724
      %1772 = vmatpush1.msra.mxu0 %v1723
      %1773 = vmatprep.subr.mxu0 %v1726
      %1774 = vmatpush1.msra.mxu0 %v1725
      %1775 = vmatprep.subr.mxu0 %v1728
      %1776 = vmatpush1.msra.mxu0 %v1727
      %1777 = vmatprep.subr.mxu0 %v1730
      %1778 = vmatpush1.msra.mxu0 %v1729
      %1779 = vmatprep.subr.mxu0 %v1732
      %1780 = vmatpush1.msra.mxu0 %v1731
      %1781 = vmatprep.subr.mxu0 0.0
      %1782 = vmatpush1.msra.mxu0 0.0
      %1783 = vmatprep.subr.mxu0 0.0
      %1784 = vmatpush1.msra.mxu0 0.0
      %1785 = vmatprep.subr.mxu0 0.0
      %1786 = vmatpush1.msra.mxu0 0.0
      %1787 = vmatprep.subr.mxu0 0.0
      %1788 = vmatpush1.msra.mxu0 0.0
      %1789 = vmatprep.subr.mxu0 0.0
      %1790 = vmatpush1.msra.mxu0 0.0
      %1791 = vmatprep.subr.mxu0 0.0
      %1792 = vmatpush1.msra.mxu0 0.0
      %1793 = vmatprep.subr.mxu0 0.0
      %1794 = vmatpush1.msra.mxu0 0.0
      %1795 = vmatprep.subr.mxu0 0.0
      %1796 = vmatpush1.msra.mxu0 0.0
      %1797 = vmatprep.subr.mxu0 0.0
      %1798 = vmatpush1.msra.mxu0 0.0
      %1799 = vmatprep.subr.mxu0 0.0
      %1800 = vmatpush1.msra.mxu0 0.0
      %1801 = vmatprep.subr.mxu0 0.0
      %1802 = vmatpush1.msra.mxu0 0.0
      %1803 = vmatprep.subr.mxu0 0.0
      %1804 = vmatpush1.msra.mxu0 0.0
      %1805 = vmatprep.subr.mxu0 0.0
      %1806 = vmatpush1.msra.mxu0 0.0
      %1807 = vmatprep.subr.mxu0 0.0
      %1808 = vmatpush1.msra.mxu0 0.0
      %1809 = vmatprep.mubr.f32.mxu0 %v1743
      %1810 = vmatmul.mubr.f32.gmra.mrb[0].mxu0 %v1733
      %v1811 = vpop.f32.mrb[0].mxu0
      %v1812 = vadd.f32 %v1739, %v1811
      %v1813 = vpop.f32.mrb[0].mxu0
      %v1814 = vadd.f32 %v1739, %v1813
      %1815 = vdwg.mxu0
      %v1816 = vmax.f32 %v1812, 0.0
      %v1817 = vmax.f32 %v1814, 0.0
      %1818 = vrot.lane.b32.xlu0 %v1816, 34
      %v1819 = vpop.permute.xlu0 %1818
      %1820 = vrot.lane.b32.xlu0 %v1392, 34
      %v1821 = vpop.permute.xlu0 %1820
      %1822 = vrot.lane.b32.xlu0 %v1817, 34
      %v1823 = vpop.permute.xlu0 %1822
      %1824 = vrot.lane.b32.xlu0 %v1393, 34
      %v1825 = vpop.permute.xlu0 %1824
      %v1826 = vsel %vm1243, %v1819, %v1823
      %v1827 = vsel %vm1243, %v1821, %v1825
      %v1828 = vsel %vm1243, %v1823, %v1819
      %v1829 = vsel %vm1243, %v1825, %v1821
      %v1830 = vmul.f32 %v1828, %v680
      %v1831 = vmul.f32 %v1826, %v681
      %v1832 = vmul.f32 %v1829, %v680
      %v1833 = vmul.f32 %v1827, %v681
      %1834 = vrot.lane.b32.xlu0 %v1816, 32
      %v1835 = vpop.permute.xlu0 %1834
      %1836 = vrot.lane.b32.xlu0 %v1392, 32
      %v1837 = vpop.permute.xlu0 %1836
      %1838 = vrot.lane.b32.xlu0 %v1817, 32
      %v1839 = vpop.permute.xlu0 %1838
      %1840 = vrot.lane.b32.xlu0 %v1393, 32
      %v1841 = vpop.permute.xlu0 %1840
      %v1842 = vsel %vm1252, %v1835, %v1839
      %v1843 = vsel %vm1252, %v1837, %v1841
      %v1844 = vsel %vm1252, %v1839, %v1835
      %v1845 = vsel %vm1252, %v1841, %v1837
      %v1846 = vmul.f32 %v1844, %v688
      %v1847 = vmul.f32 %v1842, %v689
      %v1848 = vmul.f32 %v1845, %v688
      %v1849 = vmul.f32 %v1843, %v689
      %1850 = vrot.lane.b32.xlu0 %v1816, 30
      %v1851 = vpop.permute.xlu0 %1850
      %1852 = vrot.lane.b32.xlu0 %v1392, 30
      %v1853 = vpop.permute.xlu0 %1852
      %1854 = vrot.lane.b32.xlu0 %v1817, 30
      %v1855 = vpop.permute.xlu0 %1854
      %1856 = vrot.lane.b32.xlu0 %v1393, 30
      %v1857 = vpop.permute.xlu0 %1856
      %v1858 = vsel %vm1261, %v1851, %v1855
      %v1859 = vsel %vm1261, %v1853, %v1857
      %v1860 = vsel %vm1261, %v1855, %v1851
      %v1861 = vsel %vm1261, %v1857, %v1853
      %v1862 = vmul.f32 %v1860, %v702
      %v1863 = vmul.f32 %v1858, %v703
      %v1864 = vmul.f32 %v1861, %v702
      %v1865 = vmul.f32 %v1859, %v703
      %1866 = vrot.lane.b32.xlu0 %v1816, 2
      %v1867 = vpop.permute.xlu0 %1866
      %1868 = vrot.lane.b32.xlu0 %v1392, 2
      %v1869 = vpop.permute.xlu0 %1868
      %1870 = vrot.lane.b32.xlu0 %v1817, 2
      %v1871 = vpop.permute.xlu0 %1870
      %1872 = vrot.lane.b32.xlu0 %v1393, 2
      %v1873 = vpop.permute.xlu0 %1872
      %v1874 = vsel %vm1270, %v1867, %v1871
      %v1875 = vsel %vm1270, %v1869, %v1873
      %v1876 = vsel %vm1270, %v1871, %v1867
      %v1877 = vsel %vm1270, %v1873, %v1869
      %v1878 = vmul.f32 %v1876, %v710
      %v1879 = vmul.f32 %v1874, %v711
      %v1880 = vmul.f32 %v1877, %v710
      %v1881 = vmul.f32 %v1875, %v711
      %1882 = vrot.lane.b32.xlu0 %v1816, 126
      %v1883 = vpop.permute.xlu0 %1882
      %1884 = vrot.lane.b32.xlu0 %v1392, 126
      %v1885 = vpop.permute.xlu0 %1884
      %1886 = vrot.lane.b32.xlu0 %v1817, 126
      %v1887 = vpop.permute.xlu0 %1886
      %1888 = vrot.lane.b32.xlu0 %v1393, 126
      %v1889 = vpop.permute.xlu0 %1888
      %v1890 = vsel %vm1279, %v1883, %v1887
      %v1891 = vsel %vm1279, %v1885, %v1889
      %v1892 = vsel %vm1279, %v1887, %v1883
      %v1893 = vsel %vm1279, %v1889, %v1885
      %v1894 = vmul.f32 %v1890, %v718
      %v1895 = vmul.f32 %v1892, %v719
      %v1896 = vmul.f32 %v1891, %v718
      %v1897 = vmul.f32 %v1893, %v719
      %1898 = vrot.lane.b32.xlu0 %v1816, 98
      %v1899 = vpop.permute.xlu0 %1898
      %1900 = vrot.lane.b32.xlu0 %v1392, 98
      %v1901 = vpop.permute.xlu0 %1900
      %1902 = vrot.lane.b32.xlu0 %v1817, 98
      %v1903 = vpop.permute.xlu0 %1902
      %1904 = vrot.lane.b32.xlu0 %v1393, 98
      %v1905 = vpop.permute.xlu0 %1904
      %v1906 = vsel %vm1288, %v1899, %v1903
      %v1907 = vsel %vm1288, %v1901, %v1905
      %v1908 = vsel %vm1288, %v1903, %v1899
      %v1909 = vsel %vm1288, %v1905, %v1901
      %v1910 = vmul.f32 %v1906, %v734
      %v1911 = vmul.f32 %v1908, %v735
      %v1912 = vmul.f32 %v1907, %v734
      %v1913 = vmul.f32 %v1909, %v735
      %1914 = vrot.lane.b32.xlu0 %v1816, 96
      %v1915 = vpop.permute.xlu0 %1914
      %1916 = vrot.lane.b32.xlu0 %v1392, 96
      %v1917 = vpop.permute.xlu0 %1916
      %1918 = vrot.lane.b32.xlu0 %v1817, 96
      %v1919 = vpop.permute.xlu0 %1918
      %1920 = vrot.lane.b32.xlu0 %v1393, 96
      %v1921 = vpop.permute.xlu0 %1920
      %v1922 = vsel %vm1297, %v1915, %v1919
      %v1923 = vsel %vm1297, %v1917, %v1921
      %v1924 = vsel %vm1297, %v1919, %v1915
      %v1925 = vsel %vm1297, %v1921, %v1917
      %v1926 = vmul.f32 %v1922, %v742
      %v1927 = vmul.f32 %v1924, %v743
      %v1928 = vmul.f32 %v1923, %v742
      %v1929 = vmul.f32 %v1925, %v743
      %1930 = vrot.lane.b32.xlu0 %v1816, 94
      %v1931 = vpop.permute.xlu0 %1930
      %1932 = vrot.lane.b32.xlu0 %v1392, 94
      %v1933 = vpop.permute.xlu0 %1932
      %1934 = vrot.lane.b32.xlu0 %v1817, 94
      %v1935 = vpop.permute.xlu0 %1934
      %1936 = vrot.lane.b32.xlu0 %v1393, 94
      %v1937 = vpop.permute.xlu0 %1936
      %v1938 = vsel %vm1306, %v1931, %v1935
      %v1939 = vsel %vm1306, %v1933, %v1937
      %v1940 = vsel %vm1306, %v1935, %v1931
      %v1941 = vsel %vm1306, %v1937, %v1933
      %v1942 = vmul.f32 %v1938, %v750
      %v1943 = vmul.f32 %v1940, %v751
      %v1944 = vmul.f32 %v1939, %v750
      %v1945 = vmul.f32 %v1941, %v751
      %v1946 = vld [vmem:[%s13] sm:$0xff]
      %v1947 = vld [vmem:[%s13 + $0x8] sm:$0xff]
      %v1948 = vld [vmem:[%s14] sm:$0xff]
      %1950 = vset.pattern.permute.xlu0 0
      %1951 = vperm.xlu0 %1950, %v1948
      %v1952 = vpop.permute.xlu0 %1951
      %v1955 = vsel %vm1741, %v1947, 0
      %1957 = vmatprep.subr.mxu0 %v1831
      %1958 = vmatpush1.msra.mxu0 %v1830
      %1959 = vmatprep.subr.mxu0 %v1833
      %1960 = vmatpush1.msra.mxu0 %v1832
      %1961 = vmatprep.subr.mxu0 %v1847
      %1962 = vmatpush1.msra.mxu0 %v1846
      %1963 = vmatprep.subr.mxu0 %v1849
      %1964 = vmatpush1.msra.mxu0 %v1848
      %1965 = vmatprep.subr.mxu0 %v1863
      %1966 = vmatpush1.msra.mxu0 %v1862
      %1967 = vmatprep.subr.mxu0 %v1865
      %1968 = vmatpush1.msra.mxu0 %v1864
      %1969 = vmatprep.subr.mxu0 %v1879
      %1970 = vmatpush1.msra.mxu0 %v1878
      %1971 = vmatprep.subr.mxu0 %v1881
      %1972 = vmatpush1.msra.mxu0 %v1880
      %1973 = vmatprep.subr.mxu0 %v1817
      %1974 = vmatpush1.msra.mxu0 %v1816
      %1975 = vmatprep.subr.mxu0 %v1393
      %1976 = vmatpush1.msra.mxu0 %v1392
      %1977 = vmatprep.subr.mxu0 %v1895
      %1978 = vmatpush1.msra.mxu0 %v1894
      %1979 = vmatprep.subr.mxu0 %v1897
      %1980 = vmatpush1.msra.mxu0 %v1896
      %1981 = vmatprep.subr.mxu0 %v1911
      %1982 = vmatpush1.msra.mxu0 %v1910
      %1983 = vmatprep.subr.mxu0 %v1913
      %1984 = vmatpush1.msra.mxu0 %v1912
      %1985 = vmatprep.subr.mxu0 %v1927
      %1986 = vmatpush1.msra.mxu0 %v1926
      %1987 = vmatprep.subr.mxu0 %v1929
      %1988 = vmatpush1.msra.mxu0 %v1928
      %1989 = vmatprep.subr.mxu0 %v1943
      %1990 = vmatpush1.msra.mxu0 %v1942
      %1991 = vmatprep.subr.mxu0 %v1945
      %1992 = vmatpush1.msra.mxu0 %v1944
      %1993 = vmatprep.subr.mxu0 0.0
      %1994 = vmatpush1.msra.mxu0 0.0
      %1995 = vmatprep.subr.mxu0 0.0
      %1996 = vmatpush1.msra.mxu0 0.0
      %1997 = vmatprep.subr.mxu0 0.0
      %1998 = vmatpush1.msra.mxu0 0.0
      %1999 = vmatprep.subr.mxu0 0.0
      %2000 = vmatpush1.msra.mxu0 0.0
      %2001 = vmatprep.subr.mxu0 0.0
      %2002 = vmatpush1.msra.mxu0 0.0
      %2003 = vmatprep.subr.mxu0 0.0
      %2004 = vmatpush1.msra.mxu0 0.0
      %2005 = vmatprep.subr.mxu0 0.0
      %2006 = vmatpush1.msra.mxu0 0.0
      %2007 = vmatprep.subr.mxu0 0.0
      %2008 = vmatpush1.msra.mxu0 0.0
      %2009 = vmatprep.subr.mxu0 0.0
      %2010 = vmatpush1.msra.mxu0 0.0
      %2011 = vmatprep.subr.mxu0 0.0
      %2012 = vmatpush1.msra.mxu0 0.0
      %2013 = vmatprep.subr.mxu0 0.0
      %2014 = vmatpush1.msra.mxu0 0.0
      %2015 = vmatprep.subr.mxu0 0.0
      %2016 = vmatpush1.msra.mxu0 0.0
      %2017 = vmatprep.subr.mxu0 0.0
      %2018 = vmatpush1.msra.mxu0 0.0
      %2019 = vmatprep.subr.mxu0 0.0
      %2020 = vmatpush1.msra.mxu0 0.0
      %2021 = vmatprep.mubr.f32.mxu0 %v1955
      %2022 = vmatmul.mubr.f32.gmra.mrb[0].mxu0 %v1946
      %v2023 = vpop.f32.mrb[0].mxu0
      %v2024 = vadd.f32 %v1952, %v2023
      %v2025 = vpop.f32.mrb[0].mxu0
      %v2026 = vadd.f32 %v1952, %v2025
      %2027 = vdwg.mxu0
      %v2028 = vmax.f32 %v2024, 0.0
      %v2029 = vmax.f32 %v2026, 0.0
      %2030 = vrot.lane.b32.xlu0 %v2028, 17
      %v2031 = vpop.permute.xlu0 %2030
      %2032 = vrot.lane.b32.xlu0 %v1237, 17
      %v2033 = vpop.permute.xlu0 %2032
      %2034 = vrot.lane.b32.xlu0 %v2029, 17
      %v2035 = vpop.permute.xlu0 %2034
      %2036 = vrot.lane.b32.xlu0 %v1238, 17
      %v2037 = vpop.permute.xlu0 %2036
      %v2038 = vsel %vm940, %v2031, %v2035
      %v2039 = vsel %vm940, %v2033, %v2037
      %v2040 = vsel %vm940, %v2035, %v2031
      %v2041 = vsel %vm940, %v2037, %v2033
      %v2042 = vmul.f32 %v2040, %v578
      %v2043 = vmul.f32 %v2038, %v579
      %v2044 = vmul.f32 %v2041, %v578
      %v2045 = vmul.f32 %v2039, %v579
      %2046 = vrot.lane.b32.xlu0 %v2028, 16
      %v2047 = vpop.permute.xlu0 %2046
      %2048 = vrot.lane.b32.xlu0 %v1237, 16
      %v2049 = vpop.permute.xlu0 %2048
      %2050 = vrot.lane.b32.xlu0 %v2029, 16
      %v2051 = vpop.permute.xlu0 %2050
      %2052 = vrot.lane.b32.xlu0 %v1238, 16
      %v2053 = vpop.permute.xlu0 %2052
      %v2054 = vsel %vm949, %v2047, %v2051
      %v2055 = vsel %vm949, %v2049, %v2053
      %v2056 = vsel %vm949, %v2051, %v2047
      %v2057 = vsel %vm949, %v2053, %v2049
      %v2058 = vmul.f32 %v2056, %v590
      %v2059 = vmul.f32 %v2054, %v591
      %v2060 = vmul.f32 %v2057, %v590
      %v2061 = vmul.f32 %v2055, %v591
      %2062 = vrot.lane.b32.xlu0 %v2028, 15
      %v2063 = vpop.permute.xlu0 %2062
      %2064 = vrot.lane.b32.xlu0 %v1237, 15
      %v2065 = vpop.permute.xlu0 %2064
      %2066 = vrot.lane.b32.xlu0 %v2029, 15
      %v2067 = vpop.permute.xlu0 %2066
      %2068 = vrot.lane.b32.xlu0 %v1238, 15
      %v2069 = vpop.permute.xlu0 %2068
      %v2070 = vsel %vm958, %v2063, %v2067
      %v2071 = vsel %vm958, %v2065, %v2069
      %v2072 = vsel %vm958, %v2067, %v2063
      %v2073 = vsel %vm958, %v2069, %v2065
      %v2074 = vmul.f32 %v2072, %v604
      %v2075 = vmul.f32 %v2070, %v605
      %v2076 = vmul.f32 %v2073, %v604
      %v2077 = vmul.f32 %v2071, %v605
      %2078 = vrot.lane.b32.xlu0 %v2028, 1
      %v2079 = vpop.permute.xlu0 %2078
      %2080 = vrot.lane.b32.xlu0 %v1237, 1
      %v2081 = vpop.permute.xlu0 %2080
      %2082 = vrot.lane.b32.xlu0 %v2029, 1
      %v2083 = vpop.permute.xlu0 %2082
      %2084 = vrot.lane.b32.xlu0 %v1238, 1
      %v2085 = vpop.permute.xlu0 %2084
      %v2086 = vsel %vm967, %v2079, %v2083
      %v2087 = vsel %vm967, %v2081, %v2085
      %v2088 = vsel %vm967, %v2083, %v2079
      %v2089 = vsel %vm967, %v2085, %v2081
      %v2090 = vmul.f32 %v2088, %v618
      %v2091 = vmul.f32 %v2086, %v619
      %v2092 = vmul.f32 %v2089, %v618
      %v2093 = vmul.f32 %v2087, %v619
      %2094 = vrot.lane.b32.xlu0 %v2028, 127
      %v2095 = vpop.permute.xlu0 %2094
      %2096 = vrot.lane.b32.xlu0 %v1237, 127
      %v2097 = vpop.permute.xlu0 %2096
      %2098 = vrot.lane.b32.xlu0 %v2029, 127
      %v2099 = vpop.permute.xlu0 %2098
      %2100 = vrot.lane.b32.xlu0 %v1238, 127
      %v2101 = vpop.permute.xlu0 %2100
      %v2102 = vsel %vm976, %v2095, %v2099
      %v2103 = vsel %vm976, %v2097, %v2101
      %v2104 = vsel %vm976, %v2099, %v2095
      %v2105 = vsel %vm976, %v2101, %v2097
      %v2106 = vmul.f32 %v2102, %v626
      %v2107 = vmul.f32 %v2104, %v627
      %v2108 = vmul.f32 %v2103, %v626
      %v2109 = vmul.f32 %v2105, %v627
      %2110 = vrot.lane.b32.xlu0 %v2028, 113
      %v2111 = vpop.permute.xlu0 %2110
      %2112 = vrot.lane.b32.xlu0 %v1237, 113
      %v2113 = vpop.permute.xlu0 %2112
      %2114 = vrot.lane.b32.xlu0 %v2029, 113
      %v2115 = vpop.permute.xlu0 %2114
      %2116 = vrot.lane.b32.xlu0 %v1238, 113
      %v2117 = vpop.permute.xlu0 %2116
      %v2118 = vsel %vm985, %v2111, %v2115
      %v2119 = vsel %vm985, %v2113, %v2117
      %v2120 = vsel %vm985, %v2115, %v2111
      %v2121 = vsel %vm985, %v2117, %v2113
      %v2122 = vmul.f32 %v2118, %v642
      %v2123 = vmul.f32 %v2120, %v643
      %v2124 = vmul.f32 %v2119, %v642
      %v2125 = vmul.f32 %v2121, %v643
      %2126 = vrot.lane.b32.xlu0 %v2028, 112
      %v2127 = vpop.permute.xlu0 %2126
      %2128 = vrot.lane.b32.xlu0 %v1237, 112
      %v2129 = vpop.permute.xlu0 %2128
      %2130 = vrot.lane.b32.xlu0 %v2029, 112
      %v2131 = vpop.permute.xlu0 %2130
      %2132 = vrot.lane.b32.xlu0 %v1238, 112
      %v2133 = vpop.permute.xlu0 %2132
      %v2134 = vsel %vm994, %v2127, %v2131
      %v2135 = vsel %vm994, %v2129, %v2133
      %v2136 = vsel %vm994, %v2131, %v2127
      %v2137 = vsel %vm994, %v2133, %v2129
      %v2138 = vmul.f32 %v2134, %v650
      %v2139 = vmul.f32 %v2136, %v651
      %v2140 = vmul.f32 %v2135, %v650
      %v2141 = vmul.f32 %v2137, %v651
      %2142 = vrot.lane.b32.xlu0 %v2028, 111
      %v2143 = vpop.permute.xlu0 %2142
      %2144 = vrot.lane.b32.xlu0 %v1237, 111
      %v2145 = vpop.permute.xlu0 %2144
      %2146 = vrot.lane.b32.xlu0 %v2029, 111
      %v2147 = vpop.permute.xlu0 %2146
      %2148 = vrot.lane.b32.xlu0 %v1238, 111
      %v2149 = vpop.permute.xlu0 %2148
      %v2150 = vsel %vm1003, %v2143, %v2147
      %v2151 = vsel %vm1003, %v2145, %v2149
      %v2152 = vsel %vm1003, %v2147, %v2143
      %v2153 = vsel %vm1003, %v2149, %v2145
      %v2154 = vmul.f32 %v2150, %v658
      %v2155 = vmul.f32 %v2152, %v659
      %v2156 = vmul.f32 %v2151, %v658
      %v2157 = vmul.f32 %v2153, %v659
      %v2158 = vld [vmem:[%s15] sm:$0xff]
      %v2159 = vld [vmem:[%s15 + $0x8] sm:$0xff]
      %v2160 = vld [vmem:[%s16] sm:$0xff]
      %2162 = vset.pattern.permute.xlu0 0
      %2163 = vperm.xlu0 %2162, %v2160
      %v2164 = vpop.permute.xlu0 %2163
      %v2167 = vsel %vm1741, %v2159, 0
      %2169 = vmatprep.subr.mxu0 %v2043
      %2170 = vmatpush1.msra.mxu0 %v2042
      %2171 = vmatprep.subr.mxu0 %v2045
      %2172 = vmatpush1.msra.mxu0 %v2044
      %2173 = vmatprep.subr.mxu0 %v2059
      %2174 = vmatpush1.msra.mxu0 %v2058
      %2175 = vmatprep.subr.mxu0 %v2061
      %2176 = vmatpush1.msra.mxu0 %v2060
      %2177 = vmatprep.subr.mxu0 %v2075
      %2178 = vmatpush1.msra.mxu0 %v2074
      %2179 = vmatprep.subr.mxu0 %v2077
      %2180 = vmatpush1.msra.mxu0 %v2076
      %2181 = vmatprep.subr.mxu0 %v2091
      %2182 = vmatpush1.msra.mxu0 %v2090
      %2183 = vmatprep.subr.mxu0 %v2093
      %2184 = vmatpush1.msra.mxu0 %v2092
      %2185 = vmatprep.subr.mxu0 %v2029
      %2186 = vmatpush1.msra.mxu0 %v2028
      %2187 = vmatprep.subr.mxu0 %v1238
      %2188 = vmatpush1.msra.mxu0 %v1237
      %2189 = vmatprep.subr.mxu0 %v2107
      %2190 = vmatpush1.msra.mxu0 %v2106
      %2191 = vmatprep.subr.mxu0 %v2109
      %2192 = vmatpush1.msra.mxu0 %v2108
      %2193 = vmatprep.subr.mxu0 %v2123
      %2194 = vmatpush1.msra.mxu0 %v2122
      %2195 = vmatprep.subr.mxu0 %v2125
      %2196 = vmatpush1.msra.mxu0 %v2124
      %2197 = vmatprep.subr.mxu0 %v2139
      %2198 = vmatpush1.msra.mxu0 %v2138
      %2199 = vmatprep.subr.mxu0 %v2141
      %2200 = vmatpush1.msra.mxu0 %v2140
      %2201 = vmatprep.subr.mxu0 %v2155
      %2202 = vmatpush1.msra.mxu0 %v2154
      %2203 = vmatprep.subr.mxu0 %v2157
      %2204 = vmatpush1.msra.mxu0 %v2156
      %2205 = vmatprep.subr.mxu0 0.0
      %2206 = vmatpush1.msra.mxu0 0.0
      %2207 = vmatprep.subr.mxu0 0.0
      %2208 = vmatpush1.msra.mxu0 0.0
      %2209 = vmatprep.subr.mxu0 0.0
      %2210 = vmatpush1.msra.mxu0 0.0
      %2211 = vmatprep.subr.mxu0 0.0
      %2212 = vmatpush1.msra.mxu0 0.0
      %2213 = vmatprep.subr.mxu0 0.0
      %2214 = vmatpush1.msra.mxu0 0.0
      %2215 = vmatprep.subr.mxu0 0.0
      %2216 = vmatpush1.msra.mxu0 0.0
      %2217 = vmatprep.subr.mxu0 0.0
      %2218 = vmatpush1.msra.mxu0 0.0
      %2219 = vmatprep.subr.mxu0 0.0
      %2220 = vmatpush1.msra.mxu0 0.0
      %2221 = vmatprep.subr.mxu0 0.0
      %2222 = vmatpush1.msra.mxu0 0.0
      %2223 = vmatprep.subr.mxu0 0.0
      %2224 = vmatpush1.msra.mxu0 0.0
      %2225 = vmatprep.subr.mxu0 0.0
      %2226 = vmatpush1.msra.mxu0 0.0
      %2227 = vmatprep.subr.mxu0 0.0
      %2228 = vmatpush1.msra.mxu0 0.0
      %2229 = vmatprep.subr.mxu0 0.0
      %2230 = vmatpush1.msra.mxu0 0.0
      %2231 = vmatprep.subr.mxu0 0.0
      %2232 = vmatpush1.msra.mxu0 0.0
      %2233 = vmatprep.mubr.f32.mxu0 %v2167
      %2234 = vmatmul.mubr.f32.gmra.mrb[0].mxu0 %v2158
      %v2235 = vpop.f32.mrb[0].mxu0
      %v2236 = vadd.f32 %v2164, %v2235
      %v2237 = vpop.f32.mrb[0].mxu0
      %v2238 = vadd.f32 %v2164, %v2237
      %2239 = vdwg.mxu0
      %v2240 = vmax.f32 %v2236, 0.0
      %v2241 = vmax.f32 %v2238, 0.0
      %v2242 = vadd.f32 %v2240, %v1090
      %v2243 = vadd.f32 %v2241, %v1091
      %2244 = vst [vmem:[%s548] sm:$0xff] %v2242
      %2245 = vst [vmem:[%s548 + $0x8] sm:$0xff] %v2243
      %p2246 = scmp.lt.s32.totalorder %s28, 1
      %s2247 = scalar_select %p2246, %s28, 1
      %s2248 = smul.addr %s2247, 2
      %s2249 = smul.addr %s2248, 8
      %s2250 = scalar_lea.vmem %s17, %s2249
      // Predicated region
      $region89: #{rsu_4f_forward.1} parent=87 // pred_check
        %p2251 = pneg %p408
      $region90: #{rsu_4f_forward.1} parent=87 // pred_check_branch
        %2253 = sbr.rel (%p2251) target = $region92
      $region91: #{rsu_4f_forward.1} parent=87 // pred_region
        _
      $region92: #{rsu_4f_forward.1} parent=87 // pred_fallthru
        _
    $region88: #{rsu_4f_forward.1} parent=5 // pred_fallthru
      _
    %p2254 = scmp.le.s32.totalorder 2, %s23
    // Predicated region
    $region93: #{rsu_4f_forward.1} parent=5 // pred_check
      %p2255 = pneg %p2254
    $region94: #{rsu_4f_forward.1} parent=5 // pred_check_branch
      %2257 = sbr.rel (%p2255) target = $region96
    $region95: #{rsu_4f_forward.1} parent=5 // pred_region
      %s2258 = ssub.s32 %s23, 2
      // Predicated region
      $region97: #{rsu_4f_forward.1} parent=95 // pred_check
        %p2259 = pneg %p414
      $region98: #{rsu_4f_forward.1} parent=95 // pred_check_branch
        %2261 = sbr.rel (%p2259) target = $region100
      $region99: #{rsu_4f_forward.1} parent=95 // pred_region
        %p2262 = scmp.lt.s32.totalorder %s29, 1
        %s2263 = scalar_select %p2262, %s29, 1
        %s2264 = smul.addr %s2263, 2
        %s2265 = smul.addr %s2264, 8
        %s2266 = scalar_lea.vmem %s17, %s2265
      $region100: #{rsu_4f_forward.1} parent=95 // pred_fallthru
        _
    $region96: #{rsu_4f_forward.1} parent=5 // pred_fallthru
      _
  $region6: #{rsu_4f_forward.1} parent=0 // loop_footer
    %s27 = sadd.s32 1, %s23
  $region7: #{rsu_4f_forward.1} parent=0 // loop_footer_branch
    %22 = sbr.rel target = $region3
  $region8: #{rsu_4f_forward.1} parent=0 // loop_exit
    _

</llo_original>
